<compile_context>
chip_gen: v5e
topology: v5e:2x2
jax: 0.10.0
libtpu: 0.0.40
codegen_flags: <defaults>
</compile_context>

<pallas_src>
import math

import jax
import jax.numpy as jnp
from jax.experimental import pallas as pl
from jax.experimental.pallas import tpu as pltpu


# ----------------------------- model hyper-params (scaled down) -----------------------------
C = 32        # conv feature dim
H = 32        # hidden dim
NH = 4        # attention heads
HD = H // NH  # head dim (8)
FF = 128      # FFN intermediate dim
V = 32        # CTC vocab size
K1, S1 = 10, 5   # conv layer 1 (kernel, stride); K1 == 2*S1 is used by the gather-free im2col
K2, S2 = 3, 2    # conv layer 2 (kernel, stride)
KP = 3           # positional conv kernel (simplified: groups=1, padding=1)


def _gelu(x):
    # TODO(synk): HF wav2vec2 uses exact erf-GELU; tanh approximation keeps the op on the EUP
    # without relying on an erf lowering rule (small numeric deviation vs. the PyTorch module).
    return jax.nn.gelu(x, approximate=True)


def _ln(x, g, b, eps=1e-5):
    m = jnp.mean(x, axis=-1, keepdims=True)
    v = jnp.mean(jnp.square(x - m), axis=-1, keepdims=True)
    return (x - m) * jax.lax.rsqrt(v + eps) * g + b


# ------------------------------------- the fused kernel -------------------------------------
def _w2v2_kernel(audio_ref, p1_ref,
                 w1_ref, gng_ref, gnb_ref,
                 c2w_ref, fpg_ref, fpb_ref, fpw_ref, fpbias_ref,
                 posw_ref, posb_ref, encg_ref, encb_ref,
                 qkvw_ref, qkvb_ref, ow_ref, ob_ref,
                 ln1g_ref, ln1b_ref, ff1w_ref, ff1b_ref,
                 ff2w_ref, ff2b_ref, ln2g_ref, ln2b_ref,
                 lmw_ref, lmb_ref,
                 logits_ref, pred_ref,
                 h1_ref):
    """One utterance per grid step: input-norm + conv stack + encoder + lm_head + argmax."""
    t2 = logits_ref.shape[1]

    # ---- feature-extractor normalization stats (exact two-pass, over the raw waveform) ----
    a = audio_ref[0]                                            # (1, L)
    mean = jnp.mean(a, axis=-1, keepdims=True)                  # (1, 1)
    var = jnp.mean(jnp.square(a - mean), axis=-1, keepdims=True)
    rstd = jax.lax.rsqrt(var + 1e-7)                            # Wav2Vec2FeatureExtractor eps

    # ---- conv1 (no bias): every patch element is a raw audio sample, so normalizing the
    #      patches equals normalizing the waveform first (input-norm folded, no HBM pass). ----
    patches = (p1_ref[0] - mean) * rstd                         # (T1, K1)
    h = jnp.dot(patches, w1_ref[...], preferred_element_type=jnp.float32)   # (T1, C)

    # ---- GroupNorm(num_groups=C) == per-channel normalization over time (sublane reduce) ----
    gm = jnp.mean(h, axis=0, keepdims=True)                     # (1, C)
    gv = jnp.mean(jnp.square(h - gm), axis=0, keepdims=True)
    h = (h - gm) * jax.lax.rsqrt(gv + 1e-5) * gng_ref[...] + gnb_ref[...]
    # Park conv1 features in VMEM so conv2's stride-2 windows are cheap strided sublane reads
    # (no HBM round-trip, no XLA gather between kernels).
    h1_ref[...] = _gelu(h)                                      # (T1, C)

    # ---- conv2 (k=3, s=2) + GELU: 3 strided taps lane-concatenated -> ONE matmul ----
    taps = [h1_ref[pl.ds(k, t2, stride=S2), :] for k in range(K2)]      # 3 x (T2, C)
    h = jnp.dot(jnp.concatenate(taps, axis=-1), c2w_ref[...],
                preferred_element_type=jnp.float32)             # (T2, C)
    h = _gelu(h)

    # ---- feature projection: LayerNorm + Linear (dropout is identity in eval) ----
    h = _ln(h, fpg_ref[...], fpb_ref[...])
    hs = jnp.dot(h, fpw_ref[...], preferred_element_type=jnp.float32) + fpbias_ref[...]  # (T2,H)

    # ---- positional conv embedding (k=3, groups=1, pad=1): XLU rolls + boundary-row masks,
    #      all three taps fused into one (T2, 3H) x (3H, H) matmul. ----
    ridx = jax.lax.broadcasted_iota(jnp.int32, (t2, H), 0)
    xm = jnp.where(ridx == 0, 0.0, pltpu.roll(hs, shift=1, axis=0))          # hs[t-1], 0 at t=0
    xp = jnp.where(ridx == t2 - 1, 0.0, pltpu.roll(hs, shift=t2 - 1, axis=0))  # hs[t+1], 0 at end
    pos = jnp.dot(jnp.concatenate([xm, hs, xp], axis=-1), posw_ref[...],
                  preferred_element_type=jnp.float32) + posb_ref[...]
    h = hs + _gelu(pos)
    h = _ln(h, encg_ref[...], encb_ref[...])

    # ---- self-attention: one packed QKV matmul; 1/sqrt(HD) folded into the Q weights at init;
    #      per-head softmax with EXACT divide (argmax-tie safety); per-head contexts re-packed
    #      on lanes so the output projection is a single (T2,H)x(H,H) matmul. ----
    resid = h
    qkv = jnp.dot(h, qkvw_ref[...], preferred_element_type=jnp.float32) + qkvb_ref[...]  # (T2,3H)
    ctx = []
    for hh in range(NH):
        q = qkv[:, hh * HD:(hh + 1) * HD]                       # (T2, HD)
        k = qkv[:, H + hh * HD:H + (hh + 1) * HD]
        v = qkv[:, 2 * H + hh * HD:2 * H + (hh + 1) * HD]
        s = jax.lax.dot_general(q, k, (((1,), (1,)), ((), ())),
                                preferred_element_type=jnp.float32)          # (T2, T2)
        s = s - jnp.max(s, axis=-1, keepdims=True)
        p = jnp.exp(s)
        p = p / jnp.sum(p, axis=-1, keepdims=True)              # exact divide (not approx recip)
        ctx.append(jnp.dot(p, v, preferred_element_type=jnp.float32))        # (T2, HD)
    attn = jnp.dot(jnp.concatenate(ctx, axis=-1), ow_ref[...],
                   preferred_element_type=jnp.float32) + ob_ref[...]
    h = _ln(resid + attn, ln1g_ref[...], ln1b_ref[...])

    # ---- feed-forward + final LayerNorm ----
    ff = _gelu(jnp.dot(h, ff1w_ref[...], preferred_element_type=jnp.float32) + ff1b_ref[...])
    ff = jnp.dot(ff, ff2w_ref[...], preferred_element_type=jnp.float32) + ff2b_ref[...]
    h = _ln(h + ff, ln2g_ref[...], ln2b_ref[...])

    # ---- CTC lm_head + fused argmax (torch.argmax: lowest index wins ties) ----
    logits = jnp.dot(h, lmw_ref[...], preferred_element_type=jnp.float32) + lmb_ref[...]  # (T2,V)
    logits_ref[0] = logits.astype(logits_ref.dtype)
    m = jnp.max(logits, axis=-1, keepdims=True)
    vidx = jax.lax.broadcasted_iota(jnp.int32, logits.shape, 1)
    cand = jnp.where(logits == m, vidx, jnp.int32(2 ** 31 - 1))
    # TODO(synk): a lane-dense (1, T2) prediction layout needs an in-kernel (V, T2) transpose;
    # at T2=32 the masked width-1 store is negligible, so the (T2, 1) layout is kept.
    pred_ref[0] = jnp.min(cand, axis=-1, keepdims=True)


# ------------------------------------ pallas_call wrapper -----------------------------------
_PARAMS = ("conv1_w", "gn_g", "gn_b",
           "conv2_w", "fp_ln_g", "fp_ln_b", "fp_w", "fp_b",
           "pos_w", "pos_b", "enc_ln_g", "enc_ln_b",
           "qkv_w", "qkv_b", "o_w", "o_b",
           "ln1_g", "ln1_b", "ff1_w", "ff1_b", "ff2_w", "ff2_b",
           "ln2_g", "ln2_b", "lm_w", "lm_b")


def _bspec(shape, batched):
    """BlockSpec for a grid=(B,) kernel: per-batch block if `batched`, else full (replicated)."""
    nd = len(shape)
    if batched:
        return pl.BlockSpec((1,) + tuple(shape[1:]),
                            lambda b, _n=nd: (b,) + (0,) * (_n - 1))
    # Constant-index blocks: the Pallas pipeline skips re-DMA when the block index does not
    # change between grid steps, so weights are fetched once per core.
    return pl.BlockSpec(tuple(shape), lambda b, _n=nd: (0,) * _n)


def pallas_w2v2_ctc(audio3, patches1, p):
    B, T1, _ = patches1.shape
    T2 = (T1 - K2) // S2 + 1
    weights = [p[name] for name in _PARAMS]
    return pl.pallas_call(
        _w2v2_kernel,
        grid=(B,),
        in_specs=[_bspec(audio3.shape, True), _bspec(patches1.shape, True)]
                 + [_bspec(w.shape, False) for w in weights],
        out_specs=(_bspec((B, T2, V), True), _bspec((B, T2, 1), True)),
        out_shape=(jax.ShapeDtypeStruct((B, T2, V), jnp.float32),
                   jax.ShapeDtypeStruct((B, T2, 1), jnp.int32)),
        scratch_shapes=[pltpu.VMEM((T1, C), jnp.float32)],
        # grid=(B,) "parallel" keeps both v7x TensorCores busy for B>=2; on single-TC v5e/v6e
        # the per-step overhead (~0.35us * B) is negligible next to the fused body.
        compiler_params=pltpu.CompilerParams(dimension_semantics=("parallel",)),
    )(audio3, patches1, *weights)


# ------------------------------ params (kernel-ready layouts) -------------------------------
def init_params(key):
    ks = jax.random.split(key, 16)
    s = 0.02

    def n(k, shape):
        return jax.random.normal(k, shape, jnp.float32) * s

    p = {}
    # conv1: PyTorch Conv1d weight (C, 1, K1), bias=False  -> matmul layout (K1, C)
    p["conv1_w"] = jnp.transpose(n(ks[0], (C, 1, K1)).reshape(C, K1))
    p["gn_g"] = jnp.ones((1, C), jnp.float32)
    p["gn_b"] = jnp.zeros((1, C), jnp.float32)
    # conv2: torch (C_out, C_in, K2) -> matmul layout (K2*C_in, C_out), tap-major rows to
    # match the in-kernel [tap0 | tap1 | tap2] lane concat of strided reads.
    p["conv2_w"] = jnp.transpose(n(ks[1], (C, C, K2)), (2, 1, 0)).reshape(K2 * C, C)
    p["fp_ln_g"] = jnp.ones((1, C), jnp.float32)
    p["fp_ln_b"] = jnp.zeros((1, C), jnp.float32)
    p["fp_w"] = n(ks[2], (C, H))
    p["fp_b"] = jnp.zeros((1, H), jnp.float32)
    # positional conv: torch (H_out, H_in, KP) -> ONE matmul layout (KP*H_in, H_out),
    # tap-major rows matching the [x_{t-1} | x_t | x_{t+1}] lane concat.
    p["pos_w"] = jnp.transpose(n(ks[3], (H, H, KP)), (2, 1, 0)).reshape(KP * H, H)
    p["pos_b"] = jnp.zeros((1, H), jnp.float32)
    p["enc_ln_g"] = jnp.ones((1, H), jnp.float32)
    p["enc_ln_b"] = jnp.zeros((1, H), jnp.float32)
    # packed QKV projection, columns [q | k | v]; the 1/sqrt(head_dim) attention scale is folded
    # into the Q columns (and Q bias — zero here) so the kernel never multiplies by it.
    scale = 1.0 / math.sqrt(HD)
    p["qkv_w"] = jnp.concatenate(
        [n(ks[4], (H, H)) * scale, n(ks[5], (H, H)), n(ks[6], (H, H))], axis=1)
    p["qkv_b"] = jnp.zeros((1, 3 * H), jnp.float32)
    p["o_w"] = n(ks[7], (H, H))
    p["o_b"] = jnp.zeros((1, H), jnp.float32)
    p["ln1_g"] = jnp.ones((1, H), jnp.float32)
    p["ln1_b"] = jnp.zeros((1, H), jnp.float32)
    p["ff1_w"] = n(ks[8], (H, FF))
    p["ff1_b"] = jnp.zeros((1, FF), jnp.float32)
    p["ff2_w"] = n(ks[9], (FF, H))
    p["ff2_b"] = jnp.zeros((1, H), jnp.float32)
    p["ln2_g"] = jnp.ones((1, H), jnp.float32)
    p["ln2_b"] = jnp.zeros((1, H), jnp.float32)
    p["lm_w"] = n(ks[10], (H, V))
    p["lm_b"] = jnp.zeros((1, V), jnp.float32)
    return p


# -------------------------------------- forward pass ----------------------------------------
def wav2vec2_ctc_forward(p, audio):
    """audio: (B, L) float32 -> (logits (B, T2, V) float32, predicted_ids (B, T2) int32)."""
    B, L = audio.shape
    T1 = (L - K1) // S1 + 1

    # conv1 windows over the RAW audio.  K1 == 2*S1, so im2col is just two contiguous reshapes
    # and a lane concat (no gather op); the per-utterance feature-extractor normalization is
    # folded into the kernel using exact stats computed from the raw waveform.
    # TODO(synk): at production wav2vec2 sizes build these windows in-kernel with strided
    # pl.ds loads of the waveform to avoid the ~2x im2col HBM duplication (matters on v5e).
    a_lo = jax.lax.slice(audio, (0, 0), (B, S1 * T1)).reshape(B, T1, S1)
    a_hi = jax.lax.slice(audio, (0, S1), (B, S1 + S1 * T1)).reshape(B, T1, S1)
    patches1 = jnp.concatenate([a_lo, a_hi], axis=-1)            # (B, T1, K1)

    logits, pred = pallas_w2v2_ctc(audio[:, None, :], patches1, p)

    # TODO(synk): processor.batch_decode + WhisperTokenizer._normalize are string/token
    # post-processing with no TPU-kernel equivalent; the numeric forward ends at predicted_ids.
    return logits, pred[..., 0]


if __name__ == "__main__":
    key = jax.random.PRNGKey(0)
    pkey, akey = jax.random.split(key)
    params = init_params(pkey)

    B, L = 2, 330                          # -> T1 = 65 conv frames, T2 = 32 encoder frames
    audio = jax.random.normal(akey, (B, L), dtype=jnp.float32)

    fwd = jax.jit(wav2vec2_ctc_forward)
    logits, pred_ids = fwd(params, audio)
    jax.block_until_ready((logits, pred_ids))

    assert logits.shape == (B, 32, V) and logits.dtype == jnp.float32
    assert pred_ids.shape == (B, 32) and pred_ids.dtype == jnp.int32
    print("KERNEL_OK")
</pallas_src>

<mosaic_0001>
module attributes {stable_mosaic.version = 11 : i64} {
  func.func @_w2v2_kernel(%arg0: i32, %arg1: memref<1x1x330xf32, #tpu.memory_space<vmem>>, %arg2: memref<1x65x10xf32, #tpu.memory_space<vmem>>, %arg3: memref<10x32xf32, #tpu.memory_space<vmem>>, %arg4: memref<1x32xf32, #tpu.memory_space<vmem>>, %arg5: memref<1x32xf32, #tpu.memory_space<vmem>>, %arg6: memref<96x32xf32, #tpu.memory_space<vmem>>, %arg7: memref<1x32xf32, #tpu.memory_space<vmem>>, %arg8: memref<1x32xf32, #tpu.memory_space<vmem>>, %arg9: memref<32x32xf32, #tpu.memory_space<vmem>>, %arg10: memref<1x32xf32, #tpu.memory_space<vmem>>, %arg11: memref<96x32xf32, #tpu.memory_space<vmem>>, %arg12: memref<1x32xf32, #tpu.memory_space<vmem>>, %arg13: memref<1x32xf32, #tpu.memory_space<vmem>>, %arg14: memref<1x32xf32, #tpu.memory_space<vmem>>, %arg15: memref<32x96xf32, #tpu.memory_space<vmem>>, %arg16: memref<1x96xf32, #tpu.memory_space<vmem>>, %arg17: memref<32x32xf32, #tpu.memory_space<vmem>>, %arg18: memref<1x32xf32, #tpu.memory_space<vmem>>, %arg19: memref<1x32xf32, #tpu.memory_space<vmem>>, %arg20: memref<1x32xf32, #tpu.memory_space<vmem>>, %arg21: memref<32x128xf32, #tpu.memory_space<vmem>>, %arg22: memref<1x128xf32, #tpu.memory_space<vmem>>, %arg23: memref<128x32xf32, #tpu.memory_space<vmem>>, %arg24: memref<1x32xf32, #tpu.memory_space<vmem>>, %arg25: memref<1x32xf32, #tpu.memory_space<vmem>>, %arg26: memref<1x32xf32, #tpu.memory_space<vmem>>, %arg27: memref<32x32xf32, #tpu.memory_space<vmem>>, %arg28: memref<1x32xf32, #tpu.memory_space<vmem>>, %arg29: memref<1x32x32xf32, #tpu.memory_space<vmem>>, %arg30: memref<1x32x1xi32, #tpu.memory_space<vmem>>, %arg31: memref<65x32xf32, #tpu.memory_space<vmem>>) attributes {dimension_semantics = [#tpu.dimension_semantics<parallel>], iteration_bounds = array<i64: 2>, scalar_prefetch = 0 : i64, scratch_operands = 1 : i64, tpu.core_type = #tpu.core_type<tc>, window_params = [{transform_indices = @transform_0, window_bounds = array<i64: 1, 1, 330>}, {transform_indices = @transform_1, window_bounds = array<i64: 1, 65, 10>}, {pipeline_mode = #tpu.pipeline_mode<synchronous>, transform_indices = @transform_2, window_bounds = array<i64: 10, 32>}, {pipeline_mode = #tpu.pipeline_mode<synchronous>, transform_indices = @transform_3, window_bounds = array<i64: 1, 32>}, {pipeline_mode = #tpu.pipeline_mode<synchronous>, transform_indices = @transform_4, window_bounds = array<i64: 1, 32>}, {pipeline_mode = #tpu.pipeline_mode<synchronous>, transform_indices = @transform_5, window_bounds = array<i64: 96, 32>}, {pipeline_mode = #tpu.pipeline_mode<synchronous>, transform_indices = @transform_6, window_bounds = array<i64: 1, 32>}, {pipeline_mode = #tpu.pipeline_mode<synchronous>, transform_indices = @transform_7, window_bounds = array<i64: 1, 32>}, {pipeline_mode = #tpu.pipeline_mode<synchronous>, transform_indices = @transform_8, window_bounds = array<i64: 32, 32>}, {pipeline_mode = #tpu.pipeline_mode<synchronous>, transform_indices = @transform_9, window_bounds = array<i64: 1, 32>}, {pipeline_mode = #tpu.pipeline_mode<synchronous>, transform_indices = @transform_10, window_bounds = array<i64: 96, 32>}, {pipeline_mode = #tpu.pipeline_mode<synchronous>, transform_indices = @transform_11, window_bounds = array<i64: 1, 32>}, {pipeline_mode = #tpu.pipeline_mode<synchronous>, transform_indices = @transform_12, window_bounds = array<i64: 1, 32>}, {pipeline_mode = #tpu.pipeline_mode<synchronous>, transform_indices = @transform_13, window_bounds = array<i64: 1, 32>}, {pipeline_mode = #tpu.pipeline_mode<synchronous>, transform_indices = @transform_14, window_bounds = array<i64: 32, 96>}, {pipeline_mode = #tpu.pipeline_mode<synchronous>, transform_indices = @transform_15, window_bounds = array<i64: 1, 96>}, {pipeline_mode = #tpu.pipeline_mode<synchronous>, transform_indices = @transform_16, window_bounds = array<i64: 32, 32>}, {pipeline_mode = #tpu.pipeline_mode<synchronous>, transform_indices = @transform_17, window_bounds = array<i64: 1, 32>}, {pipeline_mode = #tpu.pipeline_mode<synchronous>, transform_indices = @transform_18, window_bounds = array<i64: 1, 32>}, {pipeline_mode = #tpu.pipeline_mode<synchronous>, transform_indices = @transform_19, window_bounds = array<i64: 1, 32>}, {pipeline_mode = #tpu.pipeline_mode<synchronous>, transform_indices = @transform_20, window_bounds = array<i64: 32, 128>}, {pipeline_mode = #tpu.pipeline_mode<synchronous>, transform_indices = @transform_21, window_bounds = array<i64: 1, 128>}, {pipeline_mode = #tpu.pipeline_mode<synchronous>, transform_indices = @transform_22, window_bounds = array<i64: 128, 32>}, {pipeline_mode = #tpu.pipeline_mode<synchronous>, transform_indices = @transform_23, window_bounds = array<i64: 1, 32>}, {pipeline_mode = #tpu.pipeline_mode<synchronous>, transform_indices = @transform_24, window_bounds = array<i64: 1, 32>}, {pipeline_mode = #tpu.pipeline_mode<synchronous>, transform_indices = @transform_25, window_bounds = array<i64: 1, 32>}, {pipeline_mode = #tpu.pipeline_mode<synchronous>, transform_indices = @transform_26, window_bounds = array<i64: 32, 32>}, {pipeline_mode = #tpu.pipeline_mode<synchronous>, transform_indices = @transform_27, window_bounds = array<i64: 1, 32>}, {transform_indices = @transform_28, window_bounds = array<i64: 1, 32, 32>}, {transform_indices = @transform_29, window_bounds = array<i64: 1, 32, 1>}]} {
    %c0 = arith.constant 0 : index
    %c0_0 = arith.constant 0 : index
    %c0_1 = arith.constant 0 : index
    %0 = vector.load %arg1[%c0, %c0_0, %c0_1] : memref<1x1x330xf32, #tpu.memory_space<vmem>>, vector<1x1x330xf32>
    %1 = vector.shape_cast %0 : vector<1x1x330xf32> to vector<1x330xf32>
    %cst = arith.constant dense<0.000000e+00> : vector<1xf32>
    %2 = vector.multi_reduction <add>, %1, %cst [1] : vector<1x330xf32> to vector<1xf32>
    %3 = vector.shape_cast %2 : vector<1xf32> to vector<1x1xf32>
    %cst_2 = arith.constant 3.300000e+02 : f32
    %4 = vector.broadcast %cst_2 : f32 to vector<1x1xf32>
    %5 = arith.divf %3, %4 : vector<1x1xf32>
    %6 = vector.broadcast %5 : vector<1x1xf32> to vector<1x330xf32>
    %7 = arith.subf %1, %6 : vector<1x330xf32>
    %8 = arith.mulf %7, %7 : vector<1x330xf32>
    %cst_3 = arith.constant dense<0.000000e+00> : vector<1xf32>
    %9 = vector.multi_reduction <add>, %8, %cst_3 [1] : vector<1x330xf32> to vector<1xf32>
    %10 = vector.shape_cast %9 : vector<1xf32> to vector<1x1xf32>
    %cst_4 = arith.constant 3.300000e+02 : f32
    %11 = vector.broadcast %cst_4 : f32 to vector<1x1xf32>
    %12 = arith.divf %10, %11 : vector<1x1xf32>
    %cst_5 = arith.constant 1.000000e-07 : f32
    %13 = vector.broadcast %cst_5 : f32 to vector<1x1xf32>
    %14 = arith.addf %12, %13 : vector<1x1xf32>
    %15 = math.rsqrt %14 : vector<1x1xf32>
    %c0_6 = arith.constant 0 : index
    %c0_7 = arith.constant 0 : index
    %c0_8 = arith.constant 0 : index
    %16 = vector.load %arg2[%c0_6, %c0_7, %c0_8] : memref<1x65x10xf32, #tpu.memory_space<vmem>>, vector<1x65x10xf32>
    %17 = vector.shape_cast %16 : vector<1x65x10xf32> to vector<65x10xf32>
    %18 = vector.broadcast %5 : vector<1x1xf32> to vector<65x10xf32>
    %19 = arith.subf %17, %18 : vector<65x10xf32>
    %20 = vector.broadcast %15 : vector<1x1xf32> to vector<65x10xf32>
    %21 = arith.mulf %19, %20 : vector<65x10xf32>
    %c0_9 = arith.constant 0 : index
    %c0_10 = arith.constant 0 : index
    %22 = vector.load %arg3[%c0_9, %c0_10] : memref<10x32xf32, #tpu.memory_space<vmem>>, vector<10x32xf32>
    %cst_11 = arith.constant dense<0.000000e+00> : vector<65x32xf32>
    %23 = tpu.matmul %21, %22, %cst_11 {dimension_numbers = #tpu.dot_dimension_numbers<[1], [0], [0], [1], [0, 0, 1, 1], [], []>} : vector<65x10xf32>, vector<10x32xf32>, vector<65x32xf32> -> vector<65x32xf32>
    %cst_12 = arith.constant dense<0.000000e+00> : vector<32xf32>
    %24 = vector.multi_reduction <add>, %23, %cst_12 [0] : vector<65x32xf32> to vector<32xf32>
    %25 = vector.shape_cast %24 : vector<32xf32> to vector<1x32xf32>
    %cst_13 = arith.constant 6.500000e+01 : f32
    %26 = vector.broadcast %cst_13 : f32 to vector<1x32xf32>
    %27 = arith.divf %25, %26 : vector<1x32xf32>
    %28 = vector.broadcast %27 : vector<1x32xf32> to vector<65x32xf32>
    %29 = arith.subf %23, %28 : vector<65x32xf32>
    %30 = arith.mulf %29, %29 : vector<65x32xf32>
    %cst_14 = arith.constant dense<0.000000e+00> : vector<32xf32>
    %31 = vector.multi_reduction <add>, %30, %cst_14 [0] : vector<65x32xf32> to vector<32xf32>
    %32 = vector.shape_cast %31 : vector<32xf32> to vector<1x32xf32>
    %cst_15 = arith.constant 6.500000e+01 : f32
    %33 = vector.broadcast %cst_15 : f32 to vector<1x32xf32>
    %34 = arith.divf %32, %33 : vector<1x32xf32>
    %35 = vector.broadcast %27 : vector<1x32xf32> to vector<65x32xf32>
    %36 = arith.subf %23, %35 : vector<65x32xf32>
    %cst_16 = arith.constant 9.99999974E-6 : f32
    %37 = vector.broadcast %cst_16 : f32 to vector<1x32xf32>
    %38 = arith.addf %34, %37 : vector<1x32xf32>
    %39 = math.rsqrt %38 : vector<1x32xf32>
    %40 = vector.broadcast %39 : vector<1x32xf32> to vector<65x32xf32>
    %41 = arith.mulf %36, %40 : vector<65x32xf32>
    %c0_17 = arith.constant 0 : index
    %c0_18 = arith.constant 0 : index
    %42 = vector.load %arg4[%c0_17, %c0_18] : memref<1x32xf32, #tpu.memory_space<vmem>>, vector<1x32xf32>
    %43 = vector.broadcast %42 : vector<1x32xf32> to vector<65x32xf32>
    %44 = arith.mulf %41, %43 : vector<65x32xf32>
    %c0_19 = arith.constant 0 : index
    %c0_20 = arith.constant 0 : index
    %45 = vector.load %arg5[%c0_19, %c0_20] : memref<1x32xf32, #tpu.memory_space<vmem>>, vector<1x32xf32>
    %46 = vector.broadcast %45 : vector<1x32xf32> to vector<65x32xf32>
    %47 = arith.addf %44, %46 : vector<65x32xf32>
    %48 = arith.mulf %47, %47 : vector<65x32xf32>
    %49 = arith.mulf %47, %48 : vector<65x32xf32>
    %cst_21 = arith.constant 4.471500e-02 : f32
    %50 = vector.broadcast %cst_21 : f32 to vector<65x32xf32>
    %51 = arith.mulf %50, %49 : vector<65x32xf32>
    %52 = arith.addf %47, %51 : vector<65x32xf32>
    %cst_22 = arith.constant 0.797884583 : f32
    %53 = vector.broadcast %cst_22 : f32 to vector<65x32xf32>
    %54 = arith.mulf %53, %52 : vector<65x32xf32>
    %55 = math.tanh %54 : vector<65x32xf32>
    %cst_23 = arith.constant 1.000000e+00 : f32
    %56 = vector.broadcast %cst_23 : f32 to vector<65x32xf32>
    %57 = arith.addf %56, %55 : vector<65x32xf32>
    %cst_24 = arith.constant 5.000000e-01 : f32
    %58 = vector.broadcast %cst_24 : f32 to vector<65x32xf32>
    %59 = arith.mulf %58, %57 : vector<65x32xf32>
    %60 = arith.mulf %47, %59 : vector<65x32xf32>
    %c0_25 = arith.constant 0 : index
    %c0_26 = arith.constant 0 : index
    %61 = vector.load %arg31[%c0_25, %c0_26] : memref<65x32xf32, #tpu.memory_space<vmem>>, vector<65x32xf32>
    tpu.vector_store %arg31[%c0_25, %c0_26], %60 {strides = array<i32>} : memref<65x32xf32, #tpu.memory_space<vmem>>, vector<65x32xf32>,
    %c0_27 = arith.constant 0 : index
    %c0_28 = arith.constant 0 : index
    %62 = tpu.strided_load %arg31[%c0_27, %c0_28] {strides = array<i32: 2, 1>} : memref<65x32xf32, #tpu.memory_space<vmem>>, vector<32x32xf32>
    %c1 = arith.constant 1 : index
    %c0_29 = arith.constant 0 : index
    %63 = tpu.strided_load %arg31[%c1, %c0_29] {strides = array<i32: 2, 1>} : memref<65x32xf32, #tpu.memory_space<vmem>>, vector<32x32xf32>
    %c2 = arith.constant 2 : index
    %c0_30 = arith.constant 0 : index
    %64 = tpu.strided_load %arg31[%c2, %c0_30] {strides = array<i32: 2, 1>} : memref<65x32xf32, #tpu.memory_space<vmem>>, vector<32x32xf32>
    %65 = tpu.concatenate %62, %63, %64 in 1 : vector<32x32xf32>, vector<32x32xf32>, vector<32x32xf32> -> vector<32x96xf32>
    %c0_31 = arith.constant 0 : index
    %c0_32 = arith.constant 0 : index
    %66 = vector.load %arg6[%c0_31, %c0_32] : memref<96x32xf32, #tpu.memory_space<vmem>>, vector<96x32xf32>
    %cst_33 = arith.constant dense<0.000000e+00> : vector<32x32xf32>
    %67 = tpu.matmul %65, %66, %cst_33 {dimension_numbers = #tpu.dot_dimension_numbers<[1], [0], [0], [1], [0, 0, 1, 1], [], []>} : vector<32x96xf32>, vector<96x32xf32>, vector<32x32xf32> -> vector<32x32xf32>
    %68 = arith.mulf %67, %67 : vector<32x32xf32>
    %69 = arith.mulf %67, %68 : vector<32x32xf32>
    %cst_34 = arith.constant 4.471500e-02 : f32
    %70 = vector.broadcast %cst_34 : f32 to vector<32x32xf32>
    %71 = arith.mulf %70, %69 : vector<32x32xf32>
    %72 = arith.addf %67, %71 : vector<32x32xf32>
    %cst_35 = arith.constant 0.797884583 : f32
    %73 = vector.broadcast %cst_35 : f32 to vector<32x32xf32>
    %74 = arith.mulf %73, %72 : vector<32x32xf32>
    %75 = math.tanh %74 : vector<32x32xf32>
    %cst_36 = arith.constant 1.000000e+00 : f32
    %76 = vector.broadcast %cst_36 : f32 to vector<32x32xf32>
    %77 = arith.addf %76, %75 : vector<32x32xf32>
    %cst_37 = arith.constant 5.000000e-01 : f32
    %78 = vector.broadcast %cst_37 : f32 to vector<32x32xf32>
    %79 = arith.mulf %78, %77 : vector<32x32xf32>
    %80 = arith.mulf %67, %79 : vector<32x32xf32>
    %c0_38 = arith.constant 0 : index
    %c0_39 = arith.constant 0 : index
    %81 = vector.load %arg7[%c0_38, %c0_39] : memref<1x32xf32, #tpu.memory_space<vmem>>, vector<1x32xf32>
    %c0_40 = arith.constant 0 : index
    %c0_41 = arith.constant 0 : index
    %82 = vector.load %arg8[%c0_40, %c0_41] : memref<1x32xf32, #tpu.memory_space<vmem>>, vector<1x32xf32>
    %cst_42 = arith.constant dense<0.000000e+00> : vector<32xf32>
    %83 = vector.multi_reduction <add>, %80, %cst_42 [1] : vector<32x32xf32> to vector<32xf32>
    %84 = vector.shape_cast %83 : vector<32xf32> to vector<32x1xf32>
    %cst_43 = arith.constant 3.200000e+01 : f32
    %85 = vector.broadcast %cst_43 : f32 to vector<32x1xf32>
    %86 = arith.divf %84, %85 : vector<32x1xf32>
    %87 = vector.broadcast %86 : vector<32x1xf32> to vector<32x32xf32>
    %88 = arith.subf %80, %87 : vector<32x32xf32>
    %89 = arith.mulf %88, %88 : vector<32x32xf32>
    %cst_44 = arith.constant dense<0.000000e+00> : vector<32xf32>
    %90 = vector.multi_reduction <add>, %89, %cst_44 [1] : vector<32x32xf32> to vector<32xf32>
    %91 = vector.shape_cast %90 : vector<32xf32> to vector<32x1xf32>
    %cst_45 = arith.constant 3.200000e+01 : f32
    %92 = vector.broadcast %cst_45 : f32 to vector<32x1xf32>
    %93 = arith.divf %91, %92 : vector<32x1xf32>
    %94 = vector.broadcast %86 : vector<32x1xf32> to vector<32x32xf32>
    %95 = arith.subf %80, %94 : vector<32x32xf32>
    %cst_46 = arith.constant 9.99999974E-6 : f32
    %96 = vector.broadcast %cst_46 : f32 to vector<32x1xf32>
    %97 = arith.addf %93, %96 : vector<32x1xf32>
    %98 = math.rsqrt %97 : vector<32x1xf32>
    %99 = vector.broadcast %98 : vector<32x1xf32> to vector<32x32xf32>
    %100 = arith.mulf %95, %99 : vector<32x32xf32>
    %101 = vector.broadcast %81 : vector<1x32xf32> to vector<32x32xf32>
    %102 = arith.mulf %100, %101 : vector<32x32xf32>
    %103 = vector.broadcast %82 : vector<1x32xf32> to vector<32x32xf32>
    %104 = arith.addf %102, %103 : vector<32x32xf32>
    %c0_47 = arith.constant 0 : index
    %c0_48 = arith.constant 0 : index
    %105 = vector.load %arg9[%c0_47, %c0_48] : memref<32x32xf32, #tpu.memory_space<vmem>>, vector<32x32xf32>
    %cst_49 = arith.constant dense<0.000000e+00> : vector<32x32xf32>
    %106 = tpu.matmul %104, %105, %cst_49 {dimension_numbers = #tpu.dot_dimension_numbers<[1], [0], [0], [1], [0, 0, 1, 1], [], []>} : vector<32x32xf32>, vector<32x32xf32>, vector<32x32xf32> -> vector<32x32xf32>
    %c0_50 = arith.constant 0 : index
    %c0_51 = arith.constant 0 : index
    %107 = vector.load %arg10[%c0_50, %c0_51] : memref<1x32xf32, #tpu.memory_space<vmem>>, vector<1x32xf32>
    %108 = vector.broadcast %107 : vector<1x32xf32> to vector<32x32xf32>
    %109 = arith.addf %106, %108 : vector<32x32xf32>
    %110 = tpu.iota {dimensions = array<i32: 0>} : vector<32x32xi32>
    %c0_i32 = arith.constant 0 : i32
    %111 = vector.broadcast %c0_i32 : i32 to vector<32x32xi32>
    %112 = arith.cmpi eq, %110, %111 : vector<32x32xi32>
    %c1_i32 = arith.constant 1 : i32
    %113 = tpu.dynamic_rotate %109 by %c1_i32 dim 0 : vector<32x32xf32>, i32 -> vector<32x32xf32>
    %cst_52 = arith.constant 0.000000e+00 : f32
    %114 = vector.broadcast %cst_52 : f32 to vector<32x32xf32>
    %115 = arith.select %112, %114, %113 : vector<32x32xi1>, vector<32x32xf32>
    %c31_i32 = arith.constant 31 : i32
    %116 = vector.broadcast %c31_i32 : i32 to vector<32x32xi32>
    %117 = arith.cmpi eq, %110, %116 : vector<32x32xi32>
    %c31_i32_53 = arith.constant 31 : i32
    %118 = tpu.dynamic_rotate %109 by %c31_i32_53 dim 0 : vector<32x32xf32>, i32 -> vector<32x32xf32>
    %cst_54 = arith.constant 0.000000e+00 : f32
    %119 = vector.broadcast %cst_54 : f32 to vector<32x32xf32>
    %120 = arith.select %117, %119, %118 : vector<32x32xi1>, vector<32x32xf32>
    %121 = tpu.concatenate %115, %109, %120 in 1 : vector<32x32xf32>, vector<32x32xf32>, vector<32x32xf32> -> vector<32x96xf32>
    %c0_55 = arith.constant 0 : index
    %c0_56 = arith.constant 0 : index
    %122 = vector.load %arg11[%c0_55, %c0_56] : memref<96x32xf32, #tpu.memory_space<vmem>>, vector<96x32xf32>
    %cst_57 = arith.constant dense<0.000000e+00> : vector<32x32xf32>
    %123 = tpu.matmul %121, %122, %cst_57 {dimension_numbers = #tpu.dot_dimension_numbers<[1], [0], [0], [1], [0, 0, 1, 1], [], []>} : vector<32x96xf32>, vector<96x32xf32>, vector<32x32xf32> -> vector<32x32xf32>
    %c0_58 = arith.constant 0 : index
    %c0_59 = arith.constant 0 : index
    %124 = vector.load %arg12[%c0_58, %c0_59] : memref<1x32xf32, #tpu.memory_space<vmem>>, vector<1x32xf32>
    %125 = vector.broadcast %124 : vector<1x32xf32> to vector<32x32xf32>
    %126 = arith.addf %123, %125 : vector<32x32xf32>
    %127 = arith.mulf %126, %126 : vector<32x32xf32>
    %128 = arith.mulf %126, %127 : vector<32x32xf32>
    %cst_60 = arith.constant 4.471500e-02 : f32
    %129 = vector.broadcast %cst_60 : f32 to vector<32x32xf32>
    %130 = arith.mulf %129, %128 : vector<32x32xf32>
    %131 = arith.addf %126, %130 : vector<32x32xf32>
    %cst_61 = arith.constant 0.797884583 : f32
    %132 = vector.broadcast %cst_61 : f32 to vector<32x32xf32>
    %133 = arith.mulf %132, %131 : vector<32x32xf32>
    %134 = math.tanh %133 : vector<32x32xf32>
    %cst_62 = arith.constant 1.000000e+00 : f32
    %135 = vector.broadcast %cst_62 : f32 to vector<32x32xf32>
    %136 = arith.addf %135, %134 : vector<32x32xf32>
    %cst_63 = arith.constant 5.000000e-01 : f32
    %137 = vector.broadcast %cst_63 : f32 to vector<32x32xf32>
    %138 = arith.mulf %137, %136 : vector<32x32xf32>
    %139 = arith.mulf %126, %138 : vector<32x32xf32>
    %140 = arith.addf %109, %139 : vector<32x32xf32>
    %c0_64 = arith.constant 0 : index
    %c0_65 = arith.constant 0 : index
    %141 = vector.load %arg13[%c0_64, %c0_65] : memref<1x32xf32, #tpu.memory_space<vmem>>, vector<1x32xf32>
    %c0_66 = arith.constant 0 : index
    %c0_67 = arith.constant 0 : index
    %142 = vector.load %arg14[%c0_66, %c0_67] : memref<1x32xf32, #tpu.memory_space<vmem>>, vector<1x32xf32>
    %cst_68 = arith.constant dense<0.000000e+00> : vector<32xf32>
    %143 = vector.multi_reduction <add>, %140, %cst_68 [1] : vector<32x32xf32> to vector<32xf32>
    %144 = vector.shape_cast %143 : vector<32xf32> to vector<32x1xf32>
    %cst_69 = arith.constant 3.200000e+01 : f32
    %145 = vector.broadcast %cst_69 : f32 to vector<32x1xf32>
    %146 = arith.divf %144, %145 : vector<32x1xf32>
    %147 = vector.broadcast %146 : vector<32x1xf32> to vector<32x32xf32>
    %148 = arith.subf %140, %147 : vector<32x32xf32>
    %149 = arith.mulf %148, %148 : vector<32x32xf32>
    %cst_70 = arith.constant dense<0.000000e+00> : vector<32xf32>
    %150 = vector.multi_reduction <add>, %149, %cst_70 [1] : vector<32x32xf32> to vector<32xf32>
    %151 = vector.shape_cast %150 : vector<32xf32> to vector<32x1xf32>
    %cst_71 = arith.constant 3.200000e+01 : f32
    %152 = vector.broadcast %cst_71 : f32 to vector<32x1xf32>
    %153 = arith.divf %151, %152 : vector<32x1xf32>
    %154 = vector.broadcast %146 : vector<32x1xf32> to vector<32x32xf32>
    %155 = arith.subf %140, %154 : vector<32x32xf32>
    %cst_72 = arith.constant 9.99999974E-6 : f32
    %156 = vector.broadcast %cst_72 : f32 to vector<32x1xf32>
    %157 = arith.addf %153, %156 : vector<32x1xf32>
    %158 = math.rsqrt %157 : vector<32x1xf32>
    %159 = vector.broadcast %158 : vector<32x1xf32> to vector<32x32xf32>
    %160 = arith.mulf %155, %159 : vector<32x32xf32>
    %161 = vector.broadcast %141 : vector<1x32xf32> to vector<32x32xf32>
    %162 = arith.mulf %160, %161 : vector<32x32xf32>
    %163 = vector.broadcast %142 : vector<1x32xf32> to vector<32x32xf32>
    %164 = arith.addf %162, %163 : vector<32x32xf32>
    %c0_73 = arith.constant 0 : index
    %c0_74 = arith.constant 0 : index
    %165 = vector.load %arg15[%c0_73, %c0_74] : memref<32x96xf32, #tpu.memory_space<vmem>>, vector<32x96xf32>
    %cst_75 = arith.constant dense<0.000000e+00> : vector<32x96xf32>
    %166 = tpu.matmul %164, %165, %cst_75 {dimension_numbers = #tpu.dot_dimension_numbers<[1], [0], [0], [1], [0, 0, 1, 1], [], []>} : vector<32x32xf32>, vector<32x96xf32>, vector<32x96xf32> -> vector<32x96xf32>
    %c0_76 = arith.constant 0 : index
    %c0_77 = arith.constant 0 : index
    %167 = vector.load %arg16[%c0_76, %c0_77] : memref<1x96xf32, #tpu.memory_space<vmem>>, vector<1x96xf32>
    %168 = vector.broadcast %167 : vector<1x96xf32> to vector<32x96xf32>
    %169 = arith.addf %166, %168 : vector<32x96xf32>
    %170 = vector.extract_strided_slice %169 {offsets = [0, 0], sizes = [32, 8], strides = [1, 1]} : vector<32x96xf32> to vector<32x8xf32>
    %171 = vector.extract_strided_slice %169 {offsets = [0, 32], sizes = [32, 8], strides = [1, 1]} : vector<32x96xf32> to vector<32x8xf32>
    %172 = vector.extract_strided_slice %169 {offsets = [0, 64], sizes = [32, 8], strides = [1, 1]} : vector<32x96xf32> to vector<32x8xf32>
    %cst_78 = arith.constant dense<0.000000e+00> : vector<32x32xf32>
    %173 = tpu.matmul %170, %171, %cst_78 {dimension_numbers = #tpu.dot_dimension_numbers<[1], [1], [0], [0], [0, 0, 1, 0], [], []>} : vector<32x8xf32>, vector<32x8xf32>, vector<32x32xf32> -> vector<32x32xf32>
    %cst_79 = arith.constant dense<0xFF800000> : vector<32xf32>
    %174 = vector.multi_reduction <maximumf>, %173, %cst_79 [1] : vector<32x32xf32> to vector<32xf32>
    %175 = vector.shape_cast %174 : vector<32xf32> to vector<32x1xf32>
    %176 = vector.broadcast %175 : vector<32x1xf32> to vector<32x32xf32>
    %177 = arith.subf %173, %176 : vector<32x32xf32>
    %178 = math.exp %177 : vector<32x32xf32>
    %cst_80 = arith.constant dense<0.000000e+00> : vector<32xf32>
    %179 = vector.multi_reduction <add>, %178, %cst_80 [1] : vector<32x32xf32> to vector<32xf32>
    %180 = vector.shape_cast %179 : vector<32xf32> to vector<32x1xf32>
    %181 = vector.broadcast %180 : vector<32x1xf32> to vector<32x32xf32>
    %182 = arith.divf %178, %181 : vector<32x32xf32>
    %cst_81 = arith.constant dense<0.000000e+00> : vector<32x8xf32>
    %183 = tpu.matmul %182, %172, %cst_81 {dimension_numbers = #tpu.dot_dimension_numbers<[1], [0], [0], [1], [0, 0, 1, 1], [], []>} : vector<32x32xf32>, vector<32x8xf32>, vector<32x8xf32> -> vector<32x8xf32>
    %184 = vector.extract_strided_slice %169 {offsets = [0, 8], sizes = [32, 8], strides = [1, 1]} : vector<32x96xf32> to vector<32x8xf32>
    %185 = vector.extract_strided_slice %169 {offsets = [0, 40], sizes = [32, 8], strides = [1, 1]} : vector<32x96xf32> to vector<32x8xf32>
    %186 = vector.extract_strided_slice %169 {offsets = [0, 72], sizes = [32, 8], strides = [1, 1]} : vector<32x96xf32> to vector<32x8xf32>
    %cst_82 = arith.constant dense<0.000000e+00> : vector<32x32xf32>
    %187 = tpu.matmul %184, %185, %cst_82 {dimension_numbers = #tpu.dot_dimension_numbers<[1], [1], [0], [0], [0, 0, 1, 0], [], []>} : vector<32x8xf32>, vector<32x8xf32>, vector<32x32xf32> -> vector<32x32xf32>
    %cst_83 = arith.constant dense<0xFF800000> : vector<32xf32>
    %188 = vector.multi_reduction <maximumf>, %187, %cst_83 [1] : vector<32x32xf32> to vector<32xf32>
    %189 = vector.shape_cast %188 : vector<32xf32> to vector<32x1xf32>
    %190 = vector.broadcast %189 : vector<32x1xf32> to vector<32x32xf32>
    %191 = arith.subf %187, %190 : vector<32x32xf32>
    %192 = math.exp %191 : vector<32x32xf32>
    %cst_84 = arith.constant dense<0.000000e+00> : vector<32xf32>
    %193 = vector.multi_reduction <add>, %192, %cst_84 [1] : vector<32x32xf32> to vector<32xf32>
    %194 = vector.shape_cast %193 : vector<32xf32> to vector<32x1xf32>
    %195 = vector.broadcast %194 : vector<32x1xf32> to vector<32x32xf32>
    %196 = arith.divf %192, %195 : vector<32x32xf32>
    %cst_85 = arith.constant dense<0.000000e+00> : vector<32x8xf32>
    %197 = tpu.matmul %196, %186, %cst_85 {dimension_numbers = #tpu.dot_dimension_numbers<[1], [0], [0], [1], [0, 0, 1, 1], [], []>} : vector<32x32xf32>, vector<32x8xf32>, vector<32x8xf32> -> vector<32x8xf32>
    %198 = vector.extract_strided_slice %169 {offsets = [0, 16], sizes = [32, 8], strides = [1, 1]} : vector<32x96xf32> to vector<32x8xf32>
    %199 = vector.extract_strided_slice %169 {offsets = [0, 48], sizes = [32, 8], strides = [1, 1]} : vector<32x96xf32> to vector<32x8xf32>
    %200 = vector.extract_strided_slice %169 {offsets = [0, 80], sizes = [32, 8], strides = [1, 1]} : vector<32x96xf32> to vector<32x8xf32>
    %cst_86 = arith.constant dense<0.000000e+00> : vector<32x32xf32>
    %201 = tpu.matmul %198, %199, %cst_86 {dimension_numbers = #tpu.dot_dimension_numbers<[1], [1], [0], [0], [0, 0, 1, 0], [], []>} : vector<32x8xf32>, vector<32x8xf32>, vector<32x32xf32> -> vector<32x32xf32>
    %cst_87 = arith.constant dense<0xFF800000> : vector<32xf32>
    %202 = vector.multi_reduction <maximumf>, %201, %cst_87 [1] : vector<32x32xf32> to vector<32xf32>
    %203 = vector.shape_cast %202 : vector<32xf32> to vector<32x1xf32>
    %204 = vector.broadcast %203 : vector<32x1xf32> to vector<32x32xf32>
    %205 = arith.subf %201, %204 : vector<32x32xf32>
    %206 = math.exp %205 : vector<32x32xf32>
    %cst_88 = arith.constant dense<0.000000e+00> : vector<32xf32>
    %207 = vector.multi_reduction <add>, %206, %cst_88 [1] : vector<32x32xf32> to vector<32xf32>
    %208 = vector.shape_cast %207 : vector<32xf32> to vector<32x1xf32>
    %209 = vector.broadcast %208 : vector<32x1xf32> to vector<32x32xf32>
    %210 = arith.divf %206, %209 : vector<32x32xf32>
    %cst_89 = arith.constant dense<0.000000e+00> : vector<32x8xf32>
    %211 = tpu.matmul %210, %200, %cst_89 {dimension_numbers = #tpu.dot_dimension_numbers<[1], [0], [0], [1], [0, 0, 1, 1], [], []>} : vector<32x32xf32>, vector<32x8xf32>, vector<32x8xf32> -> vector<32x8xf32>
    %212 = vector.extract_strided_slice %169 {offsets = [0, 24], sizes = [32, 8], strides = [1, 1]} : vector<32x96xf32> to vector<32x8xf32>
    %213 = vector.extract_strided_slice %169 {offsets = [0, 56], sizes = [32, 8], strides = [1, 1]} : vector<32x96xf32> to vector<32x8xf32>
    %214 = vector.extract_strided_slice %169 {offsets = [0, 88], sizes = [32, 8], strides = [1, 1]} : vector<32x96xf32> to vector<32x8xf32>
    %cst_90 = arith.constant dense<0.000000e+00> : vector<32x32xf32>
    %215 = tpu.matmul %212, %213, %cst_90 {dimension_numbers = #tpu.dot_dimension_numbers<[1], [1], [0], [0], [0, 0, 1, 0], [], []>} : vector<32x8xf32>, vector<32x8xf32>, vector<32x32xf32> -> vector<32x32xf32>
    %cst_91 = arith.constant dense<0xFF800000> : vector<32xf32>
    %216 = vector.multi_reduction <maximumf>, %215, %cst_91 [1] : vector<32x32xf32> to vector<32xf32>
    %217 = vector.shape_cast %216 : vector<32xf32> to vector<32x1xf32>
    %218 = vector.broadcast %217 : vector<32x1xf32> to vector<32x32xf32>
    %219 = arith.subf %215, %218 : vector<32x32xf32>
    %220 = math.exp %219 : vector<32x32xf32>
    %cst_92 = arith.constant dense<0.000000e+00> : vector<32xf32>
    %221 = vector.multi_reduction <add>, %220, %cst_92 [1] : vector<32x32xf32> to vector<32xf32>
    %222 = vector.shape_cast %221 : vector<32xf32> to vector<32x1xf32>
    %223 = vector.broadcast %222 : vector<32x1xf32> to vector<32x32xf32>
    %224 = arith.divf %220, %223 : vector<32x32xf32>
    %cst_93 = arith.constant dense<0.000000e+00> : vector<32x8xf32>
    %225 = tpu.matmul %224, %214, %cst_93 {dimension_numbers = #tpu.dot_dimension_numbers<[1], [0], [0], [1], [0, 0, 1, 1], [], []>} : vector<32x32xf32>, vector<32x8xf32>, vector<32x8xf32> -> vector<32x8xf32>
    %226 = tpu.concatenate %183, %197, %211, %225 in 1 : vector<32x8xf32>, vector<32x8xf32>, vector<32x8xf32>, vector<32x8xf32> -> vector<32x32xf32>
    %c0_94 = arith.constant 0 : index
    %c0_95 = arith.constant 0 : index
    %227 = vector.load %arg17[%c0_94, %c0_95] : memref<32x32xf32, #tpu.memory_space<vmem>>, vector<32x32xf32>
    %cst_96 = arith.constant dense<0.000000e+00> : vector<32x32xf32>
    %228 = tpu.matmul %226, %227, %cst_96 {dimension_numbers = #tpu.dot_dimension_numbers<[1], [0], [0], [1], [0, 0, 1, 1], [], []>} : vector<32x32xf32>, vector<32x32xf32>, vector<32x32xf32> -> vector<32x32xf32>
    %c0_97 = arith.constant 0 : index
    %c0_98 = arith.constant 0 : index
    %229 = vector.load %arg18[%c0_97, %c0_98] : memref<1x32xf32, #tpu.memory_space<vmem>>, vector<1x32xf32>
    %230 = vector.broadcast %229 : vector<1x32xf32> to vector<32x32xf32>
    %231 = arith.addf %228, %230 : vector<32x32xf32>
    %232 = arith.addf %164, %231 : vector<32x32xf32>
    %c0_99 = arith.constant 0 : index
    %c0_100 = arith.constant 0 : index
    %233 = vector.load %arg19[%c0_99, %c0_100] : memref<1x32xf32, #tpu.memory_space<vmem>>, vector<1x32xf32>
    %c0_101 = arith.constant 0 : index
    %c0_102 = arith.constant 0 : index
    %234 = vector.load %arg20[%c0_101, %c0_102] : memref<1x32xf32, #tpu.memory_space<vmem>>, vector<1x32xf32>
    %cst_103 = arith.constant dense<0.000000e+00> : vector<32xf32>
    %235 = vector.multi_reduction <add>, %232, %cst_103 [1] : vector<32x32xf32> to vector<32xf32>
    %236 = vector.shape_cast %235 : vector<32xf32> to vector<32x1xf32>
    %cst_104 = arith.constant 3.200000e+01 : f32
    %237 = vector.broadcast %cst_104 : f32 to vector<32x1xf32>
    %238 = arith.divf %236, %237 : vector<32x1xf32>
    %239 = vector.broadcast %238 : vector<32x1xf32> to vector<32x32xf32>
    %240 = arith.subf %232, %239 : vector<32x32xf32>
    %241 = arith.mulf %240, %240 : vector<32x32xf32>
    %cst_105 = arith.constant dense<0.000000e+00> : vector<32xf32>
    %242 = vector.multi_reduction <add>, %241, %cst_105 [1] : vector<32x32xf32> to vector<32xf32>
    %243 = vector.shape_cast %242 : vector<32xf32> to vector<32x1xf32>
    %cst_106 = arith.constant 3.200000e+01 : f32
    %244 = vector.broadcast %cst_106 : f32 to vector<32x1xf32>
    %245 = arith.divf %243, %244 : vector<32x1xf32>
    %246 = vector.broadcast %238 : vector<32x1xf32> to vector<32x32xf32>
    %247 = arith.subf %232, %246 : vector<32x32xf32>
    %cst_107 = arith.constant 9.99999974E-6 : f32
    %248 = vector.broadcast %cst_107 : f32 to vector<32x1xf32>
    %249 = arith.addf %245, %248 : vector<32x1xf32>
    %250 = math.rsqrt %249 : vector<32x1xf32>
    %251 = vector.broadcast %250 : vector<32x1xf32> to vector<32x32xf32>
    %252 = arith.mulf %247, %251 : vector<32x32xf32>
    %253 = vector.broadcast %233 : vector<1x32xf32> to vector<32x32xf32>
    %254 = arith.mulf %252, %253 : vector<32x32xf32>
    %255 = vector.broadcast %234 : vector<1x32xf32> to vector<32x32xf32>
    %256 = arith.addf %254, %255 : vector<32x32xf32>
    %c0_108 = arith.constant 0 : index
    %c0_109 = arith.constant 0 : index
    %257 = vector.load %arg21[%c0_108, %c0_109] : memref<32x128xf32, #tpu.memory_space<vmem>>, vector<32x128xf32>
    %cst_110 = arith.constant dense<0.000000e+00> : vector<32x128xf32>
    %258 = tpu.matmul %256, %257, %cst_110 {dimension_numbers = #tpu.dot_dimension_numbers<[1], [0], [0], [1], [0, 0, 1, 1], [], []>} : vector<32x32xf32>, vector<32x128xf32>, vector<32x128xf32> -> vector<32x128xf32>
    %c0_111 = arith.constant 0 : index
    %c0_112 = arith.constant 0 : index
    %259 = vector.load %arg22[%c0_111, %c0_112] : memref<1x128xf32, #tpu.memory_space<vmem>>, vector<1x128xf32>
    %260 = vector.broadcast %259 : vector<1x128xf32> to vector<32x128xf32>
    %261 = arith.addf %258, %260 : vector<32x128xf32>
    %262 = arith.mulf %261, %261 : vector<32x128xf32>
    %263 = arith.mulf %261, %262 : vector<32x128xf32>
    %cst_113 = arith.constant 4.471500e-02 : f32
    %264 = vector.broadcast %cst_113 : f32 to vector<32x128xf32>
    %265 = arith.mulf %264, %263 : vector<32x128xf32>
    %266 = arith.addf %261, %265 : vector<32x128xf32>
    %cst_114 = arith.constant 0.797884583 : f32
    %267 = vector.broadcast %cst_114 : f32 to vector<32x128xf32>
    %268 = arith.mulf %267, %266 : vector<32x128xf32>
    %269 = math.tanh %268 : vector<32x128xf32>
    %cst_115 = arith.constant 1.000000e+00 : f32
    %270 = vector.broadcast %cst_115 : f32 to vector<32x128xf32>
    %271 = arith.addf %270, %269 : vector<32x128xf32>
    %cst_116 = arith.constant 5.000000e-01 : f32
    %272 = vector.broadcast %cst_116 : f32 to vector<32x128xf32>
    %273 = arith.mulf %272, %271 : vector<32x128xf32>
    %274 = arith.mulf %261, %273 : vector<32x128xf32>
    %c0_117 = arith.constant 0 : index
    %c0_118 = arith.constant 0 : index
    %275 = vector.load %arg23[%c0_117, %c0_118] : memref<128x32xf32, #tpu.memory_space<vmem>>, vector<128x32xf32>
    %cst_119 = arith.constant dense<0.000000e+00> : vector<32x32xf32>
    %276 = tpu.matmul %274, %275, %cst_119 {dimension_numbers = #tpu.dot_dimension_numbers<[1], [0], [0], [1], [0, 0, 1, 1], [], []>} : vector<32x128xf32>, vector<128x32xf32>, vector<32x32xf32> -> vector<32x32xf32>
    %c0_120 = arith.constant 0 : index
    %c0_121 = arith.constant 0 : index
    %277 = vector.load %arg24[%c0_120, %c0_121] : memref<1x32xf32, #tpu.memory_space<vmem>>, vector<1x32xf32>
    %278 = vector.broadcast %277 : vector<1x32xf32> to vector<32x32xf32>
    %279 = arith.addf %276, %278 : vector<32x32xf32>
    %280 = arith.addf %256, %279 : vector<32x32xf32>
    %c0_122 = arith.constant 0 : index
    %c0_123 = arith.constant 0 : index
    %281 = vector.load %arg25[%c0_122, %c0_123] : memref<1x32xf32, #tpu.memory_space<vmem>>, vector<1x32xf32>
    %c0_124 = arith.constant 0 : index
    %c0_125 = arith.constant 0 : index
    %282 = vector.load %arg26[%c0_124, %c0_125] : memref<1x32xf32, #tpu.memory_space<vmem>>, vector<1x32xf32>
    %cst_126 = arith.constant dense<0.000000e+00> : vector<32xf32>
    %283 = vector.multi_reduction <add>, %280, %cst_126 [1] : vector<32x32xf32> to vector<32xf32>
    %284 = vector.shape_cast %283 : vector<32xf32> to vector<32x1xf32>
    %cst_127 = arith.constant 3.200000e+01 : f32
    %285 = vector.broadcast %cst_127 : f32 to vector<32x1xf32>
    %286 = arith.divf %284, %285 : vector<32x1xf32>
    %287 = vector.broadcast %286 : vector<32x1xf32> to vector<32x32xf32>
    %288 = arith.subf %280, %287 : vector<32x32xf32>
    %289 = arith.mulf %288, %288 : vector<32x32xf32>
    %cst_128 = arith.constant dense<0.000000e+00> : vector<32xf32>
    %290 = vector.multi_reduction <add>, %289, %cst_128 [1] : vector<32x32xf32> to vector<32xf32>
    %291 = vector.shape_cast %290 : vector<32xf32> to vector<32x1xf32>
    %cst_129 = arith.constant 3.200000e+01 : f32
    %292 = vector.broadcast %cst_129 : f32 to vector<32x1xf32>
    %293 = arith.divf %291, %292 : vector<32x1xf32>
    %294 = vector.broadcast %286 : vector<32x1xf32> to vector<32x32xf32>
    %295 = arith.subf %280, %294 : vector<32x32xf32>
    %cst_130 = arith.constant 9.99999974E-6 : f32
    %296 = vector.broadcast %cst_130 : f32 to vector<32x1xf32>
    %297 = arith.addf %293, %296 : vector<32x1xf32>
    %298 = math.rsqrt %297 : vector<32x1xf32>
    %299 = vector.broadcast %298 : vector<32x1xf32> to vector<32x32xf32>
    %300 = arith.mulf %295, %299 : vector<32x32xf32>
    %301 = vector.broadcast %281 : vector<1x32xf32> to vector<32x32xf32>
    %302 = arith.mulf %300, %301 : vector<32x32xf32>
    %303 = vector.broadcast %282 : vector<1x32xf32> to vector<32x32xf32>
    %304 = arith.addf %302, %303 : vector<32x32xf32>
    %c0_131 = arith.constant 0 : index
    %c0_132 = arith.constant 0 : index
    %305 = vector.load %arg27[%c0_131, %c0_132] : memref<32x32xf32, #tpu.memory_space<vmem>>, vector<32x32xf32>
    %cst_133 = arith.constant dense<0.000000e+00> : vector<32x32xf32>
    %306 = tpu.matmul %304, %305, %cst_133 {dimension_numbers = #tpu.dot_dimension_numbers<[1], [0], [0], [1], [0, 0, 1, 1], [], []>} : vector<32x32xf32>, vector<32x32xf32>, vector<32x32xf32> -> vector<32x32xf32>
    %c0_134 = arith.constant 0 : index
    %c0_135 = arith.constant 0 : index
    %307 = vector.load %arg28[%c0_134, %c0_135] : memref<1x32xf32, #tpu.memory_space<vmem>>, vector<1x32xf32>
    %308 = vector.broadcast %307 : vector<1x32xf32> to vector<32x32xf32>
    %309 = arith.addf %306, %308 : vector<32x32xf32>
    %c0_136 = arith.constant 0 : index
    %c0_137 = arith.constant 0 : index
    %c0_138 = arith.constant 0 : index
    %310 = vector.load %arg29[%c0_136, %c0_137, %c0_138] : memref<1x32x32xf32, #tpu.memory_space<vmem>>, vector<1x32x32xf32>
    %311 = vector.shape_cast %310 : vector<1x32x32xf32> to vector<32x32xf32>
    %312 = vector.shape_cast %309 : vector<32x32xf32> to vector<1x32x32xf32>
    tpu.vector_store %arg29[%c0_136, %c0_137, %c0_138], %312 {strides = array<i32>} : memref<1x32x32xf32, #tpu.memory_space<vmem>>, vector<1x32x32xf32>,
    %cst_139 = arith.constant dense<0xFF800000> : vector<32xf32>
    %313 = vector.multi_reduction <maximumf>, %309, %cst_139 [1] : vector<32x32xf32> to vector<32xf32>
    %314 = vector.shape_cast %313 : vector<32xf32> to vector<32x1xf32>
    %315 = tpu.iota {dimensions = array<i32: 1>} : vector<32x32xi32>
    %316 = vector.broadcast %314 : vector<32x1xf32> to vector<32x32xf32>
    %317 = arith.cmpf oeq, %309, %316 : vector<32x32xf32>
    %c2147483647_i32 = arith.constant 2147483647 : i32
    %318 = vector.broadcast %c2147483647_i32 : i32 to vector<32x32xi32>
    %319 = arith.select %317, %315, %318 : vector<32x32xi1>, vector<32x32xi32>
    %cst_140 = arith.constant dense<2147483647> : vector<32xi32>
    %320 = vector.multi_reduction <minsi>, %319, %cst_140 [1] : vector<32x32xi32> to vector<32xi32>
    %321 = vector.shape_cast %320 : vector<32xi32> to vector<32x1xi32>
    %c0_141 = arith.constant 0 : index
    %c0_142 = arith.constant 0 : index
    %c0_143 = arith.constant 0 : index
    %322 = vector.load %arg30[%c0_141, %c0_142, %c0_143] : memref<1x32x1xi32, #tpu.memory_space<vmem>>, vector<1x32x1xi32>
    %323 = vector.shape_cast %322 : vector<1x32x1xi32> to vector<32x1xi32>
    %324 = vector.shape_cast %321 : vector<32x1xi32> to vector<1x32x1xi32>
    tpu.vector_store %arg30[%c0_141, %c0_142, %c0_143], %324 {strides = array<i32>} : memref<1x32x1xi32, #tpu.memory_space<vmem>>, vector<1x32x1xi32>,
    return
  }
  func.func @transform_0(%arg0: i32) -> (i32, i32, i32) {
    %c0_i32 = arith.constant 0 : i32
    %c0_i32_0 = arith.constant 0 : i32
    %c0_i32_1 = arith.constant 0 : i32
    return %arg0, %c0_i32, %c0_i32_0 : i32, i32, i32
  }
  func.func @transform_1(%arg0: i32) -> (i32, i32, i32) {
    %c0_i32 = arith.constant 0 : i32
    %c0_i32_0 = arith.constant 0 : i32
    %c0_i32_1 = arith.constant 0 : i32
    return %arg0, %c0_i32, %c0_i32_0 : i32, i32, i32
  }
  func.func @transform_2(%arg0: i32) -> (i32, i32) {
    %c0_i32 = arith.constant 0 : i32
    %c0_i32_0 = arith.constant 0 : i32
    %c0_i32_1 = arith.constant 0 : i32
    return %c0_i32, %c0_i32_0 : i32, i32
  }
  func.func @transform_3(%arg0: i32) -> (i32, i32) {
    %c0_i32 = arith.constant 0 : i32
    %c0_i32_0 = arith.constant 0 : i32
    %c0_i32_1 = arith.constant 0 : i32
    return %c0_i32, %c0_i32_0 : i32, i32
  }
  func.func @transform_4(%arg0: i32) -> (i32, i32) {
    %c0_i32 = arith.constant 0 : i32
    %c0_i32_0 = arith.constant 0 : i32
    %c0_i32_1 = arith.constant 0 : i32
    return %c0_i32, %c0_i32_0 : i32, i32
  }
  func.func @transform_5(%arg0: i32) -> (i32, i32) {
    %c0_i32 = arith.constant 0 : i32
    %c0_i32_0 = arith.constant 0 : i32
    %c0_i32_1 = arith.constant 0 : i32
    return %c0_i32, %c0_i32_0 : i32, i32
  }
  func.func @transform_6(%arg0: i32) -> (i32, i32) {
    %c0_i32 = arith.constant 0 : i32
    %c0_i32_0 = arith.constant 0 : i32
    %c0_i32_1 = arith.constant 0 : i32
    return %c0_i32, %c0_i32_0 : i32, i32
  }
  func.func @transform_7(%arg0: i32) -> (i32, i32) {
    %c0_i32 = arith.constant 0 : i32
    %c0_i32_0 = arith.constant 0 : i32
    %c0_i32_1 = arith.constant 0 : i32
    return %c0_i32, %c0_i32_0 : i32, i32
  }
  func.func @transform_8(%arg0: i32) -> (i32, i32) {
    %c0_i32 = arith.constant 0 : i32
    %c0_i32_0 = arith.constant 0 : i32
    %c0_i32_1 = arith.constant 0 : i32
    return %c0_i32, %c0_i32_0 : i32, i32
  }
  func.func @transform_9(%arg0: i32) -> (i32, i32) {
    %c0_i32 = arith.constant 0 : i32
    %c0_i32_0 = arith.constant 0 : i32
    %c0_i32_1 = arith.constant 0 : i32
    return %c0_i32, %c0_i32_0 : i32, i32
  }
  func.func @transform_10(%arg0: i32) -> (i32, i32) {
    %c0_i32 = arith.constant 0 : i32
    %c0_i32_0 = arith.constant 0 : i32
    %c0_i32_1 = arith.constant 0 : i32
    return %c0_i32, %c0_i32_0 : i32, i32
  }
  func.func @transform_11(%arg0: i32) -> (i32, i32) {
    %c0_i32 = arith.constant 0 : i32
    %c0_i32_0 = arith.constant 0 : i32
    %c0_i32_1 = arith.constant 0 : i32
    return %c0_i32, %c0_i32_0 : i32, i32
  }
  func.func @transform_12(%arg0: i32) -> (i32, i32) {
    %c0_i32 = arith.constant 0 : i32
    %c0_i32_0 = arith.constant 0 : i32
    %c0_i32_1 = arith.constant 0 : i32
    return %c0_i32, %c0_i32_0 : i32, i32
  }
  func.func @transform_13(%arg0: i32) -> (i32, i32) {
    %c0_i32 = arith.constant 0 : i32
    %c0_i32_0 = arith.constant 0 : i32
    %c0_i32_1 = arith.constant 0 : i32
    return %c0_i32, %c0_i32_0 : i32, i32
  }
  func.func @transform_14(%arg0: i32) -> (i32, i32) {
    %c0_i32 = arith.constant 0 : i32
    %c0_i32_0 = arith.constant 0 : i32
    %c0_i32_1 = arith.constant 0 : i32
    return %c0_i32, %c0_i32_0 : i32, i32
  }
  func.func @transform_15(%arg0: i32) -> (i32, i32) {
    %c0_i32 = arith.constant 0 : i32
    %c0_i32_0 = arith.constant 0 : i32
    %c0_i32_1 = arith.constant 0 : i32
    return %c0_i32, %c0_i32_0 : i32, i32
  }
  func.func @transform_16(%arg0: i32) -> (i32, i32) {
    %c0_i32 = arith.constant 0 : i32
    %c0_i32_0 = arith.constant 0 : i32
    %c0_i32_1 = arith.constant 0 : i32
    return %c0_i32, %c0_i32_0 : i32, i32
  }
  func.func @transform_17(%arg0: i32) -> (i32, i32) {
    %c0_i32 = arith.constant 0 : i32
    %c0_i32_0 = arith.constant 0 : i32
    %c0_i32_1 = arith.constant 0 : i32
    return %c0_i32, %c0_i32_0 : i32, i32
  }
  func.func @transform_18(%arg0: i32) -> (i32, i32) {
    %c0_i32 = arith.constant 0 : i32
    %c0_i32_0 = arith.constant 0 : i32
    %c0_i32_1 = arith.constant 0 : i32
    return %c0_i32, %c0_i32_0 : i32, i32
  }
  func.func @transform_19(%arg0: i32) -> (i32, i32) {
    %c0_i32 = arith.constant 0 : i32
    %c0_i32_0 = arith.constant 0 : i32
    %c0_i32_1 = arith.constant 0 : i32
    return %c0_i32, %c0_i32_0 : i32, i32
  }
  func.func @transform_20(%arg0: i32) -> (i32, i32) {
    %c0_i32 = arith.constant 0 : i32
    %c0_i32_0 = arith.constant 0 : i32
    %c0_i32_1 = arith.constant 0 : i32
    return %c0_i32, %c0_i32_0 : i32, i32
  }
  func.func @transform_21(%arg0: i32) -> (i32, i32) {
    %c0_i32 = arith.constant 0 : i32
    %c0_i32_0 = arith.constant 0 : i32
    %c0_i32_1 = arith.constant 0 : i32
    return %c0_i32, %c0_i32_0 : i32, i32
  }
  func.func @transform_22(%arg0: i32) -> (i32, i32) {
    %c0_i32 = arith.constant 0 : i32
    %c0_i32_0 = arith.constant 0 : i32
    %c0_i32_1 = arith.constant 0 : i32
    return %c0_i32, %c0_i32_0 : i32, i32
  }
  func.func @transform_23(%arg0: i32) -> (i32, i32) {
    %c0_i32 = arith.constant 0 : i32
    %c0_i32_0 = arith.constant 0 : i32
    %c0_i32_1 = arith.constant 0 : i32
    return %c0_i32, %c0_i32_0 : i32, i32
  }
  func.func @transform_24(%arg0: i32) -> (i32, i32) {
    %c0_i32 = arith.constant 0 : i32
    %c0_i32_0 = arith.constant 0 : i32
    %c0_i32_1 = arith.constant 0 : i32
    return %c0_i32, %c0_i32_0 : i32, i32
  }
  func.func @transform_25(%arg0: i32) -> (i32, i32) {
    %c0_i32 = arith.constant 0 : i32
    %c0_i32_0 = arith.constant 0 : i32
    %c0_i32_1 = arith.constant 0 : i32
    return %c0_i32, %c0_i32_0 : i32, i32
  }
  func.func @transform_26(%arg0: i32) -> (i32, i32) {
    %c0_i32 = arith.constant 0 : i32
    %c0_i32_0 = arith.constant 0 : i32
    %c0_i32_1 = arith.constant 0 : i32
    return %c0_i32, %c0_i32_0 : i32, i32
  }
  func.func @transform_27(%arg0: i32) -> (i32, i32) {
    %c0_i32 = arith.constant 0 : i32
    %c0_i32_0 = arith.constant 0 : i32
    %c0_i32_1 = arith.constant 0 : i32
    return %c0_i32, %c0_i32_0 : i32, i32
  }
  func.func @transform_28(%arg0: i32) -> (i32, i32, i32) {
    %c0_i32 = arith.constant 0 : i32
    %c0_i32_0 = arith.constant 0 : i32
    %c0_i32_1 = arith.constant 0 : i32
    return %arg0, %c0_i32, %c0_i32_0 : i32, i32, i32
  }
  func.func @transform_29(%arg0: i32) -> (i32, i32, i32) {
    %c0_i32 = arith.constant 0 : i32
    %c0_i32_0 = arith.constant 0 : i32
    %c0_i32_1 = arith.constant 0 : i32
    return %arg0, %c0_i32, %c0_i32_0 : i32, i32, i32
  }
}

</mosaic_0001>

<llo_original>
// kernel: wav2vec2_ctc_forward.1
$region0: #{wav2vec2_ctc_forward.1}
  #allocation0 [shape = 'u32[]', space=smem, size = 0x4, offset = 0x4, fixed_abs, tag = 'smem constant byte address 0x4 - core index']
  #allocation1 [shape = 'u32[72,128]{1,0:T(1,128)}', space=vmem, size = 0x9000, scoped, tag = 'internal scratch']
  #allocation2 [shape = 'f32[65,32]{1,0:T(8,128)}', space=vmem, size = 0x9000, scoped, tag = 'scratch operand']
  %s0 = inlined_call_operand.smem [shape: u32[30], index: -1, kind: input, shape index: {}]
  %s1 = sld [smem:[%s0]]
  %s2 = scalar_lea.smem %s0, 1
  %s3 = sld [smem:[%s2]]
  %s4 = scalar_lea.smem %s0, 2
  %s5 = sld [smem:[%s4]]
  %s6 = scalar_lea.smem %s0, 3
  %s7 = sld [smem:[%s6]]
  %s8 = scalar_lea.smem %s0, 4
  %s9 = sld [smem:[%s8]]
  %s10 = scalar_lea.smem %s0, 5
  %s11 = sld [smem:[%s10]]
  %s12 = scalar_lea.smem %s0, 6
  %s13 = sld [smem:[%s12]]
  %s14 = scalar_lea.smem %s0, 7
  %s15 = sld [smem:[%s14]]
  %s16 = scalar_lea.smem %s0, 8
  %s17 = sld [smem:[%s16]]
  %s18 = scalar_lea.smem %s0, 9
  %s19 = sld [smem:[%s18]]
  %s20 = scalar_lea.smem %s0, 10
  %s21 = sld [smem:[%s20]]
  %s22 = scalar_lea.smem %s0, 11
  %s23 = sld [smem:[%s22]]
  %s24 = scalar_lea.smem %s0, 12
  %s25 = sld [smem:[%s24]]
  %s26 = scalar_lea.smem %s0, 13
  %s27 = sld [smem:[%s26]]
  %s28 = scalar_lea.smem %s0, 14
  %s29 = sld [smem:[%s28]]
  %s30 = scalar_lea.smem %s0, 15
  %s31 = sld [smem:[%s30]]
  %s32 = scalar_lea.smem %s0, 16
  %s33 = sld [smem:[%s32]]
  %s34 = scalar_lea.smem %s0, 17
  %s35 = sld [smem:[%s34]]
  %s36 = scalar_lea.smem %s0, 18
  %s37 = sld [smem:[%s36]]
  %s38 = scalar_lea.smem %s0, 19
  %s39 = sld [smem:[%s38]]
  %s40 = scalar_lea.smem %s0, 20
  %s41 = sld [smem:[%s40]]
  %s42 = scalar_lea.smem %s0, 21
  %s43 = sld [smem:[%s42]]
  %s44 = scalar_lea.smem %s0, 22
  %s45 = sld [smem:[%s44]]
  %s46 = scalar_lea.smem %s0, 23
  %s47 = sld [smem:[%s46]]
  %s48 = scalar_lea.smem %s0, 24
  %s49 = sld [smem:[%s48]]
  %s50 = scalar_lea.smem %s0, 25
  %s51 = sld [smem:[%s50]]
  %s52 = scalar_lea.smem %s0, 26
  %s53 = sld [smem:[%s52]]
  %s54 = scalar_lea.smem %s0, 27
  %s55 = sld [smem:[%s54]]
  %s56 = scalar_lea.smem %s0, 28
  %s57 = sld [smem:[%s56]]
  %s58 = scalar_lea.smem %s0, 29
  %s59 = sld [smem:[%s58]]
  %60 = xla_tuple %s57, %s59
  %s61 = sld [smem:[#allocation0]]
  $region153: #{wav2vec2_ctc_forward.1} parent=0
    _
  %s63 = ssub.s32 1, %s61
  %s64 = scalar_select 0, %s63, %s61
  $region1: #{wav2vec2_ctc_forward.1} parent=0
    #allocation3 [shape = 'u8[32768]{0}', space=vmem, size = 0x8000, scoped, tag = 'output window, operand 0']
    #allocation4 [shape = 's32[2]{0}', space=sflag, size = 0x8, scoped, tag = 'scoped memory for wav2vec2_ctc_forward.1']
    %65 = vsyncpa [#allocation4], 0
    %s66 = scalar_lea.sflag [#allocation4], 1
    %67 = vsyncpa %s66, 0
    loop: start=0, step=1, limit=4
    $region2: #{wav2vec2_ctc_forward.1} parent=1 // loop_pre_header
      _
    $region3: #{wav2vec2_ctc_forward.1} parent=1 // loop_header
      %s69 = sphi 0, %s73
      %p70 = scmp.ge.s32.totalorder %s69, 4
      %s79 = sphi 0, %s81
      %s82 = sphi 0, %s79
      %s83 = sphi 0, %s82
      %s99 = sphi 0, %s83
      %s105 = sphi 0, %s107
      %s108 = sphi 0, %s105
      %s109 = sphi 0, %s108
      %s125 = sphi 0, %s109
      %s129 = sphi 0, %s129
      %s131 = sphi 0, %s129
      %s132 = sphi 0, %s131
      %s146 = sphi 0, %s132
      %s150 = sphi 0, %s150
      %s152 = sphi 0, %s150
      %s153 = sphi 0, %s152
      %s167 = sphi 0, %s153
      %s171 = sphi 0, %s171
      %s173 = sphi 0, %s171
      %s174 = sphi 0, %s173
      %s188 = sphi 0, %s174
      %s192 = sphi 0, %s192
      %s194 = sphi 0, %s192
      %s195 = sphi 0, %s194
      %s209 = sphi 0, %s195
      %s213 = sphi 0, %s213
      %s215 = sphi 0, %s213
      %s216 = sphi 0, %s215
      %s230 = sphi 0, %s216
      %s234 = sphi 0, %s234
      %s236 = sphi 0, %s234
      %s237 = sphi 0, %s236
      %s251 = sphi 0, %s237
      %s255 = sphi 0, %s255
      %s257 = sphi 0, %s255
      %s258 = sphi 0, %s257
      %s272 = sphi 0, %s258
      %s276 = sphi 0, %s276
      %s278 = sphi 0, %s276
      %s279 = sphi 0, %s278
      %s293 = sphi 0, %s279
      %s297 = sphi 0, %s297
      %s299 = sphi 0, %s297
      %s300 = sphi 0, %s299
      %s314 = sphi 0, %s300
      %s318 = sphi 0, %s318
      %s320 = sphi 0, %s318
      %s321 = sphi 0, %s320
      %s335 = sphi 0, %s321
      %s339 = sphi 0, %s339
      %s341 = sphi 0, %s339
      %s342 = sphi 0, %s341
      %s356 = sphi 0, %s342
      %s360 = sphi 0, %s360
      %s362 = sphi 0, %s360
      %s363 = sphi 0, %s362
      %s377 = sphi 0, %s363
      %s381 = sphi 0, %s381
      %s383 = sphi 0, %s381
      %s384 = sphi 0, %s383
      %s398 = sphi 0, %s384
      %s402 = sphi 0, %s402
      %s404 = sphi 0, %s402
      %s405 = sphi 0, %s404
      %s419 = sphi 0, %s405
      %s423 = sphi 0, %s423
      %s425 = sphi 0, %s423
      %s426 = sphi 0, %s425
      %s440 = sphi 0, %s426
      %s444 = sphi 0, %s444
      %s446 = sphi 0, %s444
      %s447 = sphi 0, %s446
      %s461 = sphi 0, %s447
      %s465 = sphi 0, %s465
      %s467 = sphi 0, %s465
      %s468 = sphi 0, %s467
      %s482 = sphi 0, %s468
      %s486 = sphi 0, %s486
      %s488 = sphi 0, %s486
      %s489 = sphi 0, %s488
      %s503 = sphi 0, %s489
      %s507 = sphi 0, %s507
      %s509 = sphi 0, %s507
      %s510 = sphi 0, %s509
      %s524 = sphi 0, %s510
      %s528 = sphi 0, %s528
      %s530 = sphi 0, %s528
      %s531 = sphi 0, %s530
      %s545 = sphi 0, %s531
      %s549 = sphi 0, %s549
      %s551 = sphi 0, %s549
      %s552 = sphi 0, %s551
      %s566 = sphi 0, %s552
      %s570 = sphi 0, %s570
      %s572 = sphi 0, %s570
      %s573 = sphi 0, %s572
      %s587 = sphi 0, %s573
      %s591 = sphi 0, %s591
      %s593 = sphi 0, %s591
      %s594 = sphi 0, %s593
      %s608 = sphi 0, %s594
      %s612 = sphi 0, %s612
      %s614 = sphi 0, %s612
      %s615 = sphi 0, %s614
      %s629 = sphi 0, %s615
      %s633 = sphi 0, %s633
      %s635 = sphi 0, %s633
      %s636 = sphi 0, %s635
      %s650 = sphi 0, %s636
      %s654 = sphi 0, %s654
      %s656 = sphi 0, %s654
      %s657 = sphi 0, %s656
      %s671 = sphi 0, %s657
      %s677 = sphi 0, %s679
      %s680 = sphi 0, %s677
      %s681 = sphi 0, %s680
      %s697 = sphi 0, %s681
      %s703 = sphi 0, %s705
      %s706 = sphi 0, %s703
      %s707 = sphi 0, %s706
      %s723 = sphi 0, %s707
    $region4: #{wav2vec2_ctc_forward.1} parent=1 // loop_header_branch
      %72 = sbr.rel (%p70) target = $region8
    $region5: #{wav2vec2_ctc_forward.1} parent=1 // loop_body
      %s74 = ssub.s32 %s69, 1
      %s75 = ssub.s32 %s69, 2
      %s76 = sadd.s32 %s69, 1
      %s77 = ssub.s32 %s69, %s76
      %p78 = scmp.eq.s32.totalorder %s77, 0
      %s80 = sadd.s32 %s79, 1
      %s81 = scalar_select %p78, %s79, %s80
      %p84 = pneg %p78
      %p85 = scmp.eq.s32.totalorder %s69, 1
      %p86 = por %p84, %p85
      %p87 = scmp.ne.s32.totalorder %s79, %s82
      %p88 = scmp.eq.s32.totalorder %s69, 0
      %p89 = por %p87, %p88
      %p90 = scmp.ne.s32.totalorder %s79, %s82
      %p91 = scmp.eq.s32.totalorder %s74, 1
      %p92 = por %p90, %p91
      %p93 = scmp.ne.s32.totalorder %s82, %s83
      %p94 = scmp.eq.s32.totalorder %s74, 0
      %p95 = por %p93, %p94
      %p96 = scmp.ne.s32.totalorder %s82, %s83
      %p97 = scmp.eq.s32.totalorder %s75, 1
      %p98 = por %p96, %p97
      %p100 = scmp.ne.s32.totalorder %s83, %s99
      %p101 = scmp.eq.s32.totalorder %s75, 0
      %p102 = por %p100, %p101
      %s103 = ssub.s32 %s69, %s76
      %p104 = scmp.eq.s32.totalorder %s103, 0
      %s106 = sadd.s32 %s105, 1
      %s107 = scalar_select %p104, %s105, %s106
      %p110 = pneg %p104
      %p111 = scmp.eq.s32.totalorder %s69, 1
      %p112 = por %p110, %p111
      %p113 = scmp.ne.s32.totalorder %s105, %s108
      %p114 = scmp.eq.s32.totalorder %s69, 0
      %p115 = por %p113, %p114
      %p116 = scmp.ne.s32.totalorder %s105, %s108
      %p117 = scmp.eq.s32.totalorder %s74, 1
      %p118 = por %p116, %p117
      %p119 = scmp.ne.s32.totalorder %s108, %s109
      %p120 = scmp.eq.s32.totalorder %s74, 0
      %p121 = por %p119, %p120
      %p122 = scmp.ne.s32.totalorder %s108, %s109
      %p123 = scmp.eq.s32.totalorder %s75, 1
      %p124 = por %p122, %p123
      %p126 = scmp.ne.s32.totalorder %s109, %s125
      %p127 = scmp.eq.s32.totalorder %s75, 0
      %p128 = por %p126, %p127
      %s130 = sadd.s32 %s129, 1
      %p133 = scmp.eq.s32.totalorder %s69, 1
      %p134 = scmp.ne.s32.totalorder %s129, %s131
      %p135 = scmp.eq.s32.totalorder %s69, 0
      %p136 = por %p134, %p135
      %p137 = scmp.ne.s32.totalorder %s129, %s131
      %p138 = scmp.eq.s32.totalorder %s74, 1
      %p139 = por %p137, %p138
      %p140 = scmp.ne.s32.totalorder %s131, %s132
      %p141 = scmp.eq.s32.totalorder %s74, 0
      %p142 = por %p140, %p141
      %p143 = scmp.ne.s32.totalorder %s131, %s132
      %p144 = scmp.eq.s32.totalorder %s75, 1
      %p145 = por %p143, %p144
      %p147 = scmp.ne.s32.totalorder %s132, %s146
      %p148 = scmp.eq.s32.totalorder %s75, 0
      %p149 = por %p147, %p148
      %s151 = sadd.s32 %s150, 1
      %p154 = scmp.eq.s32.totalorder %s69, 1
      %p155 = scmp.ne.s32.totalorder %s150, %s152
      %p156 = scmp.eq.s32.totalorder %s69, 0
      %p157 = por %p155, %p156
      %p158 = scmp.ne.s32.totalorder %s150, %s152
      %p159 = scmp.eq.s32.totalorder %s74, 1
      %p160 = por %p158, %p159
      %p161 = scmp.ne.s32.totalorder %s152, %s153
      %p162 = scmp.eq.s32.totalorder %s74, 0
      %p163 = por %p161, %p162
      %p164 = scmp.ne.s32.totalorder %s152, %s153
      %p165 = scmp.eq.s32.totalorder %s75, 1
      %p166 = por %p164, %p165
      %p168 = scmp.ne.s32.totalorder %s153, %s167
      %p169 = scmp.eq.s32.totalorder %s75, 0
      %p170 = por %p168, %p169
      %s172 = sadd.s32 %s171, 1
      %p175 = scmp.eq.s32.totalorder %s69, 1
      %p176 = scmp.ne.s32.totalorder %s171, %s173
      %p177 = scmp.eq.s32.totalorder %s69, 0
      %p178 = por %p176, %p177
      %p179 = scmp.ne.s32.totalorder %s171, %s173
      %p180 = scmp.eq.s32.totalorder %s74, 1
      %p181 = por %p179, %p180
      %p182 = scmp.ne.s32.totalorder %s173, %s174
      %p183 = scmp.eq.s32.totalorder %s74, 0
      %p184 = por %p182, %p183
      %p185 = scmp.ne.s32.totalorder %s173, %s174
      %p186 = scmp.eq.s32.totalorder %s75, 1
      %p187 = por %p185, %p186
      %p189 = scmp.ne.s32.totalorder %s174, %s188
      %p190 = scmp.eq.s32.totalorder %s75, 0
      %p191 = por %p189, %p190
      %s193 = sadd.s32 %s192, 1
      %p196 = scmp.eq.s32.totalorder %s69, 1
      %p197 = scmp.ne.s32.totalorder %s192, %s194
      %p198 = scmp.eq.s32.totalorder %s69, 0
      %p199 = por %p197, %p198
      %p200 = scmp.ne.s32.totalorder %s192, %s194
      %p201 = scmp.eq.s32.totalorder %s74, 1
      %p202 = por %p200, %p201
      %p203 = scmp.ne.s32.totalorder %s194, %s195
      %p204 = scmp.eq.s32.totalorder %s74, 0
      %p205 = por %p203, %p204
      %p206 = scmp.ne.s32.totalorder %s194, %s195
      %p207 = scmp.eq.s32.totalorder %s75, 1
      %p208 = por %p206, %p207
      %p210 = scmp.ne.s32.totalorder %s195, %s209
      %p211 = scmp.eq.s32.totalorder %s75, 0
      %p212 = por %p210, %p211
      %s214 = sadd.s32 %s213, 1
      %p217 = scmp.eq.s32.totalorder %s69, 1
      %p218 = scmp.ne.s32.totalorder %s213, %s215
      %p219 = scmp.eq.s32.totalorder %s69, 0
      %p220 = por %p218, %p219
      %p221 = scmp.ne.s32.totalorder %s213, %s215
      %p222 = scmp.eq.s32.totalorder %s74, 1
      %p223 = por %p221, %p222
      %p224 = scmp.ne.s32.totalorder %s215, %s216
      %p225 = scmp.eq.s32.totalorder %s74, 0
      %p226 = por %p224, %p225
      %p227 = scmp.ne.s32.totalorder %s215, %s216
      %p228 = scmp.eq.s32.totalorder %s75, 1
      %p229 = por %p227, %p228
      %p231 = scmp.ne.s32.totalorder %s216, %s230
      %p232 = scmp.eq.s32.totalorder %s75, 0
      %p233 = por %p231, %p232
      %s235 = sadd.s32 %s234, 1
      %p238 = scmp.eq.s32.totalorder %s69, 1
      %p239 = scmp.ne.s32.totalorder %s234, %s236
      %p240 = scmp.eq.s32.totalorder %s69, 0
      %p241 = por %p239, %p240
      %p242 = scmp.ne.s32.totalorder %s234, %s236
      %p243 = scmp.eq.s32.totalorder %s74, 1
      %p244 = por %p242, %p243
      %p245 = scmp.ne.s32.totalorder %s236, %s237
      %p246 = scmp.eq.s32.totalorder %s74, 0
      %p247 = por %p245, %p246
      %p248 = scmp.ne.s32.totalorder %s236, %s237
      %p249 = scmp.eq.s32.totalorder %s75, 1
      %p250 = por %p248, %p249
      %p252 = scmp.ne.s32.totalorder %s237, %s251
      %p253 = scmp.eq.s32.totalorder %s75, 0
      %p254 = por %p252, %p253
      %s256 = sadd.s32 %s255, 1
      %p259 = scmp.eq.s32.totalorder %s69, 1
      %p260 = scmp.ne.s32.totalorder %s255, %s257
      %p261 = scmp.eq.s32.totalorder %s69, 0
      %p262 = por %p260, %p261
      %p263 = scmp.ne.s32.totalorder %s255, %s257
      %p264 = scmp.eq.s32.totalorder %s74, 1
      %p265 = por %p263, %p264
      %p266 = scmp.ne.s32.totalorder %s257, %s258
      %p267 = scmp.eq.s32.totalorder %s74, 0
      %p268 = por %p266, %p267
      %p269 = scmp.ne.s32.totalorder %s257, %s258
      %p270 = scmp.eq.s32.totalorder %s75, 1
      %p271 = por %p269, %p270
      %p273 = scmp.ne.s32.totalorder %s258, %s272
      %p274 = scmp.eq.s32.totalorder %s75, 0
      %p275 = por %p273, %p274
      %s277 = sadd.s32 %s276, 1
      %p280 = scmp.eq.s32.totalorder %s69, 1
      %p281 = scmp.ne.s32.totalorder %s276, %s278
      %p282 = scmp.eq.s32.totalorder %s69, 0
      %p283 = por %p281, %p282
      %p284 = scmp.ne.s32.totalorder %s276, %s278
      %p285 = scmp.eq.s32.totalorder %s74, 1
      %p286 = por %p284, %p285
      %p287 = scmp.ne.s32.totalorder %s278, %s279
      %p288 = scmp.eq.s32.totalorder %s74, 0
      %p289 = por %p287, %p288
      %p290 = scmp.ne.s32.totalorder %s278, %s279
      %p291 = scmp.eq.s32.totalorder %s75, 1
      %p292 = por %p290, %p291
      %p294 = scmp.ne.s32.totalorder %s279, %s293
      %p295 = scmp.eq.s32.totalorder %s75, 0
      %p296 = por %p294, %p295
      %s298 = sadd.s32 %s297, 1
      %p301 = scmp.eq.s32.totalorder %s69, 1
      %p302 = scmp.ne.s32.totalorder %s297, %s299
      %p303 = scmp.eq.s32.totalorder %s69, 0
      %p304 = por %p302, %p303
      %p305 = scmp.ne.s32.totalorder %s297, %s299
      %p306 = scmp.eq.s32.totalorder %s74, 1
      %p307 = por %p305, %p306
      %p308 = scmp.ne.s32.totalorder %s299, %s300
      %p309 = scmp.eq.s32.totalorder %s74, 0
      %p310 = por %p308, %p309
      %p311 = scmp.ne.s32.totalorder %s299, %s300
      %p312 = scmp.eq.s32.totalorder %s75, 1
      %p313 = por %p311, %p312
      %p315 = scmp.ne.s32.totalorder %s300, %s314
      %p316 = scmp.eq.s32.totalorder %s75, 0
      %p317 = por %p315, %p316
      %s319 = sadd.s32 %s318, 1
      %p322 = scmp.eq.s32.totalorder %s69, 1
      %p323 = scmp.ne.s32.totalorder %s318, %s320
      %p324 = scmp.eq.s32.totalorder %s69, 0
      %p325 = por %p323, %p324
      %p326 = scmp.ne.s32.totalorder %s318, %s320
      %p327 = scmp.eq.s32.totalorder %s74, 1
      %p328 = por %p326, %p327
      %p329 = scmp.ne.s32.totalorder %s320, %s321
      %p330 = scmp.eq.s32.totalorder %s74, 0
      %p331 = por %p329, %p330
      %p332 = scmp.ne.s32.totalorder %s320, %s321
      %p333 = scmp.eq.s32.totalorder %s75, 1
      %p334 = por %p332, %p333
      %p336 = scmp.ne.s32.totalorder %s321, %s335
      %p337 = scmp.eq.s32.totalorder %s75, 0
      %p338 = por %p336, %p337
      %s340 = sadd.s32 %s339, 1
      %p343 = scmp.eq.s32.totalorder %s69, 1
      %p344 = scmp.ne.s32.totalorder %s339, %s341
      %p345 = scmp.eq.s32.totalorder %s69, 0
      %p346 = por %p344, %p345
      %p347 = scmp.ne.s32.totalorder %s339, %s341
      %p348 = scmp.eq.s32.totalorder %s74, 1
      %p349 = por %p347, %p348
      %p350 = scmp.ne.s32.totalorder %s341, %s342
      %p351 = scmp.eq.s32.totalorder %s74, 0
      %p352 = por %p350, %p351
      %p353 = scmp.ne.s32.totalorder %s341, %s342
      %p354 = scmp.eq.s32.totalorder %s75, 1
      %p355 = por %p353, %p354
      %p357 = scmp.ne.s32.totalorder %s342, %s356
      %p358 = scmp.eq.s32.totalorder %s75, 0
      %p359 = por %p357, %p358
      %s361 = sadd.s32 %s360, 1
      %p364 = scmp.eq.s32.totalorder %s69, 1
      %p365 = scmp.ne.s32.totalorder %s360, %s362
      %p366 = scmp.eq.s32.totalorder %s69, 0
      %p367 = por %p365, %p366
      %p368 = scmp.ne.s32.totalorder %s360, %s362
      %p369 = scmp.eq.s32.totalorder %s74, 1
      %p370 = por %p368, %p369
      %p371 = scmp.ne.s32.totalorder %s362, %s363
      %p372 = scmp.eq.s32.totalorder %s74, 0
      %p373 = por %p371, %p372
      %p374 = scmp.ne.s32.totalorder %s362, %s363
      %p375 = scmp.eq.s32.totalorder %s75, 1
      %p376 = por %p374, %p375
      %p378 = scmp.ne.s32.totalorder %s363, %s377
      %p379 = scmp.eq.s32.totalorder %s75, 0
      %p380 = por %p378, %p379
      %s382 = sadd.s32 %s381, 1
      %p385 = scmp.eq.s32.totalorder %s69, 1
      %p386 = scmp.ne.s32.totalorder %s381, %s383
      %p387 = scmp.eq.s32.totalorder %s69, 0
      %p388 = por %p386, %p387
      %p389 = scmp.ne.s32.totalorder %s381, %s383
      %p390 = scmp.eq.s32.totalorder %s74, 1
      %p391 = por %p389, %p390
      %p392 = scmp.ne.s32.totalorder %s383, %s384
      %p393 = scmp.eq.s32.totalorder %s74, 0
      %p394 = por %p392, %p393
      %p395 = scmp.ne.s32.totalorder %s383, %s384
      %p396 = scmp.eq.s32.totalorder %s75, 1
      %p397 = por %p395, %p396
      %p399 = scmp.ne.s32.totalorder %s384, %s398
      %p400 = scmp.eq.s32.totalorder %s75, 0
      %p401 = por %p399, %p400
      %s403 = sadd.s32 %s402, 1
      %p406 = scmp.eq.s32.totalorder %s69, 1
      %p407 = scmp.ne.s32.totalorder %s402, %s404
      %p408 = scmp.eq.s32.totalorder %s69, 0
      %p409 = por %p407, %p408
      %p410 = scmp.ne.s32.totalorder %s402, %s404
      %p411 = scmp.eq.s32.totalorder %s74, 1
      %p412 = por %p410, %p411
      %p413 = scmp.ne.s32.totalorder %s404, %s405
      %p414 = scmp.eq.s32.totalorder %s74, 0
      %p415 = por %p413, %p414
      %p416 = scmp.ne.s32.totalorder %s404, %s405
      %p417 = scmp.eq.s32.totalorder %s75, 1
      %p418 = por %p416, %p417
      %p420 = scmp.ne.s32.totalorder %s405, %s419
      %p421 = scmp.eq.s32.totalorder %s75, 0
      %p422 = por %p420, %p421
      %s424 = sadd.s32 %s423, 1
      %p427 = scmp.eq.s32.totalorder %s69, 1
      %p428 = scmp.ne.s32.totalorder %s423, %s425
      %p429 = scmp.eq.s32.totalorder %s69, 0
      %p430 = por %p428, %p429
      %p431 = scmp.ne.s32.totalorder %s423, %s425
      %p432 = scmp.eq.s32.totalorder %s74, 1
      %p433 = por %p431, %p432
      %p434 = scmp.ne.s32.totalorder %s425, %s426
      %p435 = scmp.eq.s32.totalorder %s74, 0
      %p436 = por %p434, %p435
      %p437 = scmp.ne.s32.totalorder %s425, %s426
      %p438 = scmp.eq.s32.totalorder %s75, 1
      %p439 = por %p437, %p438
      %p441 = scmp.ne.s32.totalorder %s426, %s440
      %p442 = scmp.eq.s32.totalorder %s75, 0
      %p443 = por %p441, %p442
      %s445 = sadd.s32 %s444, 1
      %p448 = scmp.eq.s32.totalorder %s69, 1
      %p449 = scmp.ne.s32.totalorder %s444, %s446
      %p450 = scmp.eq.s32.totalorder %s69, 0
      %p451 = por %p449, %p450
      %p452 = scmp.ne.s32.totalorder %s444, %s446
      %p453 = scmp.eq.s32.totalorder %s74, 1
      %p454 = por %p452, %p453
      %p455 = scmp.ne.s32.totalorder %s446, %s447
      %p456 = scmp.eq.s32.totalorder %s74, 0
      %p457 = por %p455, %p456
      %p458 = scmp.ne.s32.totalorder %s446, %s447
      %p459 = scmp.eq.s32.totalorder %s75, 1
      %p460 = por %p458, %p459
      %p462 = scmp.ne.s32.totalorder %s447, %s461
      %p463 = scmp.eq.s32.totalorder %s75, 0
      %p464 = por %p462, %p463
      %s466 = sadd.s32 %s465, 1
      %p469 = scmp.eq.s32.totalorder %s69, 1
      %p470 = scmp.ne.s32.totalorder %s465, %s467
      %p471 = scmp.eq.s32.totalorder %s69, 0
      %p472 = por %p470, %p471
      %p473 = scmp.ne.s32.totalorder %s465, %s467
      %p474 = scmp.eq.s32.totalorder %s74, 1
      %p475 = por %p473, %p474
      %p476 = scmp.ne.s32.totalorder %s467, %s468
      %p477 = scmp.eq.s32.totalorder %s74, 0
      %p478 = por %p476, %p477
      %p479 = scmp.ne.s32.totalorder %s467, %s468
      %p480 = scmp.eq.s32.totalorder %s75, 1
      %p481 = por %p479, %p480
      %p483 = scmp.ne.s32.totalorder %s468, %s482
      %p484 = scmp.eq.s32.totalorder %s75, 0
      %p485 = por %p483, %p484
      %s487 = sadd.s32 %s486, 1
      %p490 = scmp.eq.s32.totalorder %s69, 1
      %p491 = scmp.ne.s32.totalorder %s486, %s488
      %p492 = scmp.eq.s32.totalorder %s69, 0
      %p493 = por %p491, %p492
      %p494 = scmp.ne.s32.totalorder %s486, %s488
      %p495 = scmp.eq.s32.totalorder %s74, 1
      %p496 = por %p494, %p495
      %p497 = scmp.ne.s32.totalorder %s488, %s489
      %p498 = scmp.eq.s32.totalorder %s74, 0
      %p499 = por %p497, %p498
      %p500 = scmp.ne.s32.totalorder %s488, %s489
      %p501 = scmp.eq.s32.totalorder %s75, 1
      %p502 = por %p500, %p501
      %p504 = scmp.ne.s32.totalorder %s489, %s503
      %p505 = scmp.eq.s32.totalorder %s75, 0
      %p506 = por %p504, %p505
      %s508 = sadd.s32 %s507, 1
      %p511 = scmp.eq.s32.totalorder %s69, 1
      %p512 = scmp.ne.s32.totalorder %s507, %s509
      %p513 = scmp.eq.s32.totalorder %s69, 0
      %p514 = por %p512, %p513
      %p515 = scmp.ne.s32.totalorder %s507, %s509
      %p516 = scmp.eq.s32.totalorder %s74, 1
      %p517 = por %p515, %p516
      %p518 = scmp.ne.s32.totalorder %s509, %s510
      %p519 = scmp.eq.s32.totalorder %s74, 0
      %p520 = por %p518, %p519
      %p521 = scmp.ne.s32.totalorder %s509, %s510
      %p522 = scmp.eq.s32.totalorder %s75, 1
      %p523 = por %p521, %p522
      %p525 = scmp.ne.s32.totalorder %s510, %s524
      %p526 = scmp.eq.s32.totalorder %s75, 0
      %p527 = por %p525, %p526
      %s529 = sadd.s32 %s528, 1
      %p532 = scmp.eq.s32.totalorder %s69, 1
      %p533 = scmp.ne.s32.totalorder %s528, %s530
      %p534 = scmp.eq.s32.totalorder %s69, 0
      %p535 = por %p533, %p534
      %p536 = scmp.ne.s32.totalorder %s528, %s530
      %p537 = scmp.eq.s32.totalorder %s74, 1
      %p538 = por %p536, %p537
      %p539 = scmp.ne.s32.totalorder %s530, %s531
      %p540 = scmp.eq.s32.totalorder %s74, 0
      %p541 = por %p539, %p540
      %p542 = scmp.ne.s32.totalorder %s530, %s531
      %p543 = scmp.eq.s32.totalorder %s75, 1
      %p544 = por %p542, %p543
      %p546 = scmp.ne.s32.totalorder %s531, %s545
      %p547 = scmp.eq.s32.totalorder %s75, 0
      %p548 = por %p546, %p547
      %s550 = sadd.s32 %s549, 1
      %p553 = scmp.eq.s32.totalorder %s69, 1
      %p554 = scmp.ne.s32.totalorder %s549, %s551
      %p555 = scmp.eq.s32.totalorder %s69, 0
      %p556 = por %p554, %p555
      %p557 = scmp.ne.s32.totalorder %s549, %s551
      %p558 = scmp.eq.s32.totalorder %s74, 1
      %p559 = por %p557, %p558
      %p560 = scmp.ne.s32.totalorder %s551, %s552
      %p561 = scmp.eq.s32.totalorder %s74, 0
      %p562 = por %p560, %p561
      %p563 = scmp.ne.s32.totalorder %s551, %s552
      %p564 = scmp.eq.s32.totalorder %s75, 1
      %p565 = por %p563, %p564
      %p567 = scmp.ne.s32.totalorder %s552, %s566
      %p568 = scmp.eq.s32.totalorder %s75, 0
      %p569 = por %p567, %p568
      %s571 = sadd.s32 %s570, 1
      %p574 = scmp.eq.s32.totalorder %s69, 1
      %p575 = scmp.ne.s32.totalorder %s570, %s572
      %p576 = scmp.eq.s32.totalorder %s69, 0
      %p577 = por %p575, %p576
      %p578 = scmp.ne.s32.totalorder %s570, %s572
      %p579 = scmp.eq.s32.totalorder %s74, 1
      %p580 = por %p578, %p579
      %p581 = scmp.ne.s32.totalorder %s572, %s573
      %p582 = scmp.eq.s32.totalorder %s74, 0
      %p583 = por %p581, %p582
      %p584 = scmp.ne.s32.totalorder %s572, %s573
      %p585 = scmp.eq.s32.totalorder %s75, 1
      %p586 = por %p584, %p585
      %p588 = scmp.ne.s32.totalorder %s573, %s587
      %p589 = scmp.eq.s32.totalorder %s75, 0
      %p590 = por %p588, %p589
      %s592 = sadd.s32 %s591, 1
      %p595 = scmp.eq.s32.totalorder %s69, 1
      %p596 = scmp.ne.s32.totalorder %s591, %s593
      %p597 = scmp.eq.s32.totalorder %s69, 0
      %p598 = por %p596, %p597
      %p599 = scmp.ne.s32.totalorder %s591, %s593
      %p600 = scmp.eq.s32.totalorder %s74, 1
      %p601 = por %p599, %p600
      %p602 = scmp.ne.s32.totalorder %s593, %s594
      %p603 = scmp.eq.s32.totalorder %s74, 0
      %p604 = por %p602, %p603
      %p605 = scmp.ne.s32.totalorder %s593, %s594
      %p606 = scmp.eq.s32.totalorder %s75, 1
      %p607 = por %p605, %p606
      %p609 = scmp.ne.s32.totalorder %s594, %s608
      %p610 = scmp.eq.s32.totalorder %s75, 0
      %p611 = por %p609, %p610
      %s613 = sadd.s32 %s612, 1
      %p616 = scmp.eq.s32.totalorder %s69, 1
      %p617 = scmp.ne.s32.totalorder %s612, %s614
      %p618 = scmp.eq.s32.totalorder %s69, 0
      %p619 = por %p617, %p618
      %p620 = scmp.ne.s32.totalorder %s612, %s614
      %p621 = scmp.eq.s32.totalorder %s74, 1
      %p622 = por %p620, %p621
      %p623 = scmp.ne.s32.totalorder %s614, %s615
      %p624 = scmp.eq.s32.totalorder %s74, 0
      %p625 = por %p623, %p624
      %p626 = scmp.ne.s32.totalorder %s614, %s615
      %p627 = scmp.eq.s32.totalorder %s75, 1
      %p628 = por %p626, %p627
      %p630 = scmp.ne.s32.totalorder %s615, %s629
      %p631 = scmp.eq.s32.totalorder %s75, 0
      %p632 = por %p630, %p631
      %s634 = sadd.s32 %s633, 1
      %p637 = scmp.eq.s32.totalorder %s69, 1
      %p638 = scmp.ne.s32.totalorder %s633, %s635
      %p639 = scmp.eq.s32.totalorder %s69, 0
      %p640 = por %p638, %p639
      %p641 = scmp.ne.s32.totalorder %s633, %s635
      %p642 = scmp.eq.s32.totalorder %s74, 1
      %p643 = por %p641, %p642
      %p644 = scmp.ne.s32.totalorder %s635, %s636
      %p645 = scmp.eq.s32.totalorder %s74, 0
      %p646 = por %p644, %p645
      %p647 = scmp.ne.s32.totalorder %s635, %s636
      %p648 = scmp.eq.s32.totalorder %s75, 1
      %p649 = por %p647, %p648
      %p651 = scmp.ne.s32.totalorder %s636, %s650
      %p652 = scmp.eq.s32.totalorder %s75, 0
      %p653 = por %p651, %p652
      %s655 = sadd.s32 %s654, 1
      %p658 = scmp.eq.s32.totalorder %s69, 1
      %p659 = scmp.ne.s32.totalorder %s654, %s656
      %p660 = scmp.eq.s32.totalorder %s69, 0
      %p661 = por %p659, %p660
      %p662 = scmp.ne.s32.totalorder %s654, %s656
      %p663 = scmp.eq.s32.totalorder %s74, 1
      %p664 = por %p662, %p663
      %p665 = scmp.ne.s32.totalorder %s656, %s657
      %p666 = scmp.eq.s32.totalorder %s74, 0
      %p667 = por %p665, %p666
      %p668 = scmp.ne.s32.totalorder %s656, %s657
      %p669 = scmp.eq.s32.totalorder %s75, 1
      %p670 = por %p668, %p669
      %p672 = scmp.ne.s32.totalorder %s657, %s671
      %p673 = scmp.eq.s32.totalorder %s75, 0
      %p674 = por %p672, %p673
      %s675 = ssub.s32 %s69, %s76
      %p676 = scmp.eq.s32.totalorder %s675, 0
      %s678 = sadd.s32 %s677, 1
      %s679 = scalar_select %p676, %s677, %s678
      %p682 = pneg %p676
      %p683 = scmp.eq.s32.totalorder %s69, 1
      %p684 = por %p682, %p683
      %p685 = scmp.ne.s32.totalorder %s677, %s680
      %p686 = scmp.eq.s32.totalorder %s69, 0
      %p687 = por %p685, %p686
      %p688 = scmp.ne.s32.totalorder %s677, %s680
      %p689 = scmp.eq.s32.totalorder %s74, 1
      %p690 = por %p688, %p689
      %p691 = scmp.ne.s32.totalorder %s680, %s681
      %p692 = scmp.eq.s32.totalorder %s74, 0
      %p693 = por %p691, %p692
      %p694 = scmp.ne.s32.totalorder %s680, %s681
      %p695 = scmp.eq.s32.totalorder %s75, 1
      %p696 = por %p694, %p695
      %p698 = scmp.ne.s32.totalorder %s681, %s697
      %p699 = scmp.eq.s32.totalorder %s75, 0
      %p700 = por %p698, %p699
      %s701 = ssub.s32 %s69, %s76
      %p702 = scmp.eq.s32.totalorder %s701, 0
      %s704 = sadd.s32 %s703, 1
      %s705 = scalar_select %p702, %s703, %s704
      %p708 = pneg %p702
      %p709 = scmp.eq.s32.totalorder %s69, 1
      %p710 = por %p708, %p709
      %p711 = scmp.ne.s32.totalorder %s703, %s706
      %p712 = scmp.eq.s32.totalorder %s69, 0
      %p713 = por %p711, %p712
      %p714 = scmp.ne.s32.totalorder %s703, %s706
      %p715 = scmp.eq.s32.totalorder %s74, 1
      %p716 = por %p714, %p715
      %p717 = scmp.ne.s32.totalorder %s706, %s707
      %p718 = scmp.eq.s32.totalorder %s74, 0
      %p719 = por %p717, %p718
      %p720 = scmp.ne.s32.totalorder %s706, %s707
      %p721 = scmp.eq.s32.totalorder %s75, 1
      %p722 = por %p720, %p721
      %p724 = scmp.ne.s32.totalorder %s707, %s723
      %p725 = scmp.eq.s32.totalorder %s75, 0
      %p726 = por %p724, %p725
      %p727 = scmp.le.s32.totalorder 1, %s69
      %p728 = scmp.lt.s32.totalorder %s69, 3
      %p729 = pnand %p727, %p728
      %p730 = pneg %p729
      // Predicated region
      $region9: #{wav2vec2_ctc_forward.1} parent=5 // pred_check
        _
      $region10: #{wav2vec2_ctc_forward.1} parent=5 // pred_check_branch
        %732 = sbr.rel (%p729) target = $region12
      $region11: #{wav2vec2_ctc_forward.1} parent=5 // pred_region
        %s733 = ssub.s32 %s69, 1
        // Predicated region
        $region13: #{wav2vec2_ctc_forward.1} parent=11 // pred_check
          %p734 = pneg %p142
        $region14: #{wav2vec2_ctc_forward.1} parent=11 // pred_check_branch
          %736 = sbr.rel (%p734) target = $region16
        $region15: #{wav2vec2_ctc_forward.1} parent=11 // pred_region
          _
        $region16: #{wav2vec2_ctc_forward.1} parent=11 // pred_fallthru
          _
        // Predicated region
        $region17: #{wav2vec2_ctc_forward.1} parent=11 // pred_check
          %p737 = pneg %p163
        $region18: #{wav2vec2_ctc_forward.1} parent=11 // pred_check_branch
          %739 = sbr.rel (%p737) target = $region20
        $region19: #{wav2vec2_ctc_forward.1} parent=11 // pred_region
          _
        $region20: #{wav2vec2_ctc_forward.1} parent=11 // pred_fallthru
          _
        // Predicated region
        $region21: #{wav2vec2_ctc_forward.1} parent=11 // pred_check
          %p740 = pneg %p184
        $region22: #{wav2vec2_ctc_forward.1} parent=11 // pred_check_branch
          %742 = sbr.rel (%p740) target = $region24
        $region23: #{wav2vec2_ctc_forward.1} parent=11 // pred_region
          _
        $region24: #{wav2vec2_ctc_forward.1} parent=11 // pred_fallthru
          _
        // Predicated region
        $region25: #{wav2vec2_ctc_forward.1} parent=11 // pred_check
          %p743 = pneg %p205
        $region26: #{wav2vec2_ctc_forward.1} parent=11 // pred_check_branch
          %745 = sbr.rel (%p743) target = $region28
        $region27: #{wav2vec2_ctc_forward.1} parent=11 // pred_region
          _
        $region28: #{wav2vec2_ctc_forward.1} parent=11 // pred_fallthru
          _
        // Predicated region
        $region29: #{wav2vec2_ctc_forward.1} parent=11 // pred_check
          %p746 = pneg %p226
        $region30: #{wav2vec2_ctc_forward.1} parent=11 // pred_check_branch
          %748 = sbr.rel (%p746) target = $region32
        $region31: #{wav2vec2_ctc_forward.1} parent=11 // pred_region
          _
        $region32: #{wav2vec2_ctc_forward.1} parent=11 // pred_fallthru
          _
        // Predicated region
        $region33: #{wav2vec2_ctc_forward.1} parent=11 // pred_check
          %p749 = pneg %p247
        $region34: #{wav2vec2_ctc_forward.1} parent=11 // pred_check_branch
          %751 = sbr.rel (%p749) target = $region36
        $region35: #{wav2vec2_ctc_forward.1} parent=11 // pred_region
          _
        $region36: #{wav2vec2_ctc_forward.1} parent=11 // pred_fallthru
          _
        // Predicated region
        $region37: #{wav2vec2_ctc_forward.1} parent=11 // pred_check
          %p752 = pneg %p268
        $region38: #{wav2vec2_ctc_forward.1} parent=11 // pred_check_branch
          %754 = sbr.rel (%p752) target = $region40
        $region39: #{wav2vec2_ctc_forward.1} parent=11 // pred_region
          _
        $region40: #{wav2vec2_ctc_forward.1} parent=11 // pred_fallthru
          _
        // Predicated region
        $region41: #{wav2vec2_ctc_forward.1} parent=11 // pred_check
          %p755 = pneg %p289
        $region42: #{wav2vec2_ctc_forward.1} parent=11 // pred_check_branch
          %757 = sbr.rel (%p755) target = $region44
        $region43: #{wav2vec2_ctc_forward.1} parent=11 // pred_region
          _
        $region44: #{wav2vec2_ctc_forward.1} parent=11 // pred_fallthru
          _
        // Predicated region
        $region45: #{wav2vec2_ctc_forward.1} parent=11 // pred_check
          %p758 = pneg %p310
        $region46: #{wav2vec2_ctc_forward.1} parent=11 // pred_check_branch
          %760 = sbr.rel (%p758) target = $region48
        $region47: #{wav2vec2_ctc_forward.1} parent=11 // pred_region
          _
        $region48: #{wav2vec2_ctc_forward.1} parent=11 // pred_fallthru
          _
        // Predicated region
        $region49: #{wav2vec2_ctc_forward.1} parent=11 // pred_check
          %p761 = pneg %p331
        $region50: #{wav2vec2_ctc_forward.1} parent=11 // pred_check_branch
          %763 = sbr.rel (%p761) target = $region52
        $region51: #{wav2vec2_ctc_forward.1} parent=11 // pred_region
          _
        $region52: #{wav2vec2_ctc_forward.1} parent=11 // pred_fallthru
          _
        // Predicated region
        $region53: #{wav2vec2_ctc_forward.1} parent=11 // pred_check
          %p764 = pneg %p352
        $region54: #{wav2vec2_ctc_forward.1} parent=11 // pred_check_branch
          %766 = sbr.rel (%p764) target = $region56
        $region55: #{wav2vec2_ctc_forward.1} parent=11 // pred_region
          _
        $region56: #{wav2vec2_ctc_forward.1} parent=11 // pred_fallthru
          _
        // Predicated region
        $region57: #{wav2vec2_ctc_forward.1} parent=11 // pred_check
          %p767 = pneg %p373
        $region58: #{wav2vec2_ctc_forward.1} parent=11 // pred_check_branch
          %769 = sbr.rel (%p767) target = $region60
        $region59: #{wav2vec2_ctc_forward.1} parent=11 // pred_region
          _
        $region60: #{wav2vec2_ctc_forward.1} parent=11 // pred_fallthru
          _
        // Predicated region
        $region61: #{wav2vec2_ctc_forward.1} parent=11 // pred_check
          %p770 = pneg %p394
        $region62: #{wav2vec2_ctc_forward.1} parent=11 // pred_check_branch
          %772 = sbr.rel (%p770) target = $region64
        $region63: #{wav2vec2_ctc_forward.1} parent=11 // pred_region
          _
        $region64: #{wav2vec2_ctc_forward.1} parent=11 // pred_fallthru
          _
        // Predicated region
        $region65: #{wav2vec2_ctc_forward.1} parent=11 // pred_check
          %p773 = pneg %p415
        $region66: #{wav2vec2_ctc_forward.1} parent=11 // pred_check_branch
          %775 = sbr.rel (%p773) target = $region68
        $region67: #{wav2vec2_ctc_forward.1} parent=11 // pred_region
          _
        $region68: #{wav2vec2_ctc_forward.1} parent=11 // pred_fallthru
          _
        // Predicated region
        $region69: #{wav2vec2_ctc_forward.1} parent=11 // pred_check
          %p776 = pneg %p436
        $region70: #{wav2vec2_ctc_forward.1} parent=11 // pred_check_branch
          %778 = sbr.rel (%p776) target = $region72
        $region71: #{wav2vec2_ctc_forward.1} parent=11 // pred_region
          _
        $region72: #{wav2vec2_ctc_forward.1} parent=11 // pred_fallthru
          _
        // Predicated region
        $region73: #{wav2vec2_ctc_forward.1} parent=11 // pred_check
          %p779 = pneg %p457
        $region74: #{wav2vec2_ctc_forward.1} parent=11 // pred_check_branch
          %781 = sbr.rel (%p779) target = $region76
        $region75: #{wav2vec2_ctc_forward.1} parent=11 // pred_region
          _
        $region76: #{wav2vec2_ctc_forward.1} parent=11 // pred_fallthru
          _
        // Predicated region
        $region77: #{wav2vec2_ctc_forward.1} parent=11 // pred_check
          %p782 = pneg %p478
        $region78: #{wav2vec2_ctc_forward.1} parent=11 // pred_check_branch
          %784 = sbr.rel (%p782) target = $region80
        $region79: #{wav2vec2_ctc_forward.1} parent=11 // pred_region
          _
        $region80: #{wav2vec2_ctc_forward.1} parent=11 // pred_fallthru
          _
        // Predicated region
        $region81: #{wav2vec2_ctc_forward.1} parent=11 // pred_check
          %p785 = pneg %p499
        $region82: #{wav2vec2_ctc_forward.1} parent=11 // pred_check_branch
          %787 = sbr.rel (%p785) target = $region84
        $region83: #{wav2vec2_ctc_forward.1} parent=11 // pred_region
          _
        $region84: #{wav2vec2_ctc_forward.1} parent=11 // pred_fallthru
          _
        // Predicated region
        $region85: #{wav2vec2_ctc_forward.1} parent=11 // pred_check
          %p788 = pneg %p520
        $region86: #{wav2vec2_ctc_forward.1} parent=11 // pred_check_branch
          %790 = sbr.rel (%p788) target = $region88
        $region87: #{wav2vec2_ctc_forward.1} parent=11 // pred_region
          _
        $region88: #{wav2vec2_ctc_forward.1} parent=11 // pred_fallthru
          _
        // Predicated region
        $region89: #{wav2vec2_ctc_forward.1} parent=11 // pred_check
          %p791 = pneg %p541
        $region90: #{wav2vec2_ctc_forward.1} parent=11 // pred_check_branch
          %793 = sbr.rel (%p791) target = $region92
        $region91: #{wav2vec2_ctc_forward.1} parent=11 // pred_region
          _
        $region92: #{wav2vec2_ctc_forward.1} parent=11 // pred_fallthru
          _
        // Predicated region
        $region93: #{wav2vec2_ctc_forward.1} parent=11 // pred_check
          %p794 = pneg %p562
        $region94: #{wav2vec2_ctc_forward.1} parent=11 // pred_check_branch
          %796 = sbr.rel (%p794) target = $region96
        $region95: #{wav2vec2_ctc_forward.1} parent=11 // pred_region
          _
        $region96: #{wav2vec2_ctc_forward.1} parent=11 // pred_fallthru
          _
        // Predicated region
        $region97: #{wav2vec2_ctc_forward.1} parent=11 // pred_check
          %p797 = pneg %p583
        $region98: #{wav2vec2_ctc_forward.1} parent=11 // pred_check_branch
          %799 = sbr.rel (%p797) target = $region100
        $region99: #{wav2vec2_ctc_forward.1} parent=11 // pred_region
          _
        $region100: #{wav2vec2_ctc_forward.1} parent=11 // pred_fallthru
          _
        // Predicated region
        $region101: #{wav2vec2_ctc_forward.1} parent=11 // pred_check
          %p800 = pneg %p604
        $region102: #{wav2vec2_ctc_forward.1} parent=11 // pred_check_branch
          %802 = sbr.rel (%p800) target = $region104
        $region103: #{wav2vec2_ctc_forward.1} parent=11 // pred_region
          _
        $region104: #{wav2vec2_ctc_forward.1} parent=11 // pred_fallthru
          _
        // Predicated region
        $region105: #{wav2vec2_ctc_forward.1} parent=11 // pred_check
          %p803 = pneg %p625
        $region106: #{wav2vec2_ctc_forward.1} parent=11 // pred_check_branch
          %805 = sbr.rel (%p803) target = $region108
        $region107: #{wav2vec2_ctc_forward.1} parent=11 // pred_region
          _
        $region108: #{wav2vec2_ctc_forward.1} parent=11 // pred_fallthru
          _
        // Predicated region
        $region109: #{wav2vec2_ctc_forward.1} parent=11 // pred_check
          %p806 = pneg %p646
        $region110: #{wav2vec2_ctc_forward.1} parent=11 // pred_check_branch
          %808 = sbr.rel (%p806) target = $region112
        $region111: #{wav2vec2_ctc_forward.1} parent=11 // pred_region
          _
        $region112: #{wav2vec2_ctc_forward.1} parent=11 // pred_fallthru
          _
        // Predicated region
        $region113: #{wav2vec2_ctc_forward.1} parent=11 // pred_check
          %p809 = pneg %p667
        $region114: #{wav2vec2_ctc_forward.1} parent=11 // pred_check_branch
          %811 = sbr.rel (%p809) target = $region116
        $region115: #{wav2vec2_ctc_forward.1} parent=11 // pred_region
          _
        $region116: #{wav2vec2_ctc_forward.1} parent=11 // pred_fallthru
          _
      $region12: #{wav2vec2_ctc_forward.1} parent=5 // pred_fallthru
        _
      %p812 = scmp.lt.s32.totalorder %s69, 2
      // Predicated region
      $region117: #{wav2vec2_ctc_forward.1} parent=5 // pred_check
        %p813 = pneg %p812
      $region118: #{wav2vec2_ctc_forward.1} parent=5 // pred_check_branch
        %815 = sbr.rel (%p813) target = $region120
      $region119: #{wav2vec2_ctc_forward.1} parent=5 // pred_region
        // Predicated region
        $region121: #{wav2vec2_ctc_forward.1} parent=119 // pred_check
          %p816 = pneg %p89
        $region122: #{wav2vec2_ctc_forward.1} parent=119 // pred_check_branch
          %818 = sbr.rel (%p816) target = $region124
        $region123: #{wav2vec2_ctc_forward.1} parent=119 // pred_region
          %p819 = scmp.lt.s32.totalorder %s69, 1
          %s820 = scalar_select %p819, %s69, 1
          %s821 = smul.addr %s820, 3
          %s822 = scalar_lea.vmem %s1, %s821
        $region124: #{wav2vec2_ctc_forward.1} parent=119 // pred_fallthru
          _
        // Predicated region
        $region125: #{wav2vec2_ctc_forward.1} parent=119 // pred_check
          %p823 = pneg %p115
        $region126: #{wav2vec2_ctc_forward.1} parent=119 // pred_check_branch
          %825 = sbr.rel (%p823) target = $region128
        $region127: #{wav2vec2_ctc_forward.1} parent=119 // pred_region
          %p826 = scmp.lt.s32.totalorder %s69, 1
          %s827 = scalar_select %p826, %s69, 1
          %s828 = smul.addr %s827, 9
          %s829 = smul.addr %s828, 8
          %s830 = scalar_lea.vmem %s3, %s829
        $region128: #{wav2vec2_ctc_forward.1} parent=119 // pred_fallthru
          _
      $region120: #{wav2vec2_ctc_forward.1} parent=5 // pred_fallthru
        _
      %p831 = scmp.le.s32.totalorder 1, %s69
      %p832 = scmp.lt.s32.totalorder %s69, 3
      %p833 = pnand %p831, %p832
      %p834 = pneg %p833
      // Predicated region
      $region129: #{wav2vec2_ctc_forward.1} parent=5 // pred_check
        _
      $region130: #{wav2vec2_ctc_forward.1} parent=5 // pred_check_branch
        %836 = sbr.rel (%p833) target = $region132
      $region131: #{wav2vec2_ctc_forward.1} parent=5 // pred_region
        %s837 = ssub.s32 %s69, 1
        %p838 = scmp.lt.s32.totalorder %s74, 1
        %s839 = scalar_select %p838, %s74, 1
        %s840 = smul.addr %s839, 3
        %s841 = scalar_lea.vmem %s1, %s840
        %p842 = pneg %p95
        %p843 = pneg %p92
        %p844 = scmp.lt.s32.totalorder %s74, 1
        %s845 = scalar_select %p844, %s74, 1
        %s846 = smul.addr %s845, 9
        %s847 = smul.addr %s846, 8
        %s848 = scalar_lea.vmem %s3, %s847
        %p849 = pneg %p121
        %p850 = pneg %p118
        %p851 = pneg %p142
        %p852 = pneg %p139
        %p853 = pneg %p163
        %p854 = pneg %p160
        %p855 = pneg %p184
        %p856 = pneg %p181
        %p857 = pneg %p205
        %p858 = pneg %p202
        %p859 = pneg %p226
        %p860 = pneg %p223
        %p861 = pneg %p247
        %p862 = pneg %p244
        %p863 = pneg %p268
        %p864 = pneg %p265
        %p865 = pneg %p289
        %p866 = pneg %p286
        %p867 = pneg %p310
        %p868 = pneg %p307
        %p869 = pneg %p331
        %p870 = pneg %p328
        %p871 = pneg %p352
        %p872 = pneg %p349
        %p873 = pneg %p373
        %p874 = pneg %p370
        %p875 = pneg %p394
        %p876 = pneg %p391
        %p877 = pneg %p415
        %p878 = pneg %p412
        %p879 = pneg %p436
        %p880 = pneg %p433
        %p881 = pneg %p457
        %p882 = pneg %p454
        %p883 = pneg %p478
        %p884 = pneg %p475
        %p885 = pneg %p499
        %p886 = pneg %p496
        %p887 = pneg %p520
        %p888 = pneg %p517
        %p889 = pneg %p541
        %p890 = pneg %p538
        %p891 = pneg %p562
        %p892 = pneg %p559
        %p893 = pneg %p583
        %p894 = pneg %p580
        %p895 = pneg %p604
        %p896 = pneg %p601
        %p897 = pneg %p625
        %p898 = pneg %p622
        %p899 = pneg %p646
        %p900 = pneg %p643
        %p901 = pneg %p667
        %p902 = pneg %p664
        %p903 = pneg %p693
        %p904 = pneg %p690
        %s905 = sand.u32 %s680, 1
        %s906 = scalar_lea.sflag [#allocation4], %s905
        %s907 = sand.u32 %s680, 1
        %s908 = smul.addr %s907, 32
        %s909 = scalar_lea.vmem [#allocation3], %s908
        %p910 = pneg %p719
        %p911 = pneg %p716
        %p912 = scmp.lt.s32.totalorder %s74, 1
        %s913 = scalar_select %p912, %s74, 1
        %s914 = smul.addr %s913, 4
        %s915 = smul.addr %s914, 8
        %s916 = scalar_lea.vmem %s59, %s915
        %p917 = scmp.lt.s32.totalorder %s74, 1
        %s918 = scalar_select %p917, %s74, 1
        %s919 = smul.addr %s918, 3
        %s920 = scalar_lea.vmem %s1, %s919
        %p921 = scmp.lt.s32.totalorder %s74, 1
        %s922 = scalar_select %p921, %s74, 1
        %s923 = smul.addr %s922, 9
        %s924 = smul.addr %s923, 8
        %s925 = scalar_lea.vmem %s3, %s924
        %p926 = scmp.lt.s32.totalorder %s74, 1
        %s927 = scalar_select %p926, %s74, 1
        %s928 = smul.addr %s927, 4
        %s929 = smul.addr %s928, 8
        %s930 = scalar_lea.vmem %s59, %s929
        %v931 = vld [vmem:[%s920] sm:$0x7]
        %v933 = vperm.slane %v931, 0
        %v934 = vperm.slane %v931, 1
        %v935 = vperm.slane %v931, 2
        %vm939 = vcmask 1040384
        %v940 = vsel %vm939, %v933, 0.0
        %v941 = vsel %vm939, %v934, 0.0
        %v942 = vadd.f32 %v940, %v941
        %vm943 = vcmask 598016
        %v944 = vsel %vm943, %v935, 0.0
        %v945 = vadd.f32 %v942, %v944
        %946 = vadd.xlane.f32.xlu0 %v945
        %v947 = vpop.xlane.xlu0 %946
        %v948 = vrcp.pop 330.0
        %v949 = vmul.f32 330.0, %v948
        %v950 = vsub.f32 1.0, %v949
        %v951 = vmul.f32 %v948, %v950
        %v952 = vadd.f32 %v948, %v951
        %vm953 = vweird.f32 %v948
        %v954 = vsel %vm953, %v948, %v952
        %v955 = vmul.f32 %v947, %v954
        %v957 = vperm.slane %v955, 0
        %v959 = vsub.f32 %v931, %v957
        %v960 = vmul.f32 %v959, %v959
        %v962 = vperm.slane %v960, 0
        %v963 = vperm.slane %v960, 1
        %v964 = vperm.slane %v960, 2
        %v968 = vsel %vm939, %v962, 0.0
        %v969 = vsel %vm939, %v963, 0.0
        %v970 = vadd.f32 %v968, %v969
        %v971 = vsel %vm943, %v964, 0.0
        %v972 = vadd.f32 %v970, %v971
        %973 = vadd.xlane.f32.xlu0 %v972
        %v974 = vpop.xlane.xlu0 %973
        %v975 = vmul.f32 %v974, %v954
        %v976 = vadd.f32 %v975, 1e-07
        %v977 = vrsqrt.pop %v976
        %v978 = vmul.f32 %v977, %v976
        %v979 = vmul.f32 %v978, %v977
        %v980 = vmul.f32 0.5, %v979
        %v981 = vsub.f32 1.5, %v980
        %v982 = vmul.f32 %v977, %v981
        %vm983 = vweird.f32 %v976
        %vm984 = vweird.f32 %v977
        %vm985 = vmor %vm983, %vm984
        %v986 = vsel %vm985, %v977, %v982
        %v987 = vld [vmem:[%s925] sm:$0xff]
        %v988 = vld [vmem:[%s925 + $0x8] sm:$0xff]
        %v989 = vld [vmem:[%s925 + $0x10] sm:$0xff]
        %v990 = vld [vmem:[%s925 + $0x18] sm:$0xff]
        %v991 = vld [vmem:[%s925 + $0x20] sm:$0xff]
        %v992 = vld [vmem:[%s925 + $0x28] sm:$0xff]
        %v993 = vld [vmem:[%s925 + $0x30] sm:$0xff]
        %v994 = vld [vmem:[%s925 + $0x38] sm:$0xff]
        %v995 = vld [vmem:[%s925 + $0x40] sm:$0x1]
        %v996 = vperm.slane %v955, 0
        %v997 = vsub.f32 %v987, %v996
        %v998 = vsub.f32 %v988, %v996
        %v999 = vsub.f32 %v989, %v996
        %v1000 = vsub.f32 %v990, %v996
        %v1001 = vsub.f32 %v991, %v996
        %v1002 = vsub.f32 %v992, %v996
        %v1003 = vsub.f32 %v993, %v996
        %v1004 = vsub.f32 %v994, %v996
        %v1005 = vsub.f32 %v995, %v996
        %v1006 = vperm.slane %v986, 0
        %v1007 = vmul.f32 %v997, %v1006
        %v1008 = vmul.f32 %v998, %v1006
        %v1009 = vmul.f32 %v999, %v1006
        %v1010 = vmul.f32 %v1000, %v1006
        %v1011 = vmul.f32 %v1001, %v1006
        %v1012 = vmul.f32 %v1002, %v1006
        %v1013 = vmul.f32 %v1003, %v1006
        %v1014 = vmul.f32 %v1004, %v1006
        %v1015 = vmul.f32 %v1005, %v1006
        %v1016 = vld [vmem:[%s5] sm:$0xff]
        %v1017 = vld [vmem:[%s5 + $0x8] sm:$0x3]
        %vm1018 = vcmask 80896
        %v1020 = vsel %vm1018, %v1007, 0
        %v1023 = vsel %vm1018, %v1008, 0
        %v1026 = vsel %vm1018, %v1009, 0
        %v1029 = vsel %vm1018, %v1010, 0
        %v1032 = vsel %vm1018, %v1011, 0
        %v1035 = vsel %vm1018, %v1012, 0
        %v1038 = vsel %vm1018, %v1013, 0
        %v1041 = vsel %vm1018, %v1014, 0
        %v1044 = vsel %vm1018, %v1015, 0
        %vm1046 = vcmask 1041408
        %v1048 = vsel %vm1046, %v1017, 0
        %1050 = vmatpush.msra.mxu0 0.0
        %1051 = vmatpush.msra.mxu0 0.0
        %1052 = vmatpush.msra.mxu0 0.0
        %1053 = vmatpush.msra.mxu0 0.0
        %1054 = vmatpush.msra.mxu0 0.0
        %1055 = vmatpush.msra.mxu0 0.0
        %1056 = vmatpush.msra.mxu0 0.0
        %1057 = vmatpush.msra.mxu0 0.0
        %1058 = vmatpush.msra.mxu0 0.0
        %1059 = vmatpush.msra.mxu0 0.0
        %1060 = vmatpush.msra.mxu0 0.0
        %1061 = vmatpush.msra.mxu0 0.0
        %1062 = vmatpush.msra.mxu0 0.0
        %1063 = vmatpush.msra.mxu0 0.0
        %1064 = vmatpush.msra.mxu0 %v1048
        %1065 = vmatpush.msra.mxu0 %v1016
        %1066 = vmatmul.f32.gmra.mxu0 %v1020
        %v1067 = vpop.f32.mrf.mxu0
        %v1068 = vadd.f32 0.0, %v1067
        %1069 = vmatmul.f32.gmra.mxu0 %v1023
        %v1070 = vpop.f32.mrf.mxu0
        %v1071 = vadd.f32 0.0, %v1070
        %1072 = vmatmul.f32.gmra.mxu0 %v1026
        %v1073 = vpop.f32.mrf.mxu0
        %v1074 = vadd.f32 0.0, %v1073
        %1075 = vmatmul.f32.gmra.mxu0 %v1029
        %v1076 = vpop.f32.mrf.mxu0
        %v1077 = vadd.f32 0.0, %v1076
        %1078 = vmatmul.f32.gmra.mxu0 %v1032
        %v1079 = vpop.f32.mrf.mxu0
        %v1080 = vadd.f32 0.0, %v1079
        %1081 = vmatmul.f32.gmra.mxu0 %v1035
        %v1082 = vpop.f32.mrf.mxu0
        %v1083 = vadd.f32 0.0, %v1082
        %1084 = vmatmul.f32.gmra.mxu0 %v1038
        %v1085 = vpop.f32.mrf.mxu0
        %v1086 = vadd.f32 0.0, %v1085
        %1087 = vmatmul.f32.gmra.mxu0 %v1041
        %v1088 = vpop.f32.mrf.mxu0
        %v1089 = vadd.f32 0.0, %v1088
        %1090 = vmatmul.f32.gmra.mxu0 %v1044
        %v1091 = vpop.f32.mrf.mxu0
        %v1092 = vadd.f32 0.0, %v1091
        %1093 = vdwg.mxu0
        %vm1094 = vcmask 261120
        %v1095 = vsel %vm1094, %v1068, 0.0
        %v1096 = vsel %vm1094, %v1071, 0.0
        %v1097 = vadd.f32 %v1095, %v1096
        %v1098 = vsel %vm1094, %v1074, 0.0
        %v1099 = vadd.f32 %v1097, %v1098
        %v1100 = vsel %vm1094, %v1077, 0.0
        %v1101 = vadd.f32 %v1099, %v1100
        %v1102 = vsel %vm1094, %v1080, 0.0
        %v1103 = vadd.f32 %v1101, %v1102
        %v1104 = vsel %vm1094, %v1083, 0.0
        %v1105 = vadd.f32 %v1103, %v1104
        %v1106 = vsel %vm1094, %v1086, 0.0
        %v1107 = vadd.f32 %v1105, %v1106
        %v1108 = vsel %vm1094, %v1089, 0.0
        %v1109 = vadd.f32 %v1107, %v1108
        %vm1110 = vcmask 253952
        %v1111 = vsel %vm1110, %v1092, 0.0
        %v1112 = vadd.f32 %v1109, %v1111
        %v1113 = vrot.slane %v1112, 4
        %v1114 = vadd.f32 %v1112, %v1113
        %v1115 = vrot.slane %v1114, 2
        %v1116 = vadd.f32 %v1114, %v1115
        %v1117 = vrot.slane %v1116, 1
        %v1118 = vadd.f32 %v1116, %v1117
        %v1119 = vrcp.pop 65.0
        %v1120 = vmul.f32 65.0, %v1119
        %v1121 = vsub.f32 1.0, %v1120
        %v1122 = vmul.f32 %v1119, %v1121
        %v1123 = vadd.f32 %v1119, %v1122
        %vm1124 = vweird.f32 %v1119
        %v1125 = vsel %vm1124, %v1119, %v1123
        %v1126 = vmul.f32 %v1118, %v1125
        %v1127 = vsub.f32 %v1068, %v1126
        %v1128 = vsub.f32 %v1071, %v1126
        %v1129 = vsub.f32 %v1074, %v1126
        %v1130 = vsub.f32 %v1077, %v1126
        %v1131 = vsub.f32 %v1080, %v1126
        %v1132 = vsub.f32 %v1083, %v1126
        %v1133 = vsub.f32 %v1086, %v1126
        %v1134 = vsub.f32 %v1089, %v1126
        %v1135 = vsub.f32 %v1092, %v1126
        %v1136 = vmul.f32 %v1127, %v1127
        %v1137 = vmul.f32 %v1128, %v1128
        %v1138 = vmul.f32 %v1129, %v1129
        %v1139 = vmul.f32 %v1130, %v1130
        %v1140 = vmul.f32 %v1131, %v1131
        %v1141 = vmul.f32 %v1132, %v1132
        %v1142 = vmul.f32 %v1133, %v1133
        %v1143 = vmul.f32 %v1134, %v1134
        %v1144 = vmul.f32 %v1135, %v1135
        %v1145 = vsel %vm1094, %v1136, 0.0
        %v1146 = vsel %vm1094, %v1137, 0.0
        %v1147 = vadd.f32 %v1145, %v1146
        %v1148 = vsel %vm1094, %v1138, 0.0
        %v1149 = vadd.f32 %v1147, %v1148
        %v1150 = vsel %vm1094, %v1139, 0.0
        %v1151 = vadd.f32 %v1149, %v1150
        %v1152 = vsel %vm1094, %v1140, 0.0
        %v1153 = vadd.f32 %v1151, %v1152
        %v1154 = vsel %vm1094, %v1141, 0.0
        %v1155 = vadd.f32 %v1153, %v1154
        %v1156 = vsel %vm1094, %v1142, 0.0
        %v1157 = vadd.f32 %v1155, %v1156
        %v1158 = vsel %vm1094, %v1143, 0.0
        %v1159 = vadd.f32 %v1157, %v1158
        %v1160 = vsel %vm1110, %v1144, 0.0
        %v1161 = vadd.f32 %v1159, %v1160
        %v1162 = vrot.slane %v1161, 4
        %v1163 = vadd.f32 %v1161, %v1162
        %v1164 = vrot.slane %v1163, 2
        %v1165 = vadd.f32 %v1163, %v1164
        %v1166 = vrot.slane %v1165, 1
        %v1167 = vadd.f32 %v1165, %v1166
        %v1168 = vmul.f32 %v1167, %v1125
        %v1169 = vadd.f32 %v1168, 1e-05
        %v1170 = vrsqrt.pop %v1169
        %v1171 = vmul.f32 %v1170, %v1169
        %v1172 = vmul.f32 %v1171, %v1170
        %v1173 = vmul.f32 0.5, %v1172
        %v1174 = vsub.f32 1.5, %v1173
        %v1175 = vmul.f32 %v1170, %v1174
        %vm1176 = vweird.f32 %v1169
        %vm1177 = vweird.f32 %v1170
        %vm1178 = vmor %vm1176, %vm1177
        %v1179 = vsel %vm1178, %v1170, %v1175
        %v1180 = vmul.f32 %v1127, %v1179
        %v1181 = vmul.f32 %v1128, %v1179
        %v1182 = vmul.f32 %v1129, %v1179
        %v1183 = vmul.f32 %v1130, %v1179
        %v1184 = vmul.f32 %v1131, %v1179
        %v1185 = vmul.f32 %v1132, %v1179
        %v1186 = vmul.f32 %v1133, %v1179
        %v1187 = vmul.f32 %v1134, %v1179
        %v1188 = vmul.f32 %v1135, %v1179
        %v1189 = vld [vmem:[%s7] sm:$0x1]
        %v1191 = vperm.slane %v1189, 0
        %v1193 = vmul.f32 %v1180, %v1191
        %v1194 = vmul.f32 %v1181, %v1191
        %v1195 = vmul.f32 %v1182, %v1191
        %v1196 = vmul.f32 %v1183, %v1191
        %v1197 = vmul.f32 %v1184, %v1191
        %v1198 = vmul.f32 %v1185, %v1191
        %v1199 = vmul.f32 %v1186, %v1191
        %v1200 = vmul.f32 %v1187, %v1191
        %v1201 = vmul.f32 %v1188, %v1191
        %v1202 = vld [vmem:[%s9] sm:$0x1]
        %v1204 = vperm.slane %v1202, 0
        %v1206 = vadd.f32 %v1193, %v1204
        %v1207 = vadd.f32 %v1194, %v1204
        %v1208 = vadd.f32 %v1195, %v1204
        %v1209 = vadd.f32 %v1196, %v1204
        %v1210 = vadd.f32 %v1197, %v1204
        %v1211 = vadd.f32 %v1198, %v1204
        %v1212 = vadd.f32 %v1199, %v1204
        %v1213 = vadd.f32 %v1200, %v1204
        %v1214 = vadd.f32 %v1201, %v1204
        %v1215 = vmul.f32 %v1206, %v1206
        %v1216 = vmul.f32 %v1207, %v1207
        %v1217 = vmul.f32 %v1208, %v1208
        %v1218 = vmul.f32 %v1209, %v1209
        %v1219 = vmul.f32 %v1210, %v1210
        %v1220 = vmul.f32 %v1211, %v1211
        %v1221 = vmul.f32 %v1212, %v1212
        %v1222 = vmul.f32 %v1213, %v1213
        %v1223 = vmul.f32 %v1214, %v1214
        %v1224 = vmul.f32 %v1206, %v1215
        %v1225 = vmul.f32 %v1207, %v1216
        %v1226 = vmul.f32 %v1208, %v1217
        %v1227 = vmul.f32 %v1209, %v1218
        %v1228 = vmul.f32 %v1210, %v1219
        %v1229 = vmul.f32 %v1211, %v1220
        %v1230 = vmul.f32 %v1212, %v1221
        %v1231 = vmul.f32 %v1213, %v1222
        %v1232 = vmul.f32 %v1214, %v1223
        %v1233 = vmul.f32 %v1224, 0.044715
        %v1234 = vmul.f32 %v1225, 0.044715
        %v1235 = vmul.f32 %v1226, 0.044715
        %v1236 = vmul.f32 %v1227, 0.044715
        %v1237 = vmul.f32 %v1228, 0.044715
        %v1238 = vmul.f32 %v1229, 0.044715
        %v1239 = vmul.f32 %v1230, 0.044715
        %v1240 = vmul.f32 %v1231, 0.044715
        %v1241 = vmul.f32 %v1232, 0.044715
        %v1242 = vadd.f32 %v1206, %v1233
        %v1243 = vadd.f32 %v1207, %v1234
        %v1244 = vadd.f32 %v1208, %v1235
        %v1245 = vadd.f32 %v1209, %v1236
        %v1246 = vadd.f32 %v1210, %v1237
        %v1247 = vadd.f32 %v1211, %v1238
        %v1248 = vadd.f32 %v1212, %v1239
        %v1249 = vadd.f32 %v1213, %v1240
        %v1250 = vadd.f32 %v1214, %v1241
        %v1251 = vmul.f32 %v1242, 0.7978846
        %v1252 = vmul.f32 %v1243, 0.7978846
        %v1253 = vmul.f32 %v1244, 0.7978846
        %v1254 = vmul.f32 %v1245, 0.7978846
        %v1255 = vmul.f32 %v1246, 0.7978846
        %v1256 = vmul.f32 %v1247, 0.7978846
        %v1257 = vmul.f32 %v1248, 0.7978846
        %v1258 = vmul.f32 %v1249, 0.7978846
        %v1259 = vmul.f32 %v1250, 0.7978846
        %v1260 = vtanh.pop %v1251
        %v1261 = vtanh.pop %v1252
        %v1262 = vtanh.pop %v1253
        %v1263 = vtanh.pop %v1254
        %v1264 = vtanh.pop %v1255
        %v1265 = vtanh.pop %v1256
        %v1266 = vtanh.pop %v1257
        %v1267 = vtanh.pop %v1258
        %v1268 = vtanh.pop %v1259
        %v1269 = vadd.f32 %v1260, 1.0
        %v1270 = vadd.f32 %v1261, 1.0
        %v1271 = vadd.f32 %v1262, 1.0
        %v1272 = vadd.f32 %v1263, 1.0
        %v1273 = vadd.f32 %v1264, 1.0
        %v1274 = vadd.f32 %v1265, 1.0
        %v1275 = vadd.f32 %v1266, 1.0
        %v1276 = vadd.f32 %v1267, 1.0
        %v1277 = vadd.f32 %v1268, 1.0
        %v1278 = vmul.f32 %v1269, 0.5
        %v1279 = vmul.f32 %v1270, 0.5
        %v1280 = vmul.f32 %v1271, 0.5
        %v1281 = vmul.f32 %v1272, 0.5
        %v1282 = vmul.f32 %v1273, 0.5
        %v1283 = vmul.f32 %v1274, 0.5
        %v1284 = vmul.f32 %v1275, 0.5
        %v1285 = vmul.f32 %v1276, 0.5
        %v1286 = vmul.f32 %v1277, 0.5
        %v1287 = vmul.f32 %v1206, %v1278
        %v1288 = vmul.f32 %v1207, %v1279
        %v1289 = vmul.f32 %v1208, %v1280
        %v1290 = vmul.f32 %v1209, %v1281
        %v1291 = vmul.f32 %v1210, %v1282
        %v1292 = vmul.f32 %v1211, %v1283
        %v1293 = vmul.f32 %v1212, %v1284
        %v1294 = vmul.f32 %v1213, %v1285
        %v1295 = vmul.f32 %v1214, %v1286
        %1296 = vst.msk [vmem:[#allocation2] sm:$0xff] %vm1094, %v1287
        %1297 = vst.msk [vmem:[#allocation2 + $0x8] sm:$0xff] %vm1094, %v1288
        %1298 = vst.msk [vmem:[#allocation2 + $0x10] sm:$0xff] %vm1094, %v1289
        %1299 = vst.msk [vmem:[#allocation2 + $0x18] sm:$0xff] %vm1094, %v1290
        %1300 = vst.msk [vmem:[#allocation2 + $0x20] sm:$0xff] %vm1094, %v1291
        %1301 = vst.msk [vmem:[#allocation2 + $0x28] sm:$0xff] %vm1094, %v1292
        %1302 = vst.msk [vmem:[#allocation2 + $0x30] sm:$0xff] %vm1094, %v1293
        %1303 = vst.msk [vmem:[#allocation2 + $0x38] sm:$0xff] %vm1094, %v1294
        %1304 = vst.msk [vmem:[#allocation2 + $0x40] sm:$0x1] %vm1110, %v1295
        %v1305 = vld [vmem:[#allocation2] ss:$2 sm:$0xff]
        %s1306 = scalar_lea.vmem [#allocation2], 16
        %v1307 = vld [vmem:[%s1306] ss:$2 sm:$0xff]
        %s1308 = scalar_lea.vmem [#allocation2], 32
        %v1309 = vld [vmem:[%s1308] ss:$2 sm:$0xff]
        %s1310 = scalar_lea.vmem [#allocation2], 48
        %v1311 = vld [vmem:[%s1310] ss:$2 sm:$0xff]
        %s1312 = scalar_lea.vmem [#allocation2], 1
        %v1313 = vld [vmem:[%s1312] ss:$2 sm:$0xff]
        %s1314 = scalar_lea.vmem [#allocation2], 17
        %v1315 = vld [vmem:[%s1314] ss:$2 sm:$0xff]
        %s1316 = scalar_lea.vmem [#allocation2], 33
        %v1317 = vld [vmem:[%s1316] ss:$2 sm:$0xff]
        %s1318 = scalar_lea.vmem [#allocation2], 49
        %v1319 = vld [vmem:[%s1318] ss:$2 sm:$0xff]
        %s1320 = scalar_lea.vmem [#allocation2], 2
        %v1321 = vld [vmem:[%s1320] ss:$2 sm:$0xff]
        %s1322 = scalar_lea.vmem [#allocation2], 18
        %v1323 = vld [vmem:[%s1322] ss:$2 sm:$0xff]
        %s1324 = scalar_lea.vmem [#allocation2], 34
        %v1325 = vld [vmem:[%s1324] ss:$2 sm:$0xff]
        %s1326 = scalar_lea.vmem [#allocation2], 50
        %v1327 = vld [vmem:[%s1326] ss:$2 sm:$0xff]
        %1332 = vrot.lane.b32.xlu0 %v1313, 32
        %v1333 = vpop.permute.xlu0 %1332
        %1334 = vrot.lane.b32.xlu0 %v1315, 32
        %v1335 = vpop.permute.xlu0 %1334
        %1336 = vrot.lane.b32.xlu0 %v1317, 32
        %v1337 = vpop.permute.xlu0 %1336
        %1338 = vrot.lane.b32.xlu0 %v1319, 32
        %v1339 = vpop.permute.xlu0 %1338
        %1348 = vrot.lane.b32.xlu0 %v1321, 64
        %v1349 = vpop.permute.xlu0 %1348
        %1350 = vrot.lane.b32.xlu0 %v1323, 64
        %v1351 = vpop.permute.xlu0 %1350
        %1352 = vrot.lane.b32.xlu0 %v1325, 64
        %v1353 = vpop.permute.xlu0 %1352
        %1354 = vrot.lane.b32.xlu0 %v1327, 64
        %v1355 = vpop.permute.xlu0 %1354
        %v1360 = vsel %vm1094, %v1305, %v1333
        %v1361 = vsel %vm1094, %v1307, %v1335
        %v1362 = vsel %vm1094, %v1309, %v1337
        %v1363 = vsel %vm1094, %v1311, %v1339
        %vm1364 = vcmask 523264
        %v1365 = vsel %vm1364, %v1360, %v1349
        %v1366 = vsel %vm1364, %v1361, %v1351
        %v1367 = vsel %vm1364, %v1362, %v1353
        %v1368 = vsel %vm1364, %v1363, %v1355
        %v1369 = vld [vmem:[%s11] sm:$0xff]
        %v1370 = vld [vmem:[%s11 + $0x8] sm:$0xff]
        %v1371 = vld [vmem:[%s11 + $0x10] sm:$0xff]
        %v1372 = vld [vmem:[%s11 + $0x18] sm:$0xff]
        %v1373 = vld [vmem:[%s11 + $0x20] sm:$0xff]
        %v1374 = vld [vmem:[%s11 + $0x28] sm:$0xff]
        %v1375 = vld [vmem:[%s11 + $0x30] sm:$0xff]
        %v1376 = vld [vmem:[%s11 + $0x38] sm:$0xff]
        %v1377 = vld [vmem:[%s11 + $0x40] sm:$0xff]
        %v1378 = vld [vmem:[%s11 + $0x48] sm:$0xff]
        %v1379 = vld [vmem:[%s11 + $0x50] sm:$0xff]
        %v1380 = vld [vmem:[%s11 + $0x58] sm:$0xff]
        %vm1381 = vcmask 785408
        %v1383 = vsel %vm1381, %v1365, 0
        %v1386 = vsel %vm1381, %v1366, 0
        %v1389 = vsel %vm1381, %v1367, 0
        %v1392 = vsel %vm1381, %v1368, 0
        %1394 = vmatpush.msra.mxu0 0.0
        %1395 = vmatpush.msra.mxu0 0.0
        %1396 = vmatpush.msra.mxu0 0.0
        %1397 = vmatpush.msra.mxu0 0.0
        %1398 = vmatpush.msra.mxu0 %v1380
        %1399 = vmatpush.msra.mxu0 %v1379
        %1400 = vmatpush.msra.mxu0 %v1378
        %1401 = vmatpush.msra.mxu0 %v1377
        %1402 = vmatpush.msra.mxu0 %v1376
        %1403 = vmatpush.msra.mxu0 %v1375
        %1404 = vmatpush.msra.mxu0 %v1374
        %1405 = vmatpush.msra.mxu0 %v1373
        %1406 = vmatpush.msra.mxu0 %v1372
        %1407 = vmatpush.msra.mxu0 %v1371
        %1408 = vmatpush.msra.mxu0 %v1370
        %1409 = vmatpush.msra.mxu0 %v1369
        %1410 = vmatmul.f32.gmra.mxu0 %v1383
        %v1411 = vpop.f32.mrf.mxu0
        %v1412 = vadd.f32 0.0, %v1411
        %1413 = vmatmul.f32.gmra.mxu0 %v1386
        %v1414 = vpop.f32.mrf.mxu0
        %v1415 = vadd.f32 0.0, %v1414
        %1416 = vmatmul.f32.gmra.mxu0 %v1389
        %v1417 = vpop.f32.mrf.mxu0
        %v1418 = vadd.f32 0.0, %v1417
        %1419 = vmatmul.f32.gmra.mxu0 %v1392
        %v1420 = vpop.f32.mrf.mxu0
        %v1421 = vadd.f32 0.0, %v1420
        %1422 = vdwg.mxu0
        %v1423 = vmul.f32 %v1412, %v1412
        %v1424 = vmul.f32 %v1415, %v1415
        %v1425 = vmul.f32 %v1418, %v1418
        %v1426 = vmul.f32 %v1421, %v1421
        %v1427 = vmul.f32 %v1412, %v1423
        %v1428 = vmul.f32 %v1415, %v1424
        %v1429 = vmul.f32 %v1418, %v1425
        %v1430 = vmul.f32 %v1421, %v1426
        %v1431 = vmul.f32 %v1427, 0.044715
        %v1432 = vmul.f32 %v1428, 0.044715
        %v1433 = vmul.f32 %v1429, 0.044715
        %v1434 = vmul.f32 %v1430, 0.044715
        %v1435 = vadd.f32 %v1412, %v1431
        %v1436 = vadd.f32 %v1415, %v1432
        %v1437 = vadd.f32 %v1418, %v1433
        %v1438 = vadd.f32 %v1421, %v1434
        %v1439 = vmul.f32 %v1435, 0.7978846
        %v1440 = vmul.f32 %v1436, 0.7978846
        %v1441 = vmul.f32 %v1437, 0.7978846
        %v1442 = vmul.f32 %v1438, 0.7978846
        %v1443 = vtanh.pop %v1439
        %v1444 = vtanh.pop %v1440
        %v1445 = vtanh.pop %v1441
        %v1446 = vtanh.pop %v1442
        %v1447 = vadd.f32 %v1443, 1.0
        %v1448 = vadd.f32 %v1444, 1.0
        %v1449 = vadd.f32 %v1445, 1.0
        %v1450 = vadd.f32 %v1446, 1.0
        %v1451 = vmul.f32 %v1447, 0.5
        %v1452 = vmul.f32 %v1448, 0.5
        %v1453 = vmul.f32 %v1449, 0.5
        %v1454 = vmul.f32 %v1450, 0.5
        %v1455 = vmul.f32 %v1412, %v1451
        %v1456 = vmul.f32 %v1415, %v1452
        %v1457 = vmul.f32 %v1418, %v1453
        %v1458 = vmul.f32 %v1421, %v1454
        %v1459 = vld [vmem:[%s13] sm:$0x1]
        %v1460 = vld [vmem:[%s15] sm:$0x1]
        %v1461 = vsel %vm1094, %v1455, 0.0
        %1462 = vadd.xlane.f32.xlu0 %v1461
        %v1463 = vpop.xlane.xlu0 %1462
        %v1464 = vsel %vm1094, %v1456, 0.0
        %1465 = vadd.xlane.f32.xlu0 %v1464
        %v1466 = vpop.xlane.xlu0 %1465
        %v1467 = vsel %vm1094, %v1457, 0.0
        %1468 = vadd.xlane.f32.xlu0 %v1467
        %v1469 = vpop.xlane.xlu0 %1468
        %v1470 = vsel %vm1094, %v1458, 0.0
        %1471 = vadd.xlane.f32.xlu0 %v1470
        %v1472 = vpop.xlane.xlu0 %1471
        %v1473 = vrcp.pop 32.0
        %v1474 = vmul.f32 32.0, %v1473
        %v1475 = vsub.f32 1.0, %v1474
        %v1476 = vmul.f32 %v1473, %v1475
        %v1477 = vadd.f32 %v1473, %v1476
        %vm1478 = vweird.f32 %v1473
        %v1479 = vsel %vm1478, %v1473, %v1477
        %v1480 = vmul.f32 %v1463, %v1479
        %v1481 = vmul.f32 %v1466, %v1479
        %v1482 = vmul.f32 %v1469, %v1479
        %v1483 = vmul.f32 %v1472, %v1479
        %v1484 = vsub.f32 %v1455, %v1480
        %v1485 = vsub.f32 %v1456, %v1481
        %v1486 = vsub.f32 %v1457, %v1482
        %v1487 = vsub.f32 %v1458, %v1483
        %v1488 = vmul.f32 %v1484, %v1484
        %v1489 = vmul.f32 %v1485, %v1485
        %v1490 = vmul.f32 %v1486, %v1486
        %v1491 = vmul.f32 %v1487, %v1487
        %v1492 = vsel %vm1094, %v1488, 0.0
        %1493 = vadd.xlane.f32.xlu0 %v1492
        %v1494 = vpop.xlane.xlu0 %1493
        %v1495 = vsel %vm1094, %v1489, 0.0
        %1496 = vadd.xlane.f32.xlu0 %v1495
        %v1497 = vpop.xlane.xlu0 %1496
        %v1498 = vsel %vm1094, %v1490, 0.0
        %1499 = vadd.xlane.f32.xlu0 %v1498
        %v1500 = vpop.xlane.xlu0 %1499
        %v1501 = vsel %vm1094, %v1491, 0.0
        %1502 = vadd.xlane.f32.xlu0 %v1501
        %v1503 = vpop.xlane.xlu0 %1502
        %v1504 = vmul.f32 %v1494, %v1479
        %v1505 = vmul.f32 %v1497, %v1479
        %v1506 = vmul.f32 %v1500, %v1479
        %v1507 = vmul.f32 %v1503, %v1479
        %v1508 = vadd.f32 %v1504, 1e-05
        %v1509 = vadd.f32 %v1505, 1e-05
        %v1510 = vadd.f32 %v1506, 1e-05
        %v1511 = vadd.f32 %v1507, 1e-05
        %v1512 = vrsqrt.pop %v1508
        %v1513 = vmul.f32 %v1512, %v1508
        %v1514 = vmul.f32 %v1513, %v1512
        %v1515 = vmul.f32 0.5, %v1514
        %v1516 = vsub.f32 1.5, %v1515
        %v1517 = vmul.f32 %v1512, %v1516
        %vm1518 = vweird.f32 %v1508
        %vm1519 = vweird.f32 %v1512
        %vm1520 = vmor %vm1518, %vm1519
        %v1521 = vsel %vm1520, %v1512, %v1517
        %v1522 = vrsqrt.pop %v1509
        %v1523 = vmul.f32 %v1522, %v1509
        %v1524 = vmul.f32 %v1523, %v1522
        %v1525 = vmul.f32 0.5, %v1524
        %v1526 = vsub.f32 1.5, %v1525
        %v1527 = vmul.f32 %v1522, %v1526
        %vm1528 = vweird.f32 %v1509
        %vm1529 = vweird.f32 %v1522
        %vm1530 = vmor %vm1528, %vm1529
        %v1531 = vsel %vm1530, %v1522, %v1527
        %v1532 = vrsqrt.pop %v1510
        %v1533 = vmul.f32 %v1532, %v1510
        %v1534 = vmul.f32 %v1533, %v1532
        %v1535 = vmul.f32 0.5, %v1534
        %v1536 = vsub.f32 1.5, %v1535
        %v1537 = vmul.f32 %v1532, %v1536
        %vm1538 = vweird.f32 %v1510
        %vm1539 = vweird.f32 %v1532
        %vm1540 = vmor %vm1538, %vm1539
        %v1541 = vsel %vm1540, %v1532, %v1537
        %v1542 = vrsqrt.pop %v1511
        %v1543 = vmul.f32 %v1542, %v1511
        %v1544 = vmul.f32 %v1543, %v1542
        %v1545 = vmul.f32 0.5, %v1544
        %v1546 = vsub.f32 1.5, %v1545
        %v1547 = vmul.f32 %v1542, %v1546
        %vm1548 = vweird.f32 %v1511
        %vm1549 = vweird.f32 %v1542
        %vm1550 = vmor %vm1548, %vm1549
        %v1551 = vsel %vm1550, %v1542, %v1547
        %v1552 = vmul.f32 %v1484, %v1521
        %v1553 = vmul.f32 %v1485, %v1531
        %v1554 = vmul.f32 %v1486, %v1541
        %v1555 = vmul.f32 %v1487, %v1551
        %v1557 = vperm.slane %v1459, 0
        %v1559 = vmul.f32 %v1552, %v1557
        %v1560 = vmul.f32 %v1553, %v1557
        %v1561 = vmul.f32 %v1554, %v1557
        %v1562 = vmul.f32 %v1555, %v1557
        %v1564 = vperm.slane %v1460, 0
        %v1566 = vadd.f32 %v1559, %v1564
        %v1567 = vadd.f32 %v1560, %v1564
        %v1568 = vadd.f32 %v1561, %v1564
        %v1569 = vadd.f32 %v1562, %v1564
        %v1570 = vld [vmem:[%s17] sm:$0xff]
        %v1571 = vld [vmem:[%s17 + $0x8] sm:$0xff]
        %v1572 = vld [vmem:[%s17 + $0x10] sm:$0xff]
        %v1573 = vld [vmem:[%s17 + $0x18] sm:$0xff]
        %v1574 = vld [vmem:[%s19] sm:$0x1]
        %v1576 = vperm.slane %v1574, 0
        %v1579 = vsel %vm1094, %v1566, 0
        %v1582 = vsel %vm1094, %v1567, 0
        %v1585 = vsel %vm1094, %v1568, 0
        %v1588 = vsel %vm1094, %v1569, 0
        %1590 = vmatpush.msra.mxu0 0.0
        %1591 = vmatpush.msra.mxu0 0.0
        %1592 = vmatpush.msra.mxu0 0.0
        %1593 = vmatpush.msra.mxu0 0.0
        %1594 = vmatpush.msra.mxu0 0.0
        %1595 = vmatpush.msra.mxu0 0.0
        %1596 = vmatpush.msra.mxu0 0.0
        %1597 = vmatpush.msra.mxu0 0.0
        %1598 = vmatpush.msra.mxu0 0.0
        %1599 = vmatpush.msra.mxu0 0.0
        %1600 = vmatpush.msra.mxu0 0.0
        %1601 = vmatpush.msra.mxu0 0.0
        %1602 = vmatpush.msra.mxu0 %v1573
        %1603 = vmatpush.msra.mxu0 %v1572
        %1604 = vmatpush.msra.mxu0 %v1571
        %1605 = vmatpush.msra.mxu0 %v1570
        %1606 = vmatmul.f32.gmra.mxu0 %v1579
        %v1607 = vpop.f32.mrf.mxu0
        %v1608 = vadd.f32 %v1576, %v1607
        %1609 = vmatmul.f32.gmra.mxu0 %v1582
        %v1610 = vpop.f32.mrf.mxu0
        %v1611 = vadd.f32 %v1576, %v1610
        %1612 = vmatmul.f32.gmra.mxu0 %v1585
        %v1613 = vpop.f32.mrf.mxu0
        %v1614 = vadd.f32 %v1576, %v1613
        %1615 = vmatmul.f32.gmra.mxu0 %v1588
        %v1616 = vpop.f32.mrf.mxu0
        %v1617 = vadd.f32 %v1576, %v1616
        %1618 = vdwg.mxu0
        %v1619 = vlaneseq
        %v1620 = vshrl.u32 %v1619, 7
        %v1621 = vadd.s32 %v1620, 8
        %v1622 = vadd.s32 %v1620, 16
        %v1623 = vadd.s32 %v1620, 24
        %vm1624 = vcmp.eq.s32.totalorder %v1620, 0
        %vm1625 = vcmp.eq.s32.totalorder %v1621, 0
        %vm1626 = vcmp.eq.s32.totalorder %v1622, 0
        %vm1627 = vcmp.eq.s32.totalorder %v1623, 0
        %v1628 = vrot.slane %v1608, 7
        %v1629 = vrot.slane %v1611, 7
        %v1630 = vrot.slane %v1614, 7
        %v1631 = vrot.slane %v1617, 7
        %vm1632 = vcmp.lt.s32.totalorder %v1620, 1
        %v1633 = vsel %vm1632, %v1630, %v1631
        %v1634 = vsel %vm1632, %v1629, %v1630
        %v1635 = vsel %vm1632, %v1628, %v1629
        %v1636 = vsel %vm1632, %v1631, %v1628
        %v1637 = vsel %vm1624, 0.0, %v1636
        %v1638 = vsel %vm1625, 0.0, %v1635
        %v1639 = vsel %vm1626, 0.0, %v1634
        %v1640 = vsel %vm1627, 0.0, %v1633
        %vm1641 = vcmp.eq.s32.totalorder %v1620, 31
        %vm1642 = vcmp.eq.s32.totalorder %v1621, 31
        %vm1643 = vcmp.eq.s32.totalorder %v1622, 31
        %vm1644 = vcmp.eq.s32.totalorder %v1623, 31
        %v1645 = vrot.slane %v1608, 1
        %v1646 = vrot.slane %v1611, 1
        %v1647 = vrot.slane %v1614, 1
        %v1648 = vrot.slane %v1617, 1
        %vm1649 = vcmp.lt.s32.totalorder %v1620, 7
        %v1650 = vsel %vm1649, %v1647, %v1648
        %v1651 = vsel %vm1649, %v1646, %v1647
        %v1652 = vsel %vm1649, %v1645, %v1646
        %v1653 = vsel %vm1649, %v1648, %v1645
        %v1654 = vsel %vm1641, 0.0, %v1652
        %v1655 = vsel %vm1642, 0.0, %v1651
        %v1656 = vsel %vm1643, 0.0, %v1650
        %v1657 = vsel %vm1644, 0.0, %v1653
        %1662 = vrot.lane.b32.xlu0 %v1608, 32
        %v1663 = vpop.permute.xlu0 %1662
        %1664 = vrot.lane.b32.xlu0 %v1611, 32
        %v1665 = vpop.permute.xlu0 %1664
        %1666 = vrot.lane.b32.xlu0 %v1614, 32
        %v1667 = vpop.permute.xlu0 %1666
        %1668 = vrot.lane.b32.xlu0 %v1617, 32
        %v1669 = vpop.permute.xlu0 %1668
        %1678 = vrot.lane.b32.xlu0 %v1654, 64
        %v1679 = vpop.permute.xlu0 %1678
        %1680 = vrot.lane.b32.xlu0 %v1655, 64
        %v1681 = vpop.permute.xlu0 %1680
        %1682 = vrot.lane.b32.xlu0 %v1656, 64
        %v1683 = vpop.permute.xlu0 %1682
        %1684 = vrot.lane.b32.xlu0 %v1657, 64
        %v1685 = vpop.permute.xlu0 %1684
        %v1690 = vsel %vm1094, %v1637, %v1663
        %v1691 = vsel %vm1094, %v1638, %v1665
        %v1692 = vsel %vm1094, %v1639, %v1667
        %v1693 = vsel %vm1094, %v1640, %v1669
        %v1694 = vsel %vm1364, %v1690, %v1679
        %v1695 = vsel %vm1364, %v1691, %v1681
        %v1696 = vsel %vm1364, %v1692, %v1683
        %v1697 = vsel %vm1364, %v1693, %v1685
        %v1698 = vld [vmem:[%s21] sm:$0xff]
        %v1699 = vld [vmem:[%s21 + $0x8] sm:$0xff]
        %v1700 = vld [vmem:[%s21 + $0x10] sm:$0xff]
        %v1701 = vld [vmem:[%s21 + $0x18] sm:$0xff]
        %v1702 = vld [vmem:[%s21 + $0x20] sm:$0xff]
        %v1703 = vld [vmem:[%s21 + $0x28] sm:$0xff]
        %v1704 = vld [vmem:[%s21 + $0x30] sm:$0xff]
        %v1705 = vld [vmem:[%s21 + $0x38] sm:$0xff]
        %v1706 = vld [vmem:[%s21 + $0x40] sm:$0xff]
        %v1707 = vld [vmem:[%s21 + $0x48] sm:$0xff]
        %v1708 = vld [vmem:[%s21 + $0x50] sm:$0xff]
        %v1709 = vld [vmem:[%s21 + $0x58] sm:$0xff]
        %v1710 = vld [vmem:[%s23] sm:$0x1]
        %v1712 = vperm.slane %v1710, 0
        %v1715 = vsel %vm1381, %v1694, 0
        %v1718 = vsel %vm1381, %v1695, 0
        %v1721 = vsel %vm1381, %v1696, 0
        %v1724 = vsel %vm1381, %v1697, 0
        %1726 = vmatpush.msra.mxu0 0.0
        %1727 = vmatpush.msra.mxu0 0.0
        %1728 = vmatpush.msra.mxu0 0.0
        %1729 = vmatpush.msra.mxu0 0.0
        %1730 = vmatpush.msra.mxu0 %v1709
        %1731 = vmatpush.msra.mxu0 %v1708
        %1732 = vmatpush.msra.mxu0 %v1707
        %1733 = vmatpush.msra.mxu0 %v1706
        %1734 = vmatpush.msra.mxu0 %v1705
        %1735 = vmatpush.msra.mxu0 %v1704
        %1736 = vmatpush.msra.mxu0 %v1703
        %1737 = vmatpush.msra.mxu0 %v1702
        %1738 = vmatpush.msra.mxu0 %v1701
        %1739 = vmatpush.msra.mxu0 %v1700
        %1740 = vmatpush.msra.mxu0 %v1699
        %1741 = vmatpush.msra.mxu0 %v1698
        %1742 = vmatmul.f32.gmra.mxu0 %v1715
        %v1743 = vpop.f32.mrf.mxu0
        %v1744 = vadd.f32 %v1712, %v1743
        %1745 = vmatmul.f32.gmra.mxu0 %v1718
        %v1746 = vpop.f32.mrf.mxu0
        %v1747 = vadd.f32 %v1712, %v1746
        %1748 = vmatmul.f32.gmra.mxu0 %v1721
        %v1749 = vpop.f32.mrf.mxu0
        %v1750 = vadd.f32 %v1712, %v1749
        %1751 = vmatmul.f32.gmra.mxu0 %v1724
        %v1752 = vpop.f32.mrf.mxu0
        %v1753 = vadd.f32 %v1712, %v1752
        %1754 = vdwg.mxu0
        %v1755 = vmul.f32 %v1744, %v1744
        %v1756 = vmul.f32 %v1747, %v1747
        %v1757 = vmul.f32 %v1750, %v1750
        %v1758 = vmul.f32 %v1753, %v1753
        %v1759 = vmul.f32 %v1744, %v1755
        %v1760 = vmul.f32 %v1747, %v1756
        %v1761 = vmul.f32 %v1750, %v1757
        %v1762 = vmul.f32 %v1753, %v1758
        %v1763 = vmul.f32 %v1759, 0.044715
        %v1764 = vmul.f32 %v1760, 0.044715
        %v1765 = vmul.f32 %v1761, 0.044715
        %v1766 = vmul.f32 %v1762, 0.044715
        %v1767 = vadd.f32 %v1744, %v1763
        %v1768 = vadd.f32 %v1747, %v1764
        %v1769 = vadd.f32 %v1750, %v1765
        %v1770 = vadd.f32 %v1753, %v1766
        %v1771 = vmul.f32 %v1767, 0.7978846
        %v1772 = vmul.f32 %v1768, 0.7978846
        %v1773 = vmul.f32 %v1769, 0.7978846
        %v1774 = vmul.f32 %v1770, 0.7978846
        %v1775 = vtanh.pop %v1771
        %v1776 = vtanh.pop %v1772
        %v1777 = vtanh.pop %v1773
        %v1778 = vtanh.pop %v1774
        %v1779 = vadd.f32 %v1775, 1.0
        %v1780 = vadd.f32 %v1776, 1.0
        %v1781 = vadd.f32 %v1777, 1.0
        %v1782 = vadd.f32 %v1778, 1.0
        %v1783 = vmul.f32 %v1779, 0.5
        %v1784 = vmul.f32 %v1780, 0.5
        %v1785 = vmul.f32 %v1781, 0.5
        %v1786 = vmul.f32 %v1782, 0.5
        %v1787 = vmul.f32 %v1744, %v1783
        %v1788 = vmul.f32 %v1747, %v1784
        %v1789 = vmul.f32 %v1750, %v1785
        %v1790 = vmul.f32 %v1753, %v1786
        %v1791 = vadd.f32 %v1608, %v1787
        %v1792 = vadd.f32 %v1611, %v1788
        %v1793 = vadd.f32 %v1614, %v1789
        %v1794 = vadd.f32 %v1617, %v1790
        %v1795 = vld [vmem:[%s25] sm:$0x1]
        %v1796 = vld [vmem:[%s27] sm:$0x1]
        %v1797 = vsel %vm1094, %v1791, 0.0
        %1798 = vadd.xlane.f32.xlu0 %v1797
        %v1799 = vpop.xlane.xlu0 %1798
        %v1800 = vsel %vm1094, %v1792, 0.0
        %1801 = vadd.xlane.f32.xlu0 %v1800
        %v1802 = vpop.xlane.xlu0 %1801
        %v1803 = vsel %vm1094, %v1793, 0.0
        %1804 = vadd.xlane.f32.xlu0 %v1803
        %v1805 = vpop.xlane.xlu0 %1804
        %v1806 = vsel %vm1094, %v1794, 0.0
        %1807 = vadd.xlane.f32.xlu0 %v1806
        %v1808 = vpop.xlane.xlu0 %1807
        %v1809 = vmul.f32 %v1799, %v1479
        %v1810 = vmul.f32 %v1802, %v1479
        %v1811 = vmul.f32 %v1805, %v1479
        %v1812 = vmul.f32 %v1808, %v1479
        %v1813 = vsub.f32 %v1791, %v1809
        %v1814 = vsub.f32 %v1792, %v1810
        %v1815 = vsub.f32 %v1793, %v1811
        %v1816 = vsub.f32 %v1794, %v1812
        %v1817 = vmul.f32 %v1813, %v1813
        %v1818 = vmul.f32 %v1814, %v1814
        %v1819 = vmul.f32 %v1815, %v1815
        %v1820 = vmul.f32 %v1816, %v1816
        %v1821 = vsel %vm1094, %v1817, 0.0
        %1822 = vadd.xlane.f32.xlu0 %v1821
        %v1823 = vpop.xlane.xlu0 %1822
        %v1824 = vsel %vm1094, %v1818, 0.0
        %1825 = vadd.xlane.f32.xlu0 %v1824
        %v1826 = vpop.xlane.xlu0 %1825
        %v1827 = vsel %vm1094, %v1819, 0.0
        %1828 = vadd.xlane.f32.xlu0 %v1827
        %v1829 = vpop.xlane.xlu0 %1828
        %v1830 = vsel %vm1094, %v1820, 0.0
        %1831 = vadd.xlane.f32.xlu0 %v1830
        %v1832 = vpop.xlane.xlu0 %1831
        %v1833 = vmul.f32 %v1823, %v1479
        %v1834 = vmul.f32 %v1826, %v1479
        %v1835 = vmul.f32 %v1829, %v1479
        %v1836 = vmul.f32 %v1832, %v1479
        %v1837 = vadd.f32 %v1833, 1e-05
        %v1838 = vadd.f32 %v1834, 1e-05
        %v1839 = vadd.f32 %v1835, 1e-05
        %v1840 = vadd.f32 %v1836, 1e-05
        %v1841 = vrsqrt.pop %v1837
        %v1842 = vmul.f32 %v1841, %v1837
        %v1843 = vmul.f32 %v1842, %v1841
        %v1844 = vmul.f32 0.5, %v1843
        %v1845 = vsub.f32 1.5, %v1844
        %v1846 = vmul.f32 %v1841, %v1845
        %vm1847 = vweird.f32 %v1837
        %vm1848 = vweird.f32 %v1841
        %vm1849 = vmor %vm1847, %vm1848
        %v1850 = vsel %vm1849, %v1841, %v1846
        %v1851 = vrsqrt.pop %v1838
        %v1852 = vmul.f32 %v1851, %v1838
        %v1853 = vmul.f32 %v1852, %v1851
        %v1854 = vmul.f32 0.5, %v1853
        %v1855 = vsub.f32 1.5, %v1854
        %v1856 = vmul.f32 %v1851, %v1855
        %vm1857 = vweird.f32 %v1838
        %vm1858 = vweird.f32 %v1851
        %vm1859 = vmor %vm1857, %vm1858
        %v1860 = vsel %vm1859, %v1851, %v1856
        %v1861 = vrsqrt.pop %v1839
        %v1862 = vmul.f32 %v1861, %v1839
        %v1863 = vmul.f32 %v1862, %v1861
        %v1864 = vmul.f32 0.5, %v1863
        %v1865 = vsub.f32 1.5, %v1864
        %v1866 = vmul.f32 %v1861, %v1865
        %vm1867 = vweird.f32 %v1839
        %vm1868 = vweird.f32 %v1861
        %vm1869 = vmor %vm1867, %vm1868
        %v1870 = vsel %vm1869, %v1861, %v1866
        %v1871 = vrsqrt.pop %v1840
        %v1872 = vmul.f32 %v1871, %v1840
        %v1873 = vmul.f32 %v1872, %v1871
        %v1874 = vmul.f32 0.5, %v1873
        %v1875 = vsub.f32 1.5, %v1874
        %v1876 = vmul.f32 %v1871, %v1875
        %vm1877 = vweird.f32 %v1840
        %vm1878 = vweird.f32 %v1871
        %vm1879 = vmor %vm1877, %vm1878
        %v1880 = vsel %vm1879, %v1871, %v1876
        %v1881 = vmul.f32 %v1813, %v1850
        %v1882 = vmul.f32 %v1814, %v1860
        %v1883 = vmul.f32 %v1815, %v1870
        %v1884 = vmul.f32 %v1816, %v1880
        %v1886 = vperm.slane %v1795, 0
        %v1888 = vmul.f32 %v1881, %v1886
        %v1889 = vmul.f32 %v1882, %v1886
        %v1890 = vmul.f32 %v1883, %v1886
        %v1891 = vmul.f32 %v1884, %v1886
        %v1893 = vperm.slane %v1796, 0
        %v1895 = vadd.f32 %v1888, %v1893
        %v1896 = vadd.f32 %v1889, %v1893
        %v1897 = vadd.f32 %v1890, %v1893
        %v1898 = vadd.f32 %v1891, %v1893
        %v1899 = vld [vmem:[%s29] sm:$0xff]
        %v1900 = vld [vmem:[%s29 + $0x8] sm:$0xff]
        %v1901 = vld [vmem:[%s29 + $0x10] sm:$0xff]
        %v1902 = vld [vmem:[%s29 + $0x18] sm:$0xff]
        %v1903 = vld [vmem:[%s31] sm:$0x1]
        %v1905 = vperm.slane %v1903, 0
        %v1908 = vsel %vm1094, %v1895, 0
        %v1911 = vsel %vm1094, %v1896, 0
        %v1914 = vsel %vm1094, %v1897, 0
        %v1917 = vsel %vm1094, %v1898, 0
        %1919 = vmatpush.msra.mxu0 0.0
        %1920 = vmatpush.msra.mxu0 0.0
        %1921 = vmatpush.msra.mxu0 0.0
        %1922 = vmatpush.msra.mxu0 0.0
        %1923 = vmatpush.msra.mxu0 0.0
        %1924 = vmatpush.msra.mxu0 0.0
        %1925 = vmatpush.msra.mxu0 0.0
        %1926 = vmatpush.msra.mxu0 0.0
        %1927 = vmatpush.msra.mxu0 0.0
        %1928 = vmatpush.msra.mxu0 0.0
        %1929 = vmatpush.msra.mxu0 0.0
        %1930 = vmatpush.msra.mxu0 0.0
        %1931 = vmatpush.msra.mxu0 %v1902
        %1932 = vmatpush.msra.mxu0 %v1901
        %1933 = vmatpush.msra.mxu0 %v1900
        %1934 = vmatpush.msra.mxu0 %v1899
        %1935 = vmatmul.f32.gmra.mxu0 %v1908
        %v1936 = vpop.f32.mrf.mxu0
        %v1937 = vadd.f32 %v1905, %v1936
        %1938 = vmatmul.f32.gmra.mxu0 %v1911
        %v1939 = vpop.f32.mrf.mxu0
        %v1940 = vadd.f32 %v1905, %v1939
        %1941 = vmatmul.f32.gmra.mxu0 %v1914
        %v1942 = vpop.f32.mrf.mxu0
        %v1943 = vadd.f32 %v1905, %v1942
        %1944 = vmatmul.f32.gmra.mxu0 %v1917
        %v1945 = vpop.f32.mrf.mxu0
        %v1946 = vadd.f32 %v1905, %v1945
        %1947 = vdwg.mxu0
        %1952 = vrot.lane.b32.xlu0 %v1937, 96
        %v1953 = vpop.permute.xlu0 %1952
        %1954 = vrot.lane.b32.xlu0 %v1940, 96
        %v1955 = vpop.permute.xlu0 %1954
        %1956 = vrot.lane.b32.xlu0 %v1943, 96
        %v1957 = vpop.permute.xlu0 %1956
        %1958 = vrot.lane.b32.xlu0 %v1946, 96
        %v1959 = vpop.permute.xlu0 %1958
        %vm1960 = vcmask 64512
        %v1961 = vsel %vm1960, %v1937, 0
        %v1963 = vsel %vm1960, %v1940, 0
        %v1965 = vsel %vm1960, %v1943, 0
        %v1967 = vsel %vm1960, %v1946, 0
        %v1969 = vsel %vm1960, %v1953, 0
        %v1971 = vsel %vm1960, %v1955, 0
        %v1973 = vsel %vm1960, %v1957, 0
        %v1975 = vsel %vm1960, %v1959, 0
        %1977 = vmatpush.xpose.msra.mxu0 0.0
        %1978 = vmatpush.xpose.msra.mxu0 0.0
        %1979 = vmatpush.xpose.msra.mxu0 0.0
        %1980 = vmatpush.xpose.msra.mxu0 0.0
        %1981 = vmatpush.xpose.msra.mxu0 0.0
        %1982 = vmatpush.xpose.msra.mxu0 0.0
        %1983 = vmatpush.xpose.msra.mxu0 0.0
        %1984 = vmatpush.xpose.msra.mxu0 0.0
        %1985 = vmatpush.xpose.msra.mxu0 0.0
        %1986 = vmatpush.xpose.msra.mxu0 0.0
        %1987 = vmatpush.xpose.msra.mxu0 0.0
        %1988 = vmatpush.xpose.msra.mxu0 0.0
        %1989 = vmatpush.xpose.msra.mxu0 %v1975
        %1990 = vmatpush.xpose.msra.mxu0 %v1973
        %1991 = vmatpush.xpose.msra.mxu0 %v1971
        %1992 = vmatpush.xpose.msra.mxu0 %v1969
        %1993 = vmatmul.f32.gmra.mxu0 %v1961
        %v1994 = vpop.f32.mrf.mxu0
        %v1995 = vadd.f32 0.0, %v1994
        %1996 = vmatmul.f32.gmra.mxu0 %v1963
        %v1997 = vpop.f32.mrf.mxu0
        %v1998 = vadd.f32 0.0, %v1997
        %1999 = vmatmul.f32.gmra.mxu0 %v1965
        %v2000 = vpop.f32.mrf.mxu0
        %v2001 = vadd.f32 0.0, %v2000
        %2002 = vmatmul.f32.gmra.mxu0 %v1967
        %v2003 = vpop.f32.mrf.mxu0
        %v2004 = vadd.f32 0.0, %v2003
        %2005 = vdwg.mxu0
        %v2006 = vsel %vm1094, %v1995, -inf
        %2007 = vmax.xlane.f32.xlu0 %v2006
        %v2008 = vpop.xlane.xlu0 %2007
        %v2009 = vsel %vm1094, %v1998, -inf
        %2010 = vmax.xlane.f32.xlu0 %v2009
        %v2011 = vpop.xlane.xlu0 %2010
        %v2012 = vsel %vm1094, %v2001, -inf
        %2013 = vmax.xlane.f32.xlu0 %v2012
        %v2014 = vpop.xlane.xlu0 %2013
        %v2015 = vsel %vm1094, %v2004, -inf
        %2016 = vmax.xlane.f32.xlu0 %v2015
        %v2017 = vpop.xlane.xlu0 %2016
        %v2018 = vsub.f32 %v1995, %v2008
        %v2019 = vsub.f32 %v1998, %v2011
        %v2020 = vsub.f32 %v2001, %v2014
        %v2021 = vsub.f32 %v2004, %v2017
        %v2022 = vmul.f32 %v2018, 1.442695
        %v2023 = vpow.pop %v2022
        %v2024 = vmul.f32 %v2019, 1.442695
        %v2025 = vpow.pop %v2024
        %v2026 = vmul.f32 %v2020, 1.442695
        %v2027 = vpow.pop %v2026
        %v2028 = vmul.f32 %v2021, 1.442695
        %v2029 = vpow.pop %v2028
        %v2030 = vsel %vm1094, %v2023, 0.0
        %2031 = vadd.xlane.f32.xlu0 %v2030
        %v2032 = vpop.xlane.xlu0 %2031
        %v2033 = vsel %vm1094, %v2025, 0.0
        %2034 = vadd.xlane.f32.xlu0 %v2033
        %v2035 = vpop.xlane.xlu0 %2034
        %v2036 = vsel %vm1094, %v2027, 0.0
        %2037 = vadd.xlane.f32.xlu0 %v2036
        %v2038 = vpop.xlane.xlu0 %2037
        %v2039 = vsel %vm1094, %v2029, 0.0
        %2040 = vadd.xlane.f32.xlu0 %v2039
        %v2041 = vpop.xlane.xlu0 %2040
        %v2042 = vrcp.pop %v2032
        %v2043 = vmul.f32 %v2032, %v2042
        %v2044 = vsub.f32 1.0, %v2043
        %v2045 = vmul.f32 %v2042, %v2044
        %v2046 = vadd.f32 %v2042, %v2045
        %vm2047 = vweird.f32 %v2032
        %vm2048 = vweird.f32 %v2042
        %vm2049 = vmor %vm2047, %vm2048
        %v2050 = vsel %vm2049, %v2042, %v2046
        %v2051 = vand.u32 2147483647, %v2032
        %vm2052 = vcmp.eq.f32.partialorder %v2051, 8.507059e+37
        %v2053 = vand.u32 %v2032, 2147483648
        %v2054 = vor.u32 1.1754944e-38, %v2053
        %v2055 = vsel %vm2052, %v2054, %v2050
        %v2056 = vmul.f32 %v2023, %v2055
        %v2057 = vrcp.pop %v2035
        %v2058 = vmul.f32 %v2035, %v2057
        %v2059 = vsub.f32 1.0, %v2058
        %v2060 = vmul.f32 %v2057, %v2059
        %v2061 = vadd.f32 %v2057, %v2060
        %vm2062 = vweird.f32 %v2035
        %vm2063 = vweird.f32 %v2057
        %vm2064 = vmor %vm2062, %vm2063
        %v2065 = vsel %vm2064, %v2057, %v2061
        %v2066 = vand.u32 2147483647, %v2035
        %vm2067 = vcmp.eq.f32.partialorder %v2066, 8.507059e+37
        %v2068 = vand.u32 %v2035, 2147483648
        %v2069 = vor.u32 1.1754944e-38, %v2068
        %v2070 = vsel %vm2067, %v2069, %v2065
        %v2071 = vmul.f32 %v2025, %v2070
        %v2072 = vrcp.pop %v2038
        %v2073 = vmul.f32 %v2038, %v2072
        %v2074 = vsub.f32 1.0, %v2073
        %v2075 = vmul.f32 %v2072, %v2074
        %v2076 = vadd.f32 %v2072, %v2075
        %vm2077 = vweird.f32 %v2038
        %vm2078 = vweird.f32 %v2072
        %vm2079 = vmor %vm2077, %vm2078
        %v2080 = vsel %vm2079, %v2072, %v2076
        %v2081 = vand.u32 2147483647, %v2038
        %vm2082 = vcmp.eq.f32.partialorder %v2081, 8.507059e+37
        %v2083 = vand.u32 %v2038, 2147483648
        %v2084 = vor.u32 1.1754944e-38, %v2083
        %v2085 = vsel %vm2082, %v2084, %v2080
        %v2086 = vmul.f32 %v2027, %v2085
        %v2087 = vrcp.pop %v2041
        %v2088 = vmul.f32 %v2041, %v2087
        %v2089 = vsub.f32 1.0, %v2088
        %v2090 = vmul.f32 %v2087, %v2089
        %v2091 = vadd.f32 %v2087, %v2090
        %vm2092 = vweird.f32 %v2041
        %vm2093 = vweird.f32 %v2087
        %vm2094 = vmor %vm2092, %vm2093
        %v2095 = vsel %vm2094, %v2087, %v2091
        %v2096 = vand.u32 2147483647, %v2041
        %vm2097 = vcmp.eq.f32.partialorder %v2096, 8.507059e+37
        %v2098 = vand.u32 %v2041, 2147483648
        %v2099 = vor.u32 1.1754944e-38, %v2098
        %v2100 = vsel %vm2097, %v2099, %v2095
        %v2101 = vmul.f32 %v2029, %v2100
        %2102 = vrot.lane.b32.xlu0 %v1937, 64
        %v2103 = vpop.permute.xlu0 %2102
        %2104 = vrot.lane.b32.xlu0 %v1940, 64
        %v2105 = vpop.permute.xlu0 %2104
        %2106 = vrot.lane.b32.xlu0 %v1943, 64
        %v2107 = vpop.permute.xlu0 %2106
        %2108 = vrot.lane.b32.xlu0 %v1946, 64
        %v2109 = vpop.permute.xlu0 %2108
        %v2115 = vsel %vm1094, %v2056, 0
        %v2118 = vsel %vm1094, %v2071, 0
        %v2121 = vsel %vm1094, %v2086, 0
        %v2124 = vsel %vm1094, %v2101, 0
        %2126 = vmatpush.msra.mxu0 0.0
        %2127 = vmatpush.msra.mxu0 0.0
        %2128 = vmatpush.msra.mxu0 0.0
        %2129 = vmatpush.msra.mxu0 0.0
        %2130 = vmatpush.msra.mxu0 0.0
        %2131 = vmatpush.msra.mxu0 0.0
        %2132 = vmatpush.msra.mxu0 0.0
        %2133 = vmatpush.msra.mxu0 0.0
        %2134 = vmatpush.msra.mxu0 0.0
        %2135 = vmatpush.msra.mxu0 0.0
        %2136 = vmatpush.msra.mxu0 0.0
        %2137 = vmatpush.msra.mxu0 0.0
        %2138 = vmatpush.msra.mxu0 %v2109
        %2139 = vmatpush.msra.mxu0 %v2107
        %2140 = vmatpush.msra.mxu0 %v2105
        %2141 = vmatpush.msra.mxu0 %v2103
        %2142 = vmatmul.f32.gmra.mxu0 %v2115
        %v2143 = vpop.f32.mrf.mxu0
        %v2144 = vadd.f32 0.0, %v2143
        %2145 = vmatmul.f32.gmra.mxu0 %v2118
        %v2146 = vpop.f32.mrf.mxu0
        %v2147 = vadd.f32 0.0, %v2146
        %2148 = vmatmul.f32.gmra.mxu0 %v2121
        %v2149 = vpop.f32.mrf.mxu0
        %v2150 = vadd.f32 0.0, %v2149
        %2151 = vmatmul.f32.gmra.mxu0 %v2124
        %v2152 = vpop.f32.mrf.mxu0
        %v2153 = vadd.f32 0.0, %v2152
        %2154 = vdwg.mxu0
        %2155 = vrot.lane.b32.xlu0 %v1937, 120
        %v2156 = vpop.permute.xlu0 %2155
        %2157 = vrot.lane.b32.xlu0 %v1940, 120
        %v2158 = vpop.permute.xlu0 %2157
        %2159 = vrot.lane.b32.xlu0 %v1943, 120
        %v2160 = vpop.permute.xlu0 %2159
        %2161 = vrot.lane.b32.xlu0 %v1946, 120
        %v2162 = vpop.permute.xlu0 %2161
        %2163 = vrot.lane.b32.xlu0 %v1937, 88
        %v2164 = vpop.permute.xlu0 %2163
        %2165 = vrot.lane.b32.xlu0 %v1940, 88
        %v2166 = vpop.permute.xlu0 %2165
        %2167 = vrot.lane.b32.xlu0 %v1943, 88
        %v2168 = vpop.permute.xlu0 %2167
        %2169 = vrot.lane.b32.xlu0 %v1946, 88
        %v2170 = vpop.permute.xlu0 %2169
        %v2171 = vsel %vm1960, %v2156, 0
        %v2173 = vsel %vm1960, %v2158, 0
        %v2175 = vsel %vm1960, %v2160, 0
        %v2177 = vsel %vm1960, %v2162, 0
        %v2179 = vsel %vm1960, %v2164, 0
        %v2181 = vsel %vm1960, %v2166, 0
        %v2183 = vsel %vm1960, %v2168, 0
        %v2185 = vsel %vm1960, %v2170, 0
        %2187 = vmatpush.xpose.msra.mxu0 0.0
        %2188 = vmatpush.xpose.msra.mxu0 0.0
        %2189 = vmatpush.xpose.msra.mxu0 0.0
        %2190 = vmatpush.xpose.msra.mxu0 0.0
        %2191 = vmatpush.xpose.msra.mxu0 0.0
        %2192 = vmatpush.xpose.msra.mxu0 0.0
        %2193 = vmatpush.xpose.msra.mxu0 0.0
        %2194 = vmatpush.xpose.msra.mxu0 0.0
        %2195 = vmatpush.xpose.msra.mxu0 0.0
        %2196 = vmatpush.xpose.msra.mxu0 0.0
        %2197 = vmatpush.xpose.msra.mxu0 0.0
        %2198 = vmatpush.xpose.msra.mxu0 0.0
        %2199 = vmatpush.xpose.msra.mxu0 %v2185
        %2200 = vmatpush.xpose.msra.mxu0 %v2183
        %2201 = vmatpush.xpose.msra.mxu0 %v2181
        %2202 = vmatpush.xpose.msra.mxu0 %v2179
        %2203 = vmatmul.f32.gmra.mxu0 %v2171
        %v2204 = vpop.f32.mrf.mxu0
        %v2205 = vadd.f32 0.0, %v2204
        %2206 = vmatmul.f32.gmra.mxu0 %v2173
        %v2207 = vpop.f32.mrf.mxu0
        %v2208 = vadd.f32 0.0, %v2207
        %2209 = vmatmul.f32.gmra.mxu0 %v2175
        %v2210 = vpop.f32.mrf.mxu0
        %v2211 = vadd.f32 0.0, %v2210
        %2212 = vmatmul.f32.gmra.mxu0 %v2177
        %v2213 = vpop.f32.mrf.mxu0
        %v2214 = vadd.f32 0.0, %v2213
        %2215 = vdwg.mxu0
        %v2216 = vsel %vm1094, %v2205, -inf
        %2217 = vmax.xlane.f32.xlu0 %v2216
        %v2218 = vpop.xlane.xlu0 %2217
        %v2219 = vsel %vm1094, %v2208, -inf
        %2220 = vmax.xlane.f32.xlu0 %v2219
        %v2221 = vpop.xlane.xlu0 %2220
        %v2222 = vsel %vm1094, %v2211, -inf
        %2223 = vmax.xlane.f32.xlu0 %v2222
        %v2224 = vpop.xlane.xlu0 %2223
        %v2225 = vsel %vm1094, %v2214, -inf
        %2226 = vmax.xlane.f32.xlu0 %v2225
        %v2227 = vpop.xlane.xlu0 %2226
        %v2228 = vsub.f32 %v2205, %v2218
        %v2229 = vsub.f32 %v2208, %v2221
        %v2230 = vsub.f32 %v2211, %v2224
        %v2231 = vsub.f32 %v2214, %v2227
        %v2232 = vmul.f32 %v2228, 1.442695
        %v2233 = vpow.pop %v2232
        %v2234 = vmul.f32 %v2229, 1.442695
        %v2235 = vpow.pop %v2234
        %v2236 = vmul.f32 %v2230, 1.442695
        %v2237 = vpow.pop %v2236
        %v2238 = vmul.f32 %v2231, 1.442695
        %v2239 = vpow.pop %v2238
        %v2240 = vsel %vm1094, %v2233, 0.0
        %2241 = vadd.xlane.f32.xlu0 %v2240
        %v2242 = vpop.xlane.xlu0 %2241
        %v2243 = vsel %vm1094, %v2235, 0.0
        %2244 = vadd.xlane.f32.xlu0 %v2243
        %v2245 = vpop.xlane.xlu0 %2244
        %v2246 = vsel %vm1094, %v2237, 0.0
        %2247 = vadd.xlane.f32.xlu0 %v2246
        %v2248 = vpop.xlane.xlu0 %2247
        %v2249 = vsel %vm1094, %v2239, 0.0
        %2250 = vadd.xlane.f32.xlu0 %v2249
        %v2251 = vpop.xlane.xlu0 %2250
        %v2252 = vrcp.pop %v2242
        %v2253 = vmul.f32 %v2242, %v2252
        %v2254 = vsub.f32 1.0, %v2253
        %v2255 = vmul.f32 %v2252, %v2254
        %v2256 = vadd.f32 %v2252, %v2255
        %vm2257 = vweird.f32 %v2242
        %vm2258 = vweird.f32 %v2252
        %vm2259 = vmor %vm2257, %vm2258
        %v2260 = vsel %vm2259, %v2252, %v2256
        %v2261 = vand.u32 2147483647, %v2242
        %vm2262 = vcmp.eq.f32.partialorder %v2261, 8.507059e+37
        %v2263 = vand.u32 %v2242, 2147483648
        %v2264 = vor.u32 1.1754944e-38, %v2263
        %v2265 = vsel %vm2262, %v2264, %v2260
        %v2266 = vmul.f32 %v2233, %v2265
        %v2267 = vrcp.pop %v2245
        %v2268 = vmul.f32 %v2245, %v2267
        %v2269 = vsub.f32 1.0, %v2268
        %v2270 = vmul.f32 %v2267, %v2269
        %v2271 = vadd.f32 %v2267, %v2270
        %vm2272 = vweird.f32 %v2245
        %vm2273 = vweird.f32 %v2267
        %vm2274 = vmor %vm2272, %vm2273
        %v2275 = vsel %vm2274, %v2267, %v2271
        %v2276 = vand.u32 2147483647, %v2245
        %vm2277 = vcmp.eq.f32.partialorder %v2276, 8.507059e+37
        %v2278 = vand.u32 %v2245, 2147483648
        %v2279 = vor.u32 1.1754944e-38, %v2278
        %v2280 = vsel %vm2277, %v2279, %v2275
        %v2281 = vmul.f32 %v2235, %v2280
        %v2282 = vrcp.pop %v2248
        %v2283 = vmul.f32 %v2248, %v2282
        %v2284 = vsub.f32 1.0, %v2283
        %v2285 = vmul.f32 %v2282, %v2284
        %v2286 = vadd.f32 %v2282, %v2285
        %vm2287 = vweird.f32 %v2248
        %vm2288 = vweird.f32 %v2282
        %vm2289 = vmor %vm2287, %vm2288
        %v2290 = vsel %vm2289, %v2282, %v2286
        %v2291 = vand.u32 2147483647, %v2248
        %vm2292 = vcmp.eq.f32.partialorder %v2291, 8.507059e+37
        %v2293 = vand.u32 %v2248, 2147483648
        %v2294 = vor.u32 1.1754944e-38, %v2293
        %v2295 = vsel %vm2292, %v2294, %v2290
        %v2296 = vmul.f32 %v2237, %v2295
        %v2297 = vrcp.pop %v2251
        %v2298 = vmul.f32 %v2251, %v2297
        %v2299 = vsub.f32 1.0, %v2298
        %v2300 = vmul.f32 %v2297, %v2299
        %v2301 = vadd.f32 %v2297, %v2300
        %vm2302 = vweird.f32 %v2251
        %vm2303 = vweird.f32 %v2297
        %vm2304 = vmor %vm2302, %vm2303
        %v2305 = vsel %vm2304, %v2297, %v2301
        %v2306 = vand.u32 2147483647, %v2251
        %vm2307 = vcmp.eq.f32.partialorder %v2306, 8.507059e+37
        %v2308 = vand.u32 %v2251, 2147483648
        %v2309 = vor.u32 1.1754944e-38, %v2308
        %v2310 = vsel %vm2307, %v2309, %v2305
        %v2311 = vmul.f32 %v2239, %v2310
        %2312 = vrot.lane.b32.xlu0 %v1937, 56
        %v2313 = vpop.permute.xlu0 %2312
        %2314 = vrot.lane.b32.xlu0 %v1940, 56
        %v2315 = vpop.permute.xlu0 %2314
        %2316 = vrot.lane.b32.xlu0 %v1943, 56
        %v2317 = vpop.permute.xlu0 %2316
        %2318 = vrot.lane.b32.xlu0 %v1946, 56
        %v2319 = vpop.permute.xlu0 %2318
        %v2325 = vsel %vm1094, %v2266, 0
        %v2328 = vsel %vm1094, %v2281, 0
        %v2331 = vsel %vm1094, %v2296, 0
        %v2334 = vsel %vm1094, %v2311, 0
        %2336 = vmatpush.msra.mxu0 0.0
        %2337 = vmatpush.msra.mxu0 0.0
        %2338 = vmatpush.msra.mxu0 0.0
        %2339 = vmatpush.msra.mxu0 0.0
        %2340 = vmatpush.msra.mxu0 0.0
        %2341 = vmatpush.msra.mxu0 0.0
        %2342 = vmatpush.msra.mxu0 0.0
        %2343 = vmatpush.msra.mxu0 0.0
        %2344 = vmatpush.msra.mxu0 0.0
        %2345 = vmatpush.msra.mxu0 0.0
        %2346 = vmatpush.msra.mxu0 0.0
        %2347 = vmatpush.msra.mxu0 0.0
        %2348 = vmatpush.msra.mxu0 %v2319
        %2349 = vmatpush.msra.mxu0 %v2317
        %2350 = vmatpush.msra.mxu0 %v2315
        %2351 = vmatpush.msra.mxu0 %v2313
        %2352 = vmatmul.f32.gmra.mxu0 %v2325
        %v2353 = vpop.f32.mrf.mxu0
        %v2354 = vadd.f32 0.0, %v2353
        %2355 = vmatmul.f32.gmra.mxu0 %v2328
        %v2356 = vpop.f32.mrf.mxu0
        %v2357 = vadd.f32 0.0, %v2356
        %2358 = vmatmul.f32.gmra.mxu0 %v2331
        %v2359 = vpop.f32.mrf.mxu0
        %v2360 = vadd.f32 0.0, %v2359
        %2361 = vmatmul.f32.gmra.mxu0 %v2334
        %v2362 = vpop.f32.mrf.mxu0
        %v2363 = vadd.f32 0.0, %v2362
        %2364 = vdwg.mxu0
        %2365 = vrot.lane.b32.xlu0 %v1937, 112
        %v2366 = vpop.permute.xlu0 %2365
        %2367 = vrot.lane.b32.xlu0 %v1940, 112
        %v2368 = vpop.permute.xlu0 %2367
        %2369 = vrot.lane.b32.xlu0 %v1943, 112
        %v2370 = vpop.permute.xlu0 %2369
        %2371 = vrot.lane.b32.xlu0 %v1946, 112
        %v2372 = vpop.permute.xlu0 %2371
        %2373 = vrot.lane.b32.xlu0 %v1937, 80
        %v2374 = vpop.permute.xlu0 %2373
        %2375 = vrot.lane.b32.xlu0 %v1940, 80
        %v2376 = vpop.permute.xlu0 %2375
        %2377 = vrot.lane.b32.xlu0 %v1943, 80
        %v2378 = vpop.permute.xlu0 %2377
        %2379 = vrot.lane.b32.xlu0 %v1946, 80
        %v2380 = vpop.permute.xlu0 %2379
        %v2381 = vsel %vm1960, %v2366, 0
        %v2383 = vsel %vm1960, %v2368, 0
        %v2385 = vsel %vm1960, %v2370, 0
        %v2387 = vsel %vm1960, %v2372, 0
        %v2389 = vsel %vm1960, %v2374, 0
        %v2391 = vsel %vm1960, %v2376, 0
        %v2393 = vsel %vm1960, %v2378, 0
        %v2395 = vsel %vm1960, %v2380, 0
        %2397 = vmatpush.xpose.msra.mxu0 0.0
        %2398 = vmatpush.xpose.msra.mxu0 0.0
        %2399 = vmatpush.xpose.msra.mxu0 0.0
        %2400 = vmatpush.xpose.msra.mxu0 0.0
        %2401 = vmatpush.xpose.msra.mxu0 0.0
        %2402 = vmatpush.xpose.msra.mxu0 0.0
        %2403 = vmatpush.xpose.msra.mxu0 0.0
        %2404 = vmatpush.xpose.msra.mxu0 0.0
        %2405 = vmatpush.xpose.msra.mxu0 0.0
        %2406 = vmatpush.xpose.msra.mxu0 0.0
        %2407 = vmatpush.xpose.msra.mxu0 0.0
        %2408 = vmatpush.xpose.msra.mxu0 0.0
        %2409 = vmatpush.xpose.msra.mxu0 %v2395
        %2410 = vmatpush.xpose.msra.mxu0 %v2393
        %2411 = vmatpush.xpose.msra.mxu0 %v2391
        %2412 = vmatpush.xpose.msra.mxu0 %v2389
        %2413 = vmatmul.f32.gmra.mxu0 %v2381
        %v2414 = vpop.f32.mrf.mxu0
        %v2415 = vadd.f32 0.0, %v2414
        %2416 = vmatmul.f32.gmra.mxu0 %v2383
        %v2417 = vpop.f32.mrf.mxu0
        %v2418 = vadd.f32 0.0, %v2417
        %2419 = vmatmul.f32.gmra.mxu0 %v2385
        %v2420 = vpop.f32.mrf.mxu0
        %v2421 = vadd.f32 0.0, %v2420
        %2422 = vmatmul.f32.gmra.mxu0 %v2387
        %v2423 = vpop.f32.mrf.mxu0
        %v2424 = vadd.f32 0.0, %v2423
        %2425 = vdwg.mxu0
        %v2426 = vsel %vm1094, %v2415, -inf
        %2427 = vmax.xlane.f32.xlu0 %v2426
        %v2428 = vpop.xlane.xlu0 %2427
        %v2429 = vsel %vm1094, %v2418, -inf
        %2430 = vmax.xlane.f32.xlu0 %v2429
        %v2431 = vpop.xlane.xlu0 %2430
        %v2432 = vsel %vm1094, %v2421, -inf
        %2433 = vmax.xlane.f32.xlu0 %v2432
        %v2434 = vpop.xlane.xlu0 %2433
        %v2435 = vsel %vm1094, %v2424, -inf
        %2436 = vmax.xlane.f32.xlu0 %v2435
        %v2437 = vpop.xlane.xlu0 %2436
        %v2438 = vsub.f32 %v2415, %v2428
        %v2439 = vsub.f32 %v2418, %v2431
        %v2440 = vsub.f32 %v2421, %v2434
        %v2441 = vsub.f32 %v2424, %v2437
        %v2442 = vmul.f32 %v2438, 1.442695
        %v2443 = vpow.pop %v2442
        %v2444 = vmul.f32 %v2439, 1.442695
        %v2445 = vpow.pop %v2444
        %v2446 = vmul.f32 %v2440, 1.442695
        %v2447 = vpow.pop %v2446
        %v2448 = vmul.f32 %v2441, 1.442695
        %v2449 = vpow.pop %v2448
        %v2450 = vsel %vm1094, %v2443, 0.0
        %2451 = vadd.xlane.f32.xlu0 %v2450
        %v2452 = vpop.xlane.xlu0 %2451
        %v2453 = vsel %vm1094, %v2445, 0.0
        %2454 = vadd.xlane.f32.xlu0 %v2453
        %v2455 = vpop.xlane.xlu0 %2454
        %v2456 = vsel %vm1094, %v2447, 0.0
        %2457 = vadd.xlane.f32.xlu0 %v2456
        %v2458 = vpop.xlane.xlu0 %2457
        %v2459 = vsel %vm1094, %v2449, 0.0
        %2460 = vadd.xlane.f32.xlu0 %v2459
        %v2461 = vpop.xlane.xlu0 %2460
        %v2462 = vrcp.pop %v2452
        %v2463 = vmul.f32 %v2452, %v2462
        %v2464 = vsub.f32 1.0, %v2463
        %v2465 = vmul.f32 %v2462, %v2464
        %v2466 = vadd.f32 %v2462, %v2465
        %vm2467 = vweird.f32 %v2452
        %vm2468 = vweird.f32 %v2462
        %vm2469 = vmor %vm2467, %vm2468
        %v2470 = vsel %vm2469, %v2462, %v2466
        %v2471 = vand.u32 2147483647, %v2452
        %vm2472 = vcmp.eq.f32.partialorder %v2471, 8.507059e+37
        %v2473 = vand.u32 %v2452, 2147483648
        %v2474 = vor.u32 1.1754944e-38, %v2473
        %v2475 = vsel %vm2472, %v2474, %v2470
        %v2476 = vmul.f32 %v2443, %v2475
        %v2477 = vrcp.pop %v2455
        %v2478 = vmul.f32 %v2455, %v2477
        %v2479 = vsub.f32 1.0, %v2478
        %v2480 = vmul.f32 %v2477, %v2479
        %v2481 = vadd.f32 %v2477, %v2480
        %vm2482 = vweird.f32 %v2455
        %vm2483 = vweird.f32 %v2477
        %vm2484 = vmor %vm2482, %vm2483
        %v2485 = vsel %vm2484, %v2477, %v2481
        %v2486 = vand.u32 2147483647, %v2455
        %vm2487 = vcmp.eq.f32.partialorder %v2486, 8.507059e+37
        %v2488 = vand.u32 %v2455, 2147483648
        %v2489 = vor.u32 1.1754944e-38, %v2488
        %v2490 = vsel %vm2487, %v2489, %v2485
        %v2491 = vmul.f32 %v2445, %v2490
        %v2492 = vrcp.pop %v2458
        %v2493 = vmul.f32 %v2458, %v2492
        %v2494 = vsub.f32 1.0, %v2493
        %v2495 = vmul.f32 %v2492, %v2494
        %v2496 = vadd.f32 %v2492, %v2495
        %vm2497 = vweird.f32 %v2458
        %vm2498 = vweird.f32 %v2492
        %vm2499 = vmor %vm2497, %vm2498
        %v2500 = vsel %vm2499, %v2492, %v2496
        %v2501 = vand.u32 2147483647, %v2458
        %vm2502 = vcmp.eq.f32.partialorder %v2501, 8.507059e+37
        %v2503 = vand.u32 %v2458, 2147483648
        %v2504 = vor.u32 1.1754944e-38, %v2503
        %v2505 = vsel %vm2502, %v2504, %v2500
        %v2506 = vmul.f32 %v2447, %v2505
        %v2507 = vrcp.pop %v2461
        %v2508 = vmul.f32 %v2461, %v2507
        %v2509 = vsub.f32 1.0, %v2508
        %v2510 = vmul.f32 %v2507, %v2509
        %v2511 = vadd.f32 %v2507, %v2510
        %vm2512 = vweird.f32 %v2461
        %vm2513 = vweird.f32 %v2507
        %vm2514 = vmor %vm2512, %vm2513
        %v2515 = vsel %vm2514, %v2507, %v2511
        %v2516 = vand.u32 2147483647, %v2461
        %vm2517 = vcmp.eq.f32.partialorder %v2516, 8.507059e+37
        %v2518 = vand.u32 %v2461, 2147483648
        %v2519 = vor.u32 1.1754944e-38, %v2518
        %v2520 = vsel %vm2517, %v2519, %v2515
        %v2521 = vmul.f32 %v2449, %v2520
        %2522 = vrot.lane.b32.xlu0 %v1937, 48
        %v2523 = vpop.permute.xlu0 %2522
        %2524 = vrot.lane.b32.xlu0 %v1940, 48
        %v2525 = vpop.permute.xlu0 %2524
        %2526 = vrot.lane.b32.xlu0 %v1943, 48
        %v2527 = vpop.permute.xlu0 %2526
        %2528 = vrot.lane.b32.xlu0 %v1946, 48
        %v2529 = vpop.permute.xlu0 %2528
        %v2535 = vsel %vm1094, %v2476, 0
        %v2538 = vsel %vm1094, %v2491, 0
        %v2541 = vsel %vm1094, %v2506, 0
        %v2544 = vsel %vm1094, %v2521, 0
        %2546 = vmatpush.msra.mxu0 0.0
        %2547 = vmatpush.msra.mxu0 0.0
        %2548 = vmatpush.msra.mxu0 0.0
        %2549 = vmatpush.msra.mxu0 0.0
        %2550 = vmatpush.msra.mxu0 0.0
        %2551 = vmatpush.msra.mxu0 0.0
        %2552 = vmatpush.msra.mxu0 0.0
        %2553 = vmatpush.msra.mxu0 0.0
        %2554 = vmatpush.msra.mxu0 0.0
        %2555 = vmatpush.msra.mxu0 0.0
        %2556 = vmatpush.msra.mxu0 0.0
        %2557 = vmatpush.msra.mxu0 0.0
        %2558 = vmatpush.msra.mxu0 %v2529
        %2559 = vmatpush.msra.mxu0 %v2527
        %2560 = vmatpush.msra.mxu0 %v2525
        %2561 = vmatpush.msra.mxu0 %v2523
        %2562 = vmatmul.f32.gmra.mxu0 %v2535
        %v2563 = vpop.f32.mrf.mxu0
        %v2564 = vadd.f32 0.0, %v2563
        %2565 = vmatmul.f32.gmra.mxu0 %v2538
        %v2566 = vpop.f32.mrf.mxu0
        %v2567 = vadd.f32 0.0, %v2566
        %2568 = vmatmul.f32.gmra.mxu0 %v2541
        %v2569 = vpop.f32.mrf.mxu0
        %v2570 = vadd.f32 0.0, %v2569
        %2571 = vmatmul.f32.gmra.mxu0 %v2544
        %v2572 = vpop.f32.mrf.mxu0
        %v2573 = vadd.f32 0.0, %v2572
        %2574 = vdwg.mxu0
        %2575 = vrot.lane.b32.xlu0 %v1937, 104
        %v2576 = vpop.permute.xlu0 %2575
        %2577 = vrot.lane.b32.xlu0 %v1940, 104
        %v2578 = vpop.permute.xlu0 %2577
        %2579 = vrot.lane.b32.xlu0 %v1943, 104
        %v2580 = vpop.permute.xlu0 %2579
        %2581 = vrot.lane.b32.xlu0 %v1946, 104
        %v2582 = vpop.permute.xlu0 %2581
        %2583 = vrot.lane.b32.xlu0 %v1937, 72
        %v2584 = vpop.permute.xlu0 %2583
        %2585 = vrot.lane.b32.xlu0 %v1940, 72
        %v2586 = vpop.permute.xlu0 %2585
        %2587 = vrot.lane.b32.xlu0 %v1943, 72
        %v2588 = vpop.permute.xlu0 %2587
        %2589 = vrot.lane.b32.xlu0 %v1946, 72
        %v2590 = vpop.permute.xlu0 %2589
        %v2591 = vsel %vm1960, %v2576, 0
        %v2593 = vsel %vm1960, %v2578, 0
        %v2595 = vsel %vm1960, %v2580, 0
        %v2597 = vsel %vm1960, %v2582, 0
        %v2599 = vsel %vm1960, %v2584, 0
        %v2601 = vsel %vm1960, %v2586, 0
        %v2603 = vsel %vm1960, %v2588, 0
        %v2605 = vsel %vm1960, %v2590, 0
        %2607 = vmatpush.xpose.msra.mxu0 0.0
        %2608 = vmatpush.xpose.msra.mxu0 0.0
        %2609 = vmatpush.xpose.msra.mxu0 0.0
        %2610 = vmatpush.xpose.msra.mxu0 0.0
        %2611 = vmatpush.xpose.msra.mxu0 0.0
        %2612 = vmatpush.xpose.msra.mxu0 0.0
        %2613 = vmatpush.xpose.msra.mxu0 0.0
        %2614 = vmatpush.xpose.msra.mxu0 0.0
        %2615 = vmatpush.xpose.msra.mxu0 0.0
        %2616 = vmatpush.xpose.msra.mxu0 0.0
        %2617 = vmatpush.xpose.msra.mxu0 0.0
        %2618 = vmatpush.xpose.msra.mxu0 0.0
        %2619 = vmatpush.xpose.msra.mxu0 %v2605
        %2620 = vmatpush.xpose.msra.mxu0 %v2603
        %2621 = vmatpush.xpose.msra.mxu0 %v2601
        %2622 = vmatpush.xpose.msra.mxu0 %v2599
        %2623 = vmatmul.f32.gmra.mxu0 %v2591
        %v2624 = vpop.f32.mrf.mxu0
        %v2625 = vadd.f32 0.0, %v2624
        %2626 = vmatmul.f32.gmra.mxu0 %v2593
        %v2627 = vpop.f32.mrf.mxu0
        %v2628 = vadd.f32 0.0, %v2627
        %2629 = vmatmul.f32.gmra.mxu0 %v2595
        %v2630 = vpop.f32.mrf.mxu0
        %v2631 = vadd.f32 0.0, %v2630
        %2632 = vmatmul.f32.gmra.mxu0 %v2597
        %v2633 = vpop.f32.mrf.mxu0
        %v2634 = vadd.f32 0.0, %v2633
        %2635 = vdwg.mxu0
        %v2636 = vsel %vm1094, %v2625, -inf
        %2637 = vmax.xlane.f32.xlu0 %v2636
        %v2638 = vpop.xlane.xlu0 %2637
        %v2639 = vsel %vm1094, %v2628, -inf
        %2640 = vmax.xlane.f32.xlu0 %v2639
        %v2641 = vpop.xlane.xlu0 %2640
        %v2642 = vsel %vm1094, %v2631, -inf
        %2643 = vmax.xlane.f32.xlu0 %v2642
        %v2644 = vpop.xlane.xlu0 %2643
        %v2645 = vsel %vm1094, %v2634, -inf
        %2646 = vmax.xlane.f32.xlu0 %v2645
        %v2647 = vpop.xlane.xlu0 %2646
        %v2648 = vsub.f32 %v2625, %v2638
        %v2649 = vsub.f32 %v2628, %v2641
        %v2650 = vsub.f32 %v2631, %v2644
        %v2651 = vsub.f32 %v2634, %v2647
        %v2652 = vmul.f32 %v2648, 1.442695
        %v2653 = vpow.pop %v2652
        %v2654 = vmul.f32 %v2649, 1.442695
        %v2655 = vpow.pop %v2654
        %v2656 = vmul.f32 %v2650, 1.442695
        %v2657 = vpow.pop %v2656
        %v2658 = vmul.f32 %v2651, 1.442695
        %v2659 = vpow.pop %v2658
        %v2660 = vsel %vm1094, %v2653, 0.0
        %2661 = vadd.xlane.f32.xlu0 %v2660
        %v2662 = vpop.xlane.xlu0 %2661
        %v2663 = vsel %vm1094, %v2655, 0.0
        %2664 = vadd.xlane.f32.xlu0 %v2663
        %v2665 = vpop.xlane.xlu0 %2664
        %v2666 = vsel %vm1094, %v2657, 0.0
        %2667 = vadd.xlane.f32.xlu0 %v2666
        %v2668 = vpop.xlane.xlu0 %2667
        %v2669 = vsel %vm1094, %v2659, 0.0
        %2670 = vadd.xlane.f32.xlu0 %v2669
        %v2671 = vpop.xlane.xlu0 %2670
        %v2672 = vrcp.pop %v2662
        %v2673 = vmul.f32 %v2662, %v2672
        %v2674 = vsub.f32 1.0, %v2673
        %v2675 = vmul.f32 %v2672, %v2674
        %v2676 = vadd.f32 %v2672, %v2675
        %vm2677 = vweird.f32 %v2662
        %vm2678 = vweird.f32 %v2672
        %vm2679 = vmor %vm2677, %vm2678
        %v2680 = vsel %vm2679, %v2672, %v2676
        %v2681 = vand.u32 2147483647, %v2662
        %vm2682 = vcmp.eq.f32.partialorder %v2681, 8.507059e+37
        %v2683 = vand.u32 %v2662, 2147483648
        %v2684 = vor.u32 1.1754944e-38, %v2683
        %v2685 = vsel %vm2682, %v2684, %v2680
        %v2686 = vmul.f32 %v2653, %v2685
        %v2687 = vrcp.pop %v2665
        %v2688 = vmul.f32 %v2665, %v2687
        %v2689 = vsub.f32 1.0, %v2688
        %v2690 = vmul.f32 %v2687, %v2689
        %v2691 = vadd.f32 %v2687, %v2690
        %vm2692 = vweird.f32 %v2665
        %vm2693 = vweird.f32 %v2687
        %vm2694 = vmor %vm2692, %vm2693
        %v2695 = vsel %vm2694, %v2687, %v2691
        %v2696 = vand.u32 2147483647, %v2665
        %vm2697 = vcmp.eq.f32.partialorder %v2696, 8.507059e+37
        %v2698 = vand.u32 %v2665, 2147483648
        %v2699 = vor.u32 1.1754944e-38, %v2698
        %v2700 = vsel %vm2697, %v2699, %v2695
        %v2701 = vmul.f32 %v2655, %v2700
        %v2702 = vrcp.pop %v2668
        %v2703 = vmul.f32 %v2668, %v2702
        %v2704 = vsub.f32 1.0, %v2703
        %v2705 = vmul.f32 %v2702, %v2704
        %v2706 = vadd.f32 %v2702, %v2705
        %vm2707 = vweird.f32 %v2668
        %vm2708 = vweird.f32 %v2702
        %vm2709 = vmor %vm2707, %vm2708
        %v2710 = vsel %vm2709, %v2702, %v2706
        %v2711 = vand.u32 2147483647, %v2668
        %vm2712 = vcmp.eq.f32.partialorder %v2711, 8.507059e+37
        %v2713 = vand.u32 %v2668, 2147483648
        %v2714 = vor.u32 1.1754944e-38, %v2713
        %v2715 = vsel %vm2712, %v2714, %v2710
        %v2716 = vmul.f32 %v2657, %v2715
        %v2717 = vrcp.pop %v2671
        %v2718 = vmul.f32 %v2671, %v2717
        %v2719 = vsub.f32 1.0, %v2718
        %v2720 = vmul.f32 %v2717, %v2719
        %v2721 = vadd.f32 %v2717, %v2720
        %vm2722 = vweird.f32 %v2671
        %vm2723 = vweird.f32 %v2717
        %vm2724 = vmor %vm2722, %vm2723
        %v2725 = vsel %vm2724, %v2717, %v2721
        %v2726 = vand.u32 2147483647, %v2671
        %vm2727 = vcmp.eq.f32.partialorder %v2726, 8.507059e+37
        %v2728 = vand.u32 %v2671, 2147483648
        %v2729 = vor.u32 1.1754944e-38, %v2728
        %v2730 = vsel %vm2727, %v2729, %v2725
        %v2731 = vmul.f32 %v2659, %v2730
        %2732 = vrot.lane.b32.xlu0 %v1937, 40
        %v2733 = vpop.permute.xlu0 %2732
        %2734 = vrot.lane.b32.xlu0 %v1940, 40
        %v2735 = vpop.permute.xlu0 %2734
        %2736 = vrot.lane.b32.xlu0 %v1943, 40
        %v2737 = vpop.permute.xlu0 %2736
        %2738 = vrot.lane.b32.xlu0 %v1946, 40
        %v2739 = vpop.permute.xlu0 %2738
        %v2745 = vsel %vm1094, %v2686, 0
        %v2748 = vsel %vm1094, %v2701, 0
        %v2751 = vsel %vm1094, %v2716, 0
        %v2754 = vsel %vm1094, %v2731, 0
        %2756 = vmatpush.msra.mxu0 0.0
        %2757 = vmatpush.msra.mxu0 0.0
        %2758 = vmatpush.msra.mxu0 0.0
        %2759 = vmatpush.msra.mxu0 0.0
        %2760 = vmatpush.msra.mxu0 0.0
        %2761 = vmatpush.msra.mxu0 0.0
        %2762 = vmatpush.msra.mxu0 0.0
        %2763 = vmatpush.msra.mxu0 0.0
        %2764 = vmatpush.msra.mxu0 0.0
        %2765 = vmatpush.msra.mxu0 0.0
        %2766 = vmatpush.msra.mxu0 0.0
        %2767 = vmatpush.msra.mxu0 0.0
        %2768 = vmatpush.msra.mxu0 %v2739
        %2769 = vmatpush.msra.mxu0 %v2737
        %2770 = vmatpush.msra.mxu0 %v2735
        %2771 = vmatpush.msra.mxu0 %v2733
        %2772 = vmatmul.f32.gmra.mxu0 %v2745
        %v2773 = vpop.f32.mrf.mxu0
        %v2774 = vadd.f32 0.0, %v2773
        %2775 = vmatmul.f32.gmra.mxu0 %v2748
        %v2776 = vpop.f32.mrf.mxu0
        %v2777 = vadd.f32 0.0, %v2776
        %2778 = vmatmul.f32.gmra.mxu0 %v2751
        %v2779 = vpop.f32.mrf.mxu0
        %v2780 = vadd.f32 0.0, %v2779
        %2781 = vmatmul.f32.gmra.mxu0 %v2754
        %v2782 = vpop.f32.mrf.mxu0
        %v2783 = vadd.f32 0.0, %v2782
        %2784 = vdwg.mxu0
        %2789 = vrot.lane.b32.xlu0 %v2354, 8
        %v2790 = vpop.permute.xlu0 %2789
        %2791 = vrot.lane.b32.xlu0 %v2357, 8
        %v2792 = vpop.permute.xlu0 %2791
        %2793 = vrot.lane.b32.xlu0 %v2360, 8
        %v2794 = vpop.permute.xlu0 %2793
        %2795 = vrot.lane.b32.xlu0 %v2363, 8
        %v2796 = vpop.permute.xlu0 %2795
        %2805 = vrot.lane.b32.xlu0 %v2564, 16
        %v2806 = vpop.permute.xlu0 %2805
        %2807 = vrot.lane.b32.xlu0 %v2567, 16
        %v2808 = vpop.permute.xlu0 %2807
        %2809 = vrot.lane.b32.xlu0 %v2570, 16
        %v2810 = vpop.permute.xlu0 %2809
        %2811 = vrot.lane.b32.xlu0 %v2573, 16
        %v2812 = vpop.permute.xlu0 %2811
        %2821 = vrot.lane.b32.xlu0 %v2774, 24
        %v2822 = vpop.permute.xlu0 %2821
        %2823 = vrot.lane.b32.xlu0 %v2777, 24
        %v2824 = vpop.permute.xlu0 %2823
        %2825 = vrot.lane.b32.xlu0 %v2780, 24
        %v2826 = vpop.permute.xlu0 %2825
        %2827 = vrot.lane.b32.xlu0 %v2783, 24
        %v2828 = vpop.permute.xlu0 %2827
        %v2833 = vsel %vm1960, %v2144, %v2790
        %v2834 = vsel %vm1960, %v2147, %v2792
        %v2835 = vsel %vm1960, %v2150, %v2794
        %v2836 = vsel %vm1960, %v2153, %v2796
        %vm2837 = vcmask 130048
        %v2838 = vsel %vm2837, %v2833, %v2806
        %v2839 = vsel %vm2837, %v2834, %v2808
        %v2840 = vsel %vm2837, %v2835, %v2810
        %v2841 = vsel %vm2837, %v2836, %v2812
        %vm2842 = vcmask 195584
        %v2843 = vsel %vm2842, %v2838, %v2822
        %v2844 = vsel %vm2842, %v2839, %v2824
        %v2845 = vsel %vm2842, %v2840, %v2826
        %v2846 = vsel %vm2842, %v2841, %v2828
        %v2847 = vld [vmem:[%s33] sm:$0xff]
        %v2848 = vld [vmem:[%s33 + $0x8] sm:$0xff]
        %v2849 = vld [vmem:[%s33 + $0x10] sm:$0xff]
        %v2850 = vld [vmem:[%s33 + $0x18] sm:$0xff]
        %v2851 = vld [vmem:[%s35] sm:$0x1]
        %v2853 = vperm.slane %v2851, 0
        %v2856 = vsel %vm1094, %v2843, 0
        %v2859 = vsel %vm1094, %v2844, 0
        %v2862 = vsel %vm1094, %v2845, 0
        %v2865 = vsel %vm1094, %v2846, 0
        %2867 = vmatpush.msra.mxu0 0.0
        %2868 = vmatpush.msra.mxu0 0.0
        %2869 = vmatpush.msra.mxu0 0.0
        %2870 = vmatpush.msra.mxu0 0.0
        %2871 = vmatpush.msra.mxu0 0.0
        %2872 = vmatpush.msra.mxu0 0.0
        %2873 = vmatpush.msra.mxu0 0.0
        %2874 = vmatpush.msra.mxu0 0.0
        %2875 = vmatpush.msra.mxu0 0.0
        %2876 = vmatpush.msra.mxu0 0.0
        %2877 = vmatpush.msra.mxu0 0.0
        %2878 = vmatpush.msra.mxu0 0.0
        %2879 = vmatpush.msra.mxu0 %v2850
        %2880 = vmatpush.msra.mxu0 %v2849
        %2881 = vmatpush.msra.mxu0 %v2848
        %2882 = vmatpush.msra.mxu0 %v2847
        %2883 = vmatmul.f32.gmra.mxu0 %v2856
        %v2884 = vpop.f32.mrf.mxu0
        %v2885 = vadd.f32 %v2853, %v2884
        %2886 = vmatmul.f32.gmra.mxu0 %v2859
        %v2887 = vpop.f32.mrf.mxu0
        %v2888 = vadd.f32 %v2853, %v2887
        %2889 = vmatmul.f32.gmra.mxu0 %v2862
        %v2890 = vpop.f32.mrf.mxu0
        %v2891 = vadd.f32 %v2853, %v2890
        %2892 = vmatmul.f32.gmra.mxu0 %v2865
        %v2893 = vpop.f32.mrf.mxu0
        %v2894 = vadd.f32 %v2853, %v2893
        %2895 = vdwg.mxu0
        %v2896 = vadd.f32 %v1895, %v2885
        %v2897 = vadd.f32 %v1896, %v2888
        %v2898 = vadd.f32 %v1897, %v2891
        %v2899 = vadd.f32 %v1898, %v2894
        %v2900 = vld [vmem:[%s37] sm:$0x1]
        %v2901 = vld [vmem:[%s39] sm:$0x1]
        %v2902 = vsel %vm1094, %v2896, 0.0
        %2903 = vadd.xlane.f32.xlu0 %v2902
        %v2904 = vpop.xlane.xlu0 %2903
        %v2905 = vsel %vm1094, %v2897, 0.0
        %2906 = vadd.xlane.f32.xlu0 %v2905
        %v2907 = vpop.xlane.xlu0 %2906
        %v2908 = vsel %vm1094, %v2898, 0.0
        %2909 = vadd.xlane.f32.xlu0 %v2908
        %v2910 = vpop.xlane.xlu0 %2909
        %v2911 = vsel %vm1094, %v2899, 0.0
        %2912 = vadd.xlane.f32.xlu0 %v2911
        %v2913 = vpop.xlane.xlu0 %2912
        %v2914 = vmul.f32 %v2904, %v1479
        %v2915 = vmul.f32 %v2907, %v1479
        %v2916 = vmul.f32 %v2910, %v1479
        %v2917 = vmul.f32 %v2913, %v1479
        %v2918 = vsub.f32 %v2896, %v2914
        %v2919 = vsub.f32 %v2897, %v2915
        %v2920 = vsub.f32 %v2898, %v2916
        %v2921 = vsub.f32 %v2899, %v2917
        %v2922 = vmul.f32 %v2918, %v2918
        %v2923 = vmul.f32 %v2919, %v2919
        %v2924 = vmul.f32 %v2920, %v2920
        %v2925 = vmul.f32 %v2921, %v2921
        %v2926 = vsel %vm1094, %v2922, 0.0
        %2927 = vadd.xlane.f32.xlu0 %v2926
        %v2928 = vpop.xlane.xlu0 %2927
        %v2929 = vsel %vm1094, %v2923, 0.0
        %2930 = vadd.xlane.f32.xlu0 %v2929
        %v2931 = vpop.xlane.xlu0 %2930
        %v2932 = vsel %vm1094, %v2924, 0.0
        %2933 = vadd.xlane.f32.xlu0 %v2932
        %v2934 = vpop.xlane.xlu0 %2933
        %v2935 = vsel %vm1094, %v2925, 0.0
        %2936 = vadd.xlane.f32.xlu0 %v2935
        %v2937 = vpop.xlane.xlu0 %2936
        %v2938 = vmul.f32 %v2928, %v1479
        %v2939 = vmul.f32 %v2931, %v1479
        %v2940 = vmul.f32 %v2934, %v1479
        %v2941 = vmul.f32 %v2937, %v1479
        %v2942 = vadd.f32 %v2938, 1e-05
        %v2943 = vadd.f32 %v2939, 1e-05
        %v2944 = vadd.f32 %v2940, 1e-05
        %v2945 = vadd.f32 %v2941, 1e-05
        %v2946 = vrsqrt.pop %v2942
        %v2947 = vmul.f32 %v2946, %v2942
        %v2948 = vmul.f32 %v2947, %v2946
        %v2949 = vmul.f32 0.5, %v2948
        %v2950 = vsub.f32 1.5, %v2949
        %v2951 = vmul.f32 %v2946, %v2950
        %vm2952 = vweird.f32 %v2942
        %vm2953 = vweird.f32 %v2946
        %vm2954 = vmor %vm2952, %vm2953
        %v2955 = vsel %vm2954, %v2946, %v2951
        %v2956 = vrsqrt.pop %v2943
        %v2957 = vmul.f32 %v2956, %v2943
        %v2958 = vmul.f32 %v2957, %v2956
        %v2959 = vmul.f32 0.5, %v2958
        %v2960 = vsub.f32 1.5, %v2959
        %v2961 = vmul.f32 %v2956, %v2960
        %vm2962 = vweird.f32 %v2943
        %vm2963 = vweird.f32 %v2956
        %vm2964 = vmor %vm2962, %vm2963
        %v2965 = vsel %vm2964, %v2956, %v2961
        %v2966 = vrsqrt.pop %v2944
        %v2967 = vmul.f32 %v2966, %v2944
        %v2968 = vmul.f32 %v2967, %v2966
        %v2969 = vmul.f32 0.5, %v2968
        %v2970 = vsub.f32 1.5, %v2969
        %v2971 = vmul.f32 %v2966, %v2970
        %vm2972 = vweird.f32 %v2944
        %vm2973 = vweird.f32 %v2966
        %vm2974 = vmor %vm2972, %vm2973
        %v2975 = vsel %vm2974, %v2966, %v2971
        %v2976 = vrsqrt.pop %v2945
        %v2977 = vmul.f32 %v2976, %v2945
        %v2978 = vmul.f32 %v2977, %v2976
        %v2979 = vmul.f32 0.5, %v2978
        %v2980 = vsub.f32 1.5, %v2979
        %v2981 = vmul.f32 %v2976, %v2980
        %vm2982 = vweird.f32 %v2945
        %vm2983 = vweird.f32 %v2976
        %vm2984 = vmor %vm2982, %vm2983
        %v2985 = vsel %vm2984, %v2976, %v2981
        %v2986 = vmul.f32 %v2918, %v2955
        %v2987 = vmul.f32 %v2919, %v2965
        %v2988 = vmul.f32 %v2920, %v2975
        %v2989 = vmul.f32 %v2921, %v2985
        %v2991 = vperm.slane %v2900, 0
        %v2993 = vmul.f32 %v2986, %v2991
        %v2994 = vmul.f32 %v2987, %v2991
        %v2995 = vmul.f32 %v2988, %v2991
        %v2996 = vmul.f32 %v2989, %v2991
        %v2998 = vperm.slane %v2901, 0
        %v3000 = vadd.f32 %v2993, %v2998
        %v3001 = vadd.f32 %v2994, %v2998
        %v3002 = vadd.f32 %v2995, %v2998
        %v3003 = vadd.f32 %v2996, %v2998
        %v3004 = vld [vmem:[%s41] sm:$0xff]
        %v3005 = vld [vmem:[%s41 + $0x8] sm:$0xff]
        %v3006 = vld [vmem:[%s41 + $0x10] sm:$0xff]
        %v3007 = vld [vmem:[%s41 + $0x18] sm:$0xff]
        %v3008 = vld [vmem:[%s43] sm:$0x1]
        %v3010 = vperm.slane %v3008, 0
        %v3013 = vsel %vm1094, %v3000, 0
        %v3016 = vsel %vm1094, %v3001, 0
        %v3019 = vsel %vm1094, %v3002, 0
        %v3022 = vsel %vm1094, %v3003, 0
        %3024 = vmatpush.msra.mxu0 0.0
        %3025 = vmatpush.msra.mxu0 0.0
        %3026 = vmatpush.msra.mxu0 0.0
        %3027 = vmatpush.msra.mxu0 0.0
        %3028 = vmatpush.msra.mxu0 0.0
        %3029 = vmatpush.msra.mxu0 0.0
        %3030 = vmatpush.msra.mxu0 0.0
        %3031 = vmatpush.msra.mxu0 0.0
        %3032 = vmatpush.msra.mxu0 0.0
        %3033 = vmatpush.msra.mxu0 0.0
        %3034 = vmatpush.msra.mxu0 0.0
        %3035 = vmatpush.msra.mxu0 0.0
        %3036 = vmatpush.msra.mxu0 %v3007
        %3037 = vmatpush.msra.mxu0 %v3006
        %3038 = vmatpush.msra.mxu0 %v3005
        %3039 = vmatpush.msra.mxu0 %v3004
        %3040 = vmatmul.f32.gmra.mxu0 %v3013
        %v3041 = vpop.f32.mrf.mxu0
        %v3042 = vadd.f32 %v3010, %v3041
        %3043 = vmatmul.f32.gmra.mxu0 %v3016
        %v3044 = vpop.f32.mrf.mxu0
        %v3045 = vadd.f32 %v3010, %v3044
        %3046 = vmatmul.f32.gmra.mxu0 %v3019
        %v3047 = vpop.f32.mrf.mxu0
        %v3048 = vadd.f32 %v3010, %v3047
        %3049 = vmatmul.f32.gmra.mxu0 %v3022
        %v3050 = vpop.f32.mrf.mxu0
        %v3051 = vadd.f32 %v3010, %v3050
        %3052 = vdwg.mxu0
        %v3053 = vmul.f32 %v3042, %v3042
        %v3054 = vmul.f32 %v3045, %v3045
        %v3055 = vmul.f32 %v3048, %v3048
        %v3056 = vmul.f32 %v3051, %v3051
        %v3057 = vmul.f32 %v3042, %v3053
        %v3058 = vmul.f32 %v3045, %v3054
        %v3059 = vmul.f32 %v3048, %v3055
        %v3060 = vmul.f32 %v3051, %v3056
        %v3061 = vmul.f32 %v3057, 0.044715
        %v3062 = vmul.f32 %v3058, 0.044715
        %v3063 = vmul.f32 %v3059, 0.044715
        %v3064 = vmul.f32 %v3060, 0.044715
        %v3065 = vadd.f32 %v3042, %v3061
        %v3066 = vadd.f32 %v3045, %v3062
        %v3067 = vadd.f32 %v3048, %v3063
        %v3068 = vadd.f32 %v3051, %v3064
        %v3069 = vmul.f32 %v3065, 0.7978846
        %v3070 = vmul.f32 %v3066, 0.7978846
        %v3071 = vmul.f32 %v3067, 0.7978846
        %v3072 = vmul.f32 %v3068, 0.7978846
        %v3073 = vtanh.pop %v3069
        %v3074 = vtanh.pop %v3070
        %v3075 = vtanh.pop %v3071
        %v3076 = vtanh.pop %v3072
        %v3077 = vadd.f32 %v3073, 1.0
        %v3078 = vadd.f32 %v3074, 1.0
        %v3079 = vadd.f32 %v3075, 1.0
        %v3080 = vadd.f32 %v3076, 1.0
        %v3081 = vmul.f32 %v3077, 0.5
        %v3082 = vmul.f32 %v3078, 0.5
        %v3083 = vmul.f32 %v3079, 0.5
        %v3084 = vmul.f32 %v3080, 0.5
        %v3085 = vmul.f32 %v3042, %v3081
        %v3086 = vmul.f32 %v3045, %v3082
        %v3087 = vmul.f32 %v3048, %v3083
        %v3088 = vmul.f32 %v3051, %v3084
        %v3089 = vld [vmem:[%s45] sm:$0xff]
        %v3090 = vld [vmem:[%s45 + $0x8] sm:$0xff]
        %v3091 = vld [vmem:[%s45 + $0x10] sm:$0xff]
        %v3092 = vld [vmem:[%s45 + $0x18] sm:$0xff]
        %v3093 = vld [vmem:[%s45 + $0x20] sm:$0xff]
        %v3094 = vld [vmem:[%s45 + $0x28] sm:$0xff]
        %v3095 = vld [vmem:[%s45 + $0x30] sm:$0xff]
        %v3096 = vld [vmem:[%s45 + $0x38] sm:$0xff]
        %v3097 = vld [vmem:[%s45 + $0x40] sm:$0xff]
        %v3098 = vld [vmem:[%s45 + $0x48] sm:$0xff]
        %v3099 = vld [vmem:[%s45 + $0x50] sm:$0xff]
        %v3100 = vld [vmem:[%s45 + $0x58] sm:$0xff]
        %v3101 = vld [vmem:[%s45 + $0x60] sm:$0xff]
        %v3102 = vld [vmem:[%s45 + $0x68] sm:$0xff]
        %v3103 = vld [vmem:[%s45 + $0x70] sm:$0xff]
        %v3104 = vld [vmem:[%s45 + $0x78] sm:$0xff]
        %v3105 = vld [vmem:[%s47] sm:$0x1]
        %v3107 = vperm.slane %v3105, 0
        %3109 = vmatpush.msra.mxu0 %v3104
        %3110 = vmatpush.msra.mxu0 %v3103
        %3111 = vmatpush.msra.mxu0 %v3102
        %3112 = vmatpush.msra.mxu0 %v3101
        %3113 = vmatpush.msra.mxu0 %v3100
        %3114 = vmatpush.msra.mxu0 %v3099
        %3115 = vmatpush.msra.mxu0 %v3098
        %3116 = vmatpush.msra.mxu0 %v3097
        %3117 = vmatpush.msra.mxu0 %v3096
        %3118 = vmatpush.msra.mxu0 %v3095
        %3119 = vmatpush.msra.mxu0 %v3094
        %3120 = vmatpush.msra.mxu0 %v3093
        %3121 = vmatpush.msra.mxu0 %v3092
        %3122 = vmatpush.msra.mxu0 %v3091
        %3123 = vmatpush.msra.mxu0 %v3090
        %3124 = vmatpush.msra.mxu0 %v3089
        %3125 = vmatmul.f32.gmra.mxu0 %v3085
        %v3126 = vpop.f32.mrf.mxu0
        %v3127 = vadd.f32 %v3107, %v3126
        %3128 = vmatmul.f32.gmra.mxu0 %v3086
        %v3129 = vpop.f32.mrf.mxu0
        %v3130 = vadd.f32 %v3107, %v3129
        %3131 = vmatmul.f32.gmra.mxu0 %v3087
        %v3132 = vpop.f32.mrf.mxu0
        %v3133 = vadd.f32 %v3107, %v3132
        %3134 = vmatmul.f32.gmra.mxu0 %v3088
        %v3135 = vpop.f32.mrf.mxu0
        %v3136 = vadd.f32 %v3107, %v3135
        %3137 = vdwg.mxu0
        %v3138 = vadd.f32 %v3000, %v3127
        %v3139 = vadd.f32 %v3001, %v3130
        %v3140 = vadd.f32 %v3002, %v3133
        %v3141 = vadd.f32 %v3003, %v3136
        %v3142 = vld [vmem:[%s49] sm:$0x1]
        %v3143 = vld [vmem:[%s51] sm:$0x1]
        %v3144 = vsel %vm1094, %v3138, 0.0
        %3145 = vadd.xlane.f32.xlu0 %v3144
        %v3146 = vpop.xlane.xlu0 %3145
        %v3147 = vsel %vm1094, %v3139, 0.0
        %3148 = vadd.xlane.f32.xlu0 %v3147
        %v3149 = vpop.xlane.xlu0 %3148
        %v3150 = vsel %vm1094, %v3140, 0.0
        %3151 = vadd.xlane.f32.xlu0 %v3150
        %v3152 = vpop.xlane.xlu0 %3151
        %v3153 = vsel %vm1094, %v3141, 0.0
        %3154 = vadd.xlane.f32.xlu0 %v3153
        %v3155 = vpop.xlane.xlu0 %3154
        %v3156 = vmul.f32 %v3146, %v1479
        %v3157 = vmul.f32 %v3149, %v1479
        %v3158 = vmul.f32 %v3152, %v1479
        %v3159 = vmul.f32 %v3155, %v1479
        %v3160 = vsub.f32 %v3138, %v3156
        %v3161 = vsub.f32 %v3139, %v3157
        %v3162 = vsub.f32 %v3140, %v3158
        %v3163 = vsub.f32 %v3141, %v3159
        %v3164 = vmul.f32 %v3160, %v3160
        %v3165 = vmul.f32 %v3161, %v3161
        %v3166 = vmul.f32 %v3162, %v3162
        %v3167 = vmul.f32 %v3163, %v3163
        %v3168 = vsel %vm1094, %v3164, 0.0
        %3169 = vadd.xlane.f32.xlu0 %v3168
        %v3170 = vpop.xlane.xlu0 %3169
        %v3171 = vsel %vm1094, %v3165, 0.0
        %3172 = vadd.xlane.f32.xlu0 %v3171
        %v3173 = vpop.xlane.xlu0 %3172
        %v3174 = vsel %vm1094, %v3166, 0.0
        %3175 = vadd.xlane.f32.xlu0 %v3174
        %v3176 = vpop.xlane.xlu0 %3175
        %v3177 = vsel %vm1094, %v3167, 0.0
        %3178 = vadd.xlane.f32.xlu0 %v3177
        %v3179 = vpop.xlane.xlu0 %3178
        %v3180 = vmul.f32 %v3170, %v1479
        %v3181 = vmul.f32 %v3173, %v1479
        %v3182 = vmul.f32 %v3176, %v1479
        %v3183 = vmul.f32 %v3179, %v1479
        %v3184 = vadd.f32 %v3180, 1e-05
        %v3185 = vadd.f32 %v3181, 1e-05
        %v3186 = vadd.f32 %v3182, 1e-05
        %v3187 = vadd.f32 %v3183, 1e-05
        %v3188 = vrsqrt.pop %v3184
        %v3189 = vmul.f32 %v3188, %v3184
        %v3190 = vmul.f32 %v3189, %v3188
        %v3191 = vmul.f32 0.5, %v3190
        %v3192 = vsub.f32 1.5, %v3191
        %v3193 = vmul.f32 %v3188, %v3192
        %vm3194 = vweird.f32 %v3184
        %vm3195 = vweird.f32 %v3188
        %vm3196 = vmor %vm3194, %vm3195
        %v3197 = vsel %vm3196, %v3188, %v3193
        %v3198 = vrsqrt.pop %v3185
        %v3199 = vmul.f32 %v3198, %v3185
        %v3200 = vmul.f32 %v3199, %v3198
        %v3201 = vmul.f32 0.5, %v3200
        %v3202 = vsub.f32 1.5, %v3201
        %v3203 = vmul.f32 %v3198, %v3202
        %vm3204 = vweird.f32 %v3185
        %vm3205 = vweird.f32 %v3198
        %vm3206 = vmor %vm3204, %vm3205
        %v3207 = vsel %vm3206, %v3198, %v3203
        %v3208 = vrsqrt.pop %v3186
        %v3209 = vmul.f32 %v3208, %v3186
        %v3210 = vmul.f32 %v3209, %v3208
        %v3211 = vmul.f32 0.5, %v3210
        %v3212 = vsub.f32 1.5, %v3211
        %v3213 = vmul.f32 %v3208, %v3212
        %vm3214 = vweird.f32 %v3186
        %vm3215 = vweird.f32 %v3208
        %vm3216 = vmor %vm3214, %vm3215
        %v3217 = vsel %vm3216, %v3208, %v3213
        %v3218 = vrsqrt.pop %v3187
        %v3219 = vmul.f32 %v3218, %v3187
        %v3220 = vmul.f32 %v3219, %v3218
        %v3221 = vmul.f32 0.5, %v3220
        %v3222 = vsub.f32 1.5, %v3221
        %v3223 = vmul.f32 %v3218, %v3222
        %vm3224 = vweird.f32 %v3187
        %vm3225 = vweird.f32 %v3218
        %vm3226 = vmor %vm3224, %vm3225
        %v3227 = vsel %vm3226, %v3218, %v3223
        %v3228 = vmul.f32 %v3160, %v3197
        %v3229 = vmul.f32 %v3161, %v3207
        %v3230 = vmul.f32 %v3162, %v3217
        %v3231 = vmul.f32 %v3163, %v3227
        %v3233 = vperm.slane %v3142, 0
        %v3235 = vmul.f32 %v3228, %v3233
        %v3236 = vmul.f32 %v3229, %v3233
        %v3237 = vmul.f32 %v3230, %v3233
        %v3238 = vmul.f32 %v3231, %v3233
        %v3240 = vperm.slane %v3143, 0
        %v3242 = vadd.f32 %v3235, %v3240
        %v3243 = vadd.f32 %v3236, %v3240
        %v3244 = vadd.f32 %v3237, %v3240
        %v3245 = vadd.f32 %v3238, %v3240
        %v3246 = vld [vmem:[%s53] sm:$0xff]
        %v3247 = vld [vmem:[%s53 + $0x8] sm:$0xff]
        %v3248 = vld [vmem:[%s53 + $0x10] sm:$0xff]
        %v3249 = vld [vmem:[%s53 + $0x18] sm:$0xff]
        %v3250 = vld [vmem:[%s55] sm:$0x1]
        %v3252 = vperm.slane %v3250, 0
        %v3255 = vsel %vm1094, %v3242, 0
        %v3258 = vsel %vm1094, %v3243, 0
        %v3261 = vsel %vm1094, %v3244, 0
        %v3264 = vsel %vm1094, %v3245, 0
        %3266 = vmatpush.msra.mxu0 0.0
        %3267 = vmatpush.msra.mxu0 0.0
        %3268 = vmatpush.msra.mxu0 0.0
        %3269 = vmatpush.msra.mxu0 0.0
        %3270 = vmatpush.msra.mxu0 0.0
        %3271 = vmatpush.msra.mxu0 0.0
        %3272 = vmatpush.msra.mxu0 0.0
        %3273 = vmatpush.msra.mxu0 0.0
        %3274 = vmatpush.msra.mxu0 0.0
        %3275 = vmatpush.msra.mxu0 0.0
        %3276 = vmatpush.msra.mxu0 0.0
        %3277 = vmatpush.msra.mxu0 0.0
        %3278 = vmatpush.msra.mxu0 %v3249
        %3279 = vmatpush.msra.mxu0 %v3248
        %3280 = vmatpush.msra.mxu0 %v3247
        %3281 = vmatpush.msra.mxu0 %v3246
        %3282 = vmatmul.f32.gmra.mxu0 %v3255
        %v3283 = vpop.f32.mrf.mxu0
        %v3284 = vadd.f32 %v3252, %v3283
        %3285 = vmatmul.f32.gmra.mxu0 %v3258
        %v3286 = vpop.f32.mrf.mxu0
        %v3287 = vadd.f32 %v3252, %v3286
        %3288 = vmatmul.f32.gmra.mxu0 %v3261
        %v3289 = vpop.f32.mrf.mxu0
        %v3290 = vadd.f32 %v3252, %v3289
        %3291 = vmatmul.f32.gmra.mxu0 %v3264
        %v3292 = vpop.f32.mrf.mxu0
        %v3293 = vadd.f32 %v3252, %v3292
        %3294 = vdwg.mxu0
        %3295 = vst.msk [vmem:[%s909] sm:$0xff] %vm1094, %v3284
        %3296 = vst.msk [vmem:[%s909 + $0x8] sm:$0xff] %vm1094, %v3287
        %3297 = vst.msk [vmem:[%s909 + $0x10] sm:$0xff] %vm1094, %v3290
        %3298 = vst.msk [vmem:[%s909 + $0x18] sm:$0xff] %vm1094, %v3293
        %v3299 = vsel %vm1094, %v3284, -inf
        %3300 = vmax.xlane.f32.xlu0 %v3299
        %v3301 = vpop.xlane.xlu0 %3300
        %v3302 = vsel %vm1094, %v3287, -inf
        %3303 = vmax.xlane.f32.xlu0 %v3302
        %v3304 = vpop.xlane.xlu0 %3303
        %v3305 = vsel %vm1094, %v3290, -inf
        %3306 = vmax.xlane.f32.xlu0 %v3305
        %v3307 = vpop.xlane.xlu0 %3306
        %v3308 = vsel %vm1094, %v3293, -inf
        %3309 = vmax.xlane.f32.xlu0 %v3308
        %v3310 = vpop.xlane.xlu0 %3309
        %v3311 = vlaneseq
        %v3312 = vand.u32 %v3311, 127
        %vm3313 = vcmp.eq.f32.partialorder %v3284, %v3301
        %vm3314 = vcmp.eq.f32.partialorder %v3287, %v3304
        %vm3315 = vcmp.eq.f32.partialorder %v3290, %v3307
        %vm3316 = vcmp.eq.f32.partialorder %v3293, %v3310
        %v3317 = vsel %vm3313, %v3312, 2147483647
        %v3318 = vsel %vm3314, %v3312, 2147483647
        %v3319 = vsel %vm3315, %v3312, 2147483647
        %v3320 = vsel %vm3316, %v3312, 2147483647
        %v3321 = vsel %vm1094, %v3317, 2147483647
        %v3322 = vand.u32 %v3321, 65535
        %v3323 = vshra.s32 %v3321, 16
        %v3324 = vcvt.s32.f32 %v3322
        %v3325 = vcvt.s32.f32 %v3323
        %3326 = vmin.xlane.f32.xlu0 %v3325
        %v3327 = vpop.xlane.xlu0 %3326
        %vm3328 = vcmp.eq.f32.partialorder %v3325, %v3327
        %v3329 = vsel %vm3328, %v3324, inf
        %3330 = vmin.xlane.f32.xlu0 %v3329
        %v3331 = vpop.xlane.xlu0 %3330
        %v3332 = vcvt.f32.s32 %v3331
        %v3333 = vcvt.f32.s32 %v3327
        %v3334 = vshll.u32 %v3333, 16
        %v3335 = vadd.s32 %v3334, %v3332
        %v3336 = vsel %vm1094, %v3318, 2147483647
        %v3337 = vand.u32 %v3336, 65535
        %v3338 = vshra.s32 %v3336, 16
        %v3339 = vcvt.s32.f32 %v3337
        %v3340 = vcvt.s32.f32 %v3338
        %3341 = vmin.xlane.f32.xlu0 %v3340
        %v3342 = vpop.xlane.xlu0 %3341
        %vm3343 = vcmp.eq.f32.partialorder %v3340, %v3342
        %v3344 = vsel %vm3343, %v3339, inf
        %3345 = vmin.xlane.f32.xlu0 %v3344
        %v3346 = vpop.xlane.xlu0 %3345
        %v3347 = vcvt.f32.s32 %v3346
        %v3348 = vcvt.f32.s32 %v3342
        %v3349 = vshll.u32 %v3348, 16
        %v3350 = vadd.s32 %v3349, %v3347
        %v3351 = vsel %vm1094, %v3319, 2147483647
        %v3352 = vand.u32 %v3351, 65535
        %v3353 = vshra.s32 %v3351, 16
        %v3354 = vcvt.s32.f32 %v3352
        %v3355 = vcvt.s32.f32 %v3353
        %3356 = vmin.xlane.f32.xlu0 %v3355
        %v3357 = vpop.xlane.xlu0 %3356
        %vm3358 = vcmp.eq.f32.partialorder %v3355, %v3357
        %v3359 = vsel %vm3358, %v3354, inf
        %3360 = vmin.xlane.f32.xlu0 %v3359
        %v3361 = vpop.xlane.xlu0 %3360
        %v3362 = vcvt.f32.s32 %v3361
        %v3363 = vcvt.f32.s32 %v3357
        %v3364 = vshll.u32 %v3363, 16
        %v3365 = vadd.s32 %v3364, %v3362
        %v3366 = vsel %vm1094, %v3320, 2147483647
        %v3367 = vand.u32 %v3366, 65535
        %v3368 = vshra.s32 %v3366, 16
        %v3369 = vcvt.s32.f32 %v3367
        %v3370 = vcvt.s32.f32 %v3368
        %3371 = vmin.xlane.f32.xlu0 %v3370
        %v3372 = vpop.xlane.xlu0 %3371
        %vm3373 = vcmp.eq.f32.partialorder %v3370, %v3372
        %v3374 = vsel %vm3373, %v3369, inf
        %3375 = vmin.xlane.f32.xlu0 %v3374
        %v3376 = vpop.xlane.xlu0 %3375
        %v3377 = vcvt.f32.s32 %v3376
        %v3378 = vcvt.f32.s32 %v3372
        %v3379 = vshll.u32 %v3378, 16
        %v3380 = vadd.s32 %v3379, %v3377
        %vm3381 = vcmask 7168
        %3382 = vst.msk [vmem:[%s930] sm:$0xff] %vm3381, %v3335
        %3383 = vst.msk [vmem:[%s930 + $0x8] sm:$0xff] %vm3381, %v3350
        %3384 = vst.msk [vmem:[%s930 + $0x10] sm:$0xff] %vm3381, %v3365
        %3385 = vst.msk [vmem:[%s930 + $0x18] sm:$0xff] %vm3381, %v3380
        %s3386 = sand.u32 %s680, 1
        %s3387 = scalar_lea.sflag [#allocation4], %s3386
        %s3388 = sand.u32 %s680, 1
        %s3389 = smul.addr %s3388, 32
        %s3390 = scalar_lea.vmem [#allocation3], %s3389
        %p3391 = scmp.lt.s32.totalorder %s74, 1
        %s3392 = scalar_select %p3391, %s74, 1
        %s3393 = smul.addr %s3392, 4
        %s3394 = smul.addr %s3393, 8
        %s3395 = scalar_lea.vmem %s59, %s3394
        // Predicated region
        $region133: #{wav2vec2_ctc_forward.1} parent=131 // pred_check
          %p3396 = pneg %p690
        $region134: #{wav2vec2_ctc_forward.1} parent=131 // pred_check_branch
          %3398 = sbr.rel (%p3396) target = $region136
        $region135: #{wav2vec2_ctc_forward.1} parent=131 // pred_region
          %3400 = vsyncadd %s3387, 0
          %s3401 = smul.addr %s74, 4
          %s3402 = smul.addr %s3401, 8
          %s3403 = scalar_lea.hbm %s57, %s3402
          %s3404 = sshll.u32 %s3390, 4
          %s3405 = int_to_ptr.vmem [resolvable:$true] %s3404
          %s3406 = sshll.u32 %s3403, 4
          %s3407 = int_to_ptr.hbm [resolvable:$true] %s3406
          %3412 = dma.vmem_to_hbm [thread:$0]  %s3405, 512, %s3407, %s3387, 128, 128, 8
        $region136: #{wav2vec2_ctc_forward.1} parent=131 // pred_fallthru
          _
        // Predicated region
        $region137: #{wav2vec2_ctc_forward.1} parent=131 // pred_check
          %p3413 = pneg %p716
        $region138: #{wav2vec2_ctc_forward.1} parent=131 // pred_check_branch
          %3415 = sbr.rel (%p3413) target = $region140
        $region139: #{wav2vec2_ctc_forward.1} parent=131 // pred_region
          _
        $region140: #{wav2vec2_ctc_forward.1} parent=131 // pred_fallthru
          _
      $region132: #{wav2vec2_ctc_forward.1} parent=5 // pred_fallthru
        _
      %p3416 = scmp.le.s32.totalorder 2, %s69
      // Predicated region
      $region141: #{wav2vec2_ctc_forward.1} parent=5 // pred_check
        %p3417 = pneg %p3416
      $region142: #{wav2vec2_ctc_forward.1} parent=5 // pred_check_branch
        %3419 = sbr.rel (%p3417) target = $region144
      $region143: #{wav2vec2_ctc_forward.1} parent=5 // pred_region
        %s3420 = ssub.s32 %s69, 2
        // Predicated region
        $region145: #{wav2vec2_ctc_forward.1} parent=143 // pred_check
          %p3421 = pneg %p696
        $region146: #{wav2vec2_ctc_forward.1} parent=143 // pred_check_branch
          %3423 = sbr.rel (%p3421) target = $region148
        $region147: #{wav2vec2_ctc_forward.1} parent=143 // pred_region
          %s3424 = sand.u32 %s681, 1
          %s3425 = scalar_lea.sflag [#allocation4], %s3424
          %s3426 = sand.u32 %s681, 1
          %s3427 = smul.addr %s3426, 32
          %s3428 = scalar_lea.vmem [#allocation3], %s3427
          %3430 = dma.done %s3425, 512
        $region148: #{wav2vec2_ctc_forward.1} parent=143 // pred_fallthru
          _
        // Predicated region
        $region149: #{wav2vec2_ctc_forward.1} parent=143 // pred_check
          %p3431 = pneg %p722
        $region150: #{wav2vec2_ctc_forward.1} parent=143 // pred_check_branch
          %3433 = sbr.rel (%p3431) target = $region152
        $region151: #{wav2vec2_ctc_forward.1} parent=143 // pred_region
          %p3434 = scmp.lt.s32.totalorder %s75, 1
          %s3435 = scalar_select %p3434, %s75, 1
          %s3436 = smul.addr %s3435, 4
          %s3437 = smul.addr %s3436, 8
          %s3438 = scalar_lea.vmem %s59, %s3437
        $region152: #{wav2vec2_ctc_forward.1} parent=143 // pred_fallthru
          _
      $region144: #{wav2vec2_ctc_forward.1} parent=5 // pred_fallthru
        _
    $region6: #{wav2vec2_ctc_forward.1} parent=1 // loop_footer
      %s73 = sadd.s32 1, %s69
    $region7: #{wav2vec2_ctc_forward.1} parent=1 // loop_footer_branch
      %68 = sbr.rel target = $region3
    $region8: #{wav2vec2_ctc_forward.1} parent=1 // loop_exit
      _
    %3439 = vsyncpa [#allocation4], 1
    %s3440 = scalar_lea.sflag [#allocation4], 1
    %3441 = vsyncpa %s3440, 1

</llo_original>
